<compile_context>
chip_gen: v7x
topology: tpu7x:2x2x1
jax: 0.10.0
libtpu: 0.0.40
codegen_flags: <defaults>
</compile_context>

<pallas_src>
import numpy as np
import jax
import jax.numpy as jnp
from jax.experimental import pallas as pl


# ------------------------------ helpers -------------------------------------

def _round_up(v, m):
    return ((v + m - 1) // m) * m


def _full_spec(shape):
    # one full-array block (block dims equal the array dims, so any size is legal)
    return pl.BlockSpec(shape, lambda: (0,) * len(shape))


# --------------------------- the fused kernel --------------------------------
# Activations live in a channel-major, per-sample 128-lane-aligned, flat
# zero-padded-spatial layout:
#     slab[c, n*SLOT + h*Wrow + w]
# so a 3x3 / pad-1 conv is one matmul against 9 lane-shifted slices stacked
# along sublanes, and the 2x2 maxpool window corners are lane offsets
# {0, 1, Wrow, Wrow+1}.

def _make_fused_kernel(N, C1, C2, Wp, IM1P, L1, LPS, P2, IM2P, L2, X2W):
    taps1 = tuple(ki * Wp + kj for ki in range(3) for kj in range(3))
    taps2 = tuple(ki * P2 + kj for ki in range(3) for kj in range(3))
    pool_taps = (1, Wp, Wp + 1)

    def kernel(x_ref, w1_ref, b1_ref, w2_ref, b2_ref, sel_ref,
               w1f_ref, b1f_ref, w2f_ref, b2f_ref,
               conv1_ref, relu2_ref, fc1_ref, fc2_ref):
        # ---- conv1 + bias: ONE K=9*CP matmul on sublane-stacked taps ---------
        x = x_ref[...]                                              # (CP, XW) f32
        xs1 = jnp.concatenate([x[:, d:d + L1] for d in taps1], axis=0)
        acc1 = jnp.dot(w1_ref[...], xs1.astype(jnp.bfloat16),
                       preferred_element_type=jnp.float32) + b1_ref[...]
        conv1_ref[...] = acc1              # extracted 'conv1' (pre-relu), 768 lanes

        # ---- relu1 -> 2x2/2 maxpool -> per-sample 0/1 scatter matmul ---------
        r1 = jnp.maximum(acc1, 0.0)
        sel = sel_ref[...]                                          # (LPS, IM2P) bf16
        x2_blocks = []
        for n in range(N):                 # block-diagonal over batch, factored out
            base = n * IM1P
            m4 = r1[:, base:base + LPS]
            for d in pool_taps:
                m4 = jnp.maximum(m4, r1[:, base + d:base + d + LPS])
            x2_blocks.append(jnp.dot(m4.astype(jnp.bfloat16), sel,
                                     preferred_element_type=jnp.float32))
        x2_blocks.append(jnp.zeros((C1, X2W - N * IM2P), jnp.float32))
        x2 = jnp.concatenate(x2_blocks, axis=1)                     # (C1, X2W) f32

        # ---- conv2 + bias + relu2: ONE K=9*C1 matmul on stacked taps ---------
        xs2 = jnp.concatenate([x2[:, d:d + L2] for d in taps2], axis=0)
        acc2 = jnp.dot(w2_ref[...], xs2.astype(jnp.bfloat16),
                       preferred_element_type=jnp.float32) + b2_ref[...]
        r2 = jnp.maximum(acc2, 0.0)
        relu2_ref[...] = r2                # extracted 'relu2', 256 lanes

        # ---- fc1 + fc2 on the VMEM-resident relu2 slab -----------------------
        # The NCHW flatten + conv2-grid column positions are folded into
        # w1f's row layout (row = c2*IM2P + ho*P2 + wo), so per sample the fc
        # input is just the channel rows of its 128-lane slot laid end to end.
        for n in range(N):
            feat = jnp.concatenate(
                [r2[c:c + 1, n * IM2P:(n + 1) * IM2P] for c in range(C2)], axis=1)
            h1 = jnp.dot(feat.astype(jnp.bfloat16), w1f_ref[...],
                         preferred_element_type=jnp.float32) + b1f_ref[...]
            fc1_ref[n:n + 1, :] = h1
            fc2_ref[n:n + 1, :] = jnp.dot(h1.astype(jnp.bfloat16), w2f_ref[...],
                                          preferred_element_type=jnp.float32) + b2f_ref[...]

    return kernel


# ----------------------- build-time packing + forward ------------------------

def make_feature_extractor(params, input_shape, extracted_layers):
    """Build a jitted forward mirroring FeatureExtractor(submodule, layers).

    All seven child modules run inside ONE pallas_call; weight packing and the
    pool selection matrix are prepared here, once, outside the per-call path.
    """
    N, Cin, H, W = input_shape
    C1 = params["conv1_w"].shape[0]
    C2 = params["conv2_w"].shape[0]
    F1, K1 = params["fc1_w"].shape
    F2 = params["fc2_w"].shape[0]
    assert H % 2 == 0 and W % 2 == 0

    Hp, Wp = H + 2, W + 2                         # zero-padded conv1 grid
    Ho, Wo = H // 2, W // 2                       # pooled spatial size
    P2 = Ho + 2                                   # zero-padded conv2 grid side
    assert K1 == C2 * Ho * Wo
    CP = _round_up(Cin, 8)                        # conv1 contraction channels
    IM1, IM2 = Hp * Wp, P2 * P2
    IM1P = _round_up(IM1, 128)                    # per-sample conv1-grid lane slot
    IM2P = _round_up(IM2, 128)                    # per-sample conv2-grid lane slot
    L1, L2 = N * IM1P, N * IM2P                   # conv1 / relu2 slab widths (x128)
    XW = _round_up(L1 + 2 * Wp + 2, 128)          # conv1 input width (taps in-bounds)
    X2W = _round_up(L2 + 2 * P2 + 2, 128)         # conv2 input width (taps in-bounds)
    LPS = _round_up(2 * (Ho - 1) * Wp + 2 * (Wo - 1) + 1, 8)   # pool source span
    # pool tap slices stay inside the slab / inside each sample's slot
    assert (N - 1) * IM1P + Wp + 1 + LPS <= L1
    assert 2 * (Ho - 1) * Wp + 2 * (Wo - 1) + Wp + 1 < IM1P

    # ---- conv weights as (Cout, tap*K + cin), bf16 for the MXU ---------------
    w1 = jnp.transpose(params["conv1_w"], (0, 2, 3, 1))           # (C1,3,3,Cin)
    w1 = jnp.pad(w1, ((0, 0), (0, 0), (0, 0), (0, CP - Cin)))
    w1 = w1.reshape(C1, 9 * CP).astype(jnp.bfloat16)
    b1 = params["conv1_b"].reshape(C1, 1).astype(jnp.float32)
    w2 = jnp.transpose(params["conv2_w"], (0, 2, 3, 1)).reshape(C2, 9 * C1)
    w2 = w2.astype(jnp.bfloat16)
    b2 = params["conv2_b"].reshape(C2, 1).astype(jnp.float32)

    # ---- per-sample 0/1 "decimate + scatter" matrix (68 KB bf16) -------------
    # pooled window with top-left corner at local lane 2*ho*Wp + 2*wo lands at
    # interior position (ho+1, wo+1) of the zero-padded conv2 grid.
    sel_np = np.zeros((LPS, IM2P), np.float32)
    for ho in range(Ho):
        for wo in range(Wo):
            sel_np[2 * ho * Wp + 2 * wo, (ho + 1) * P2 + (wo + 1)] = 1.0
    sel0 = jnp.asarray(sel_np).astype(jnp.bfloat16)

    # ---- fc1 weight with the NCHW flatten folded into its rows ---------------
    # row c2*IM2P + ho*P2 + wo  <-  fc1_w[:, c2*Ho*Wo + ho*Wo + wo]
    w1r = jnp.transpose(params["fc1_w"].reshape(F1, C2, Ho, Wo), (1, 2, 3, 0))
    w1r = jnp.pad(w1r, ((0, 0), (0, 0), (0, P2 - Wo), (0, 0)))    # (C2,Ho,P2,F1)
    w1r = w1r.reshape(C2, Ho * P2, F1)
    w1r = jnp.pad(w1r, ((0, 0), (0, IM2P - Ho * P2), (0, 0)))     # (C2,IM2P,F1)
    w1f = w1r.reshape(C2 * IM2P, F1).astype(jnp.bfloat16)         # (2048, 32)
    b1f = params["fc1_b"].reshape(1, F1).astype(jnp.float32)
    w2f = params["fc2_w"].T.astype(jnp.bfloat16)                  # (F1, F2)
    b2f = params["fc2_b"].reshape(1, F2).astype(jnp.float32)

    kernel = _make_fused_kernel(N, C1, C2, Wp, IM1P, L1, LPS, P2, IM2P, L2, X2W)
    fused = pl.pallas_call(
        kernel,
        out_shape=(jax.ShapeDtypeStruct((C1, L1), jnp.float32),
                   jax.ShapeDtypeStruct((C2, L2), jnp.float32),
                   jax.ShapeDtypeStruct((N, F1), jnp.float32),
                   jax.ShapeDtypeStruct((N, F2), jnp.float32)),
        in_specs=[_full_spec((CP, XW)), _full_spec((C1, 9 * CP)),
                  _full_spec((C1, 1)), _full_spec((C2, 9 * C1)),
                  _full_spec((C2, 1)), _full_spec((LPS, IM2P)),
                  _full_spec((C2 * IM2P, F1)), _full_spec((1, F1)),
                  _full_spec((F1, F2)), _full_spec((1, F2))],
        out_specs=(_full_spec((C1, L1)), _full_spec((C2, L2)),
                   _full_spec((N, F1)), _full_spec((N, F2))),
    )

    module_order = ("conv1", "relu1", "pool1", "conv2", "relu2", "fc1", "fc2")
    wanted = tuple(extracted_layers)
    for name in wanted:
        if name not in module_order:
            raise ValueError(f"unknown layer '{name}'")
        if name not in ("conv1", "relu2", "fc1", "fc2"):
            # TODO(synk): extracting relu1/pool1/conv2 intermediates would need
            # extra kernel outputs; the demo does not request them.
            raise NotImplementedError(f"extraction of '{name}' is not wired up")

    def forward(x):
        # channel-major, per-sample 128-aligned, zero-padded-spatial input layout
        xp = jnp.pad(x, ((0, 0), (0, 0), (1, 1), (1, 1)))
        xf = jnp.transpose(xp, (1, 0, 2, 3)).reshape(Cin, N, IM1)
        xf = jnp.pad(xf, ((0, CP - Cin), (0, 0), (0, IM1P - IM1)))
        xf = jnp.pad(xf.reshape(CP, L1), ((0, 0), (0, XW - L1)))
        conv1_s, relu2_s, fc1_o, fc2_o = fused(xf, w1, b1, w2, b2, sel0,
                                               w1f, b1f, w2f, b2f)
        avail = {"fc1": fc1_o, "fc2": fc2_o}
        if "conv1" in wanted:
            c1 = conv1_s.reshape(C1, N, IM1P)[:, :, :IM1].reshape(C1, N, Hp, Wp)
            avail["conv1"] = jnp.transpose(c1[:, :, :H, :W], (1, 0, 2, 3))
        if "relu2" in wanted:
            r2 = relu2_s.reshape(C2, N, IM2P)[:, :, :IM2].reshape(C2, N, P2, P2)
            avail["relu2"] = jnp.transpose(r2[:, :, :Ho, :Wo], (1, 0, 2, 3))
        # mirror FeatureExtractor.forward: collect in module order
        return [avail[name] for name in module_order if name in wanted]

    return jax.jit(forward)


# ----------------------- synthetic submodule parameters ----------------------

def init_params(key):
    """Deterministic parameter init for the synthetic submodule."""
    ks = jax.random.split(key, 8)
    p = {}
    p["conv1_w"] = 0.1 * jax.random.normal(ks[0], (8, 4, 3, 3), jnp.float32)
    p["conv1_b"] = 0.1 * jax.random.normal(ks[1], (8,), jnp.float32)
    p["conv2_w"] = 0.1 * jax.random.normal(ks[2], (16, 8, 3, 3), jnp.float32)
    p["conv2_b"] = 0.1 * jax.random.normal(ks[3], (16,), jnp.float32)
    p["fc1_w"] = 0.05 * jax.random.normal(ks[4], (32, 16 * 8 * 8), jnp.float32)
    p["fc1_b"] = 0.05 * jax.random.normal(ks[5], (32,), jnp.float32)
    p["fc2_w"] = 0.05 * jax.random.normal(ks[6], (10, 32), jnp.float32)
    p["fc2_b"] = 0.05 * jax.random.normal(ks[7], (10,), jnp.float32)
    return p


if __name__ == "__main__":
    key = jax.random.PRNGKey(0)
    pkey, xkey = jax.random.split(key)
    params = init_params(pkey)

    # small NCHW input consistent with the submodule: (batch=2, C=4, 16, 16)
    x = jax.random.normal(xkey, (2, 4, 16, 16), jnp.float32)

    extracted = ("conv1", "relu2", "fc1")
    fwd = make_feature_extractor(params, x.shape, extracted)
    outs = fwd(x)
    for o in outs:
        jax.block_until_ready(o)

    # shape sanity of the extracted features
    assert outs[0].shape == (2, 8, 16, 16)
    assert outs[1].shape == (2, 16, 8, 8)
    assert outs[2].shape == (2, 32)

    # loose numerical sanity check against a pure-JAX f32 reference
    # (the kernel uses bf16 MXU operands with f32 accumulation).
    dn = ("NCHW", "OIHW", "NCHW")
    c1 = jax.lax.conv_general_dilated(
        x, params["conv1_w"], (1, 1), "SAME", dimension_numbers=dn,
        precision=jax.lax.Precision.HIGHEST) + params["conv1_b"][None, :, None, None]
    r1 = jnp.maximum(c1, 0.0)
    p1 = jax.lax.reduce_window(r1, -jnp.inf, jax.lax.max,
                               (1, 1, 2, 2), (1, 1, 2, 2), "VALID")
    c2 = jax.lax.conv_general_dilated(
        p1, params["conv2_w"], (1, 1), "SAME", dimension_numbers=dn,
        precision=jax.lax.Precision.HIGHEST) + params["conv2_b"][None, :, None, None]
    r2 = jnp.maximum(c2, 0.0)
    y1 = r2.reshape(r2.shape[0], -1) @ params["fc1_w"].T + params["fc1_b"]
    np.testing.assert_allclose(np.asarray(outs[0]), np.asarray(c1), rtol=5e-2, atol=5e-2)
    np.testing.assert_allclose(np.asarray(outs[1]), np.asarray(r2), rtol=5e-2, atol=5e-2)
    np.testing.assert_allclose(np.asarray(outs[2]), np.asarray(y1), rtol=5e-2, atol=5e-2)

    print("KERNEL_OK")
</pallas_src>

<mosaic_0001>
module attributes {stable_mosaic.version = 11 : i64} {
  func.func @kernel(%arg0: memref<8x896xf32, #tpu.memory_space<vmem>>, %arg1: memref<8x72xbf16, #tpu.memory_space<vmem>>, %arg2: memref<8x1xf32, #tpu.memory_space<vmem>>, %arg3: memref<16x72xbf16, #tpu.memory_space<vmem>>, %arg4: memref<16x1xf32, #tpu.memory_space<vmem>>, %arg5: memref<272x128xbf16, #tpu.memory_space<vmem>>, %arg6: memref<2048x32xbf16, #tpu.memory_space<vmem>>, %arg7: memref<1x32xf32, #tpu.memory_space<vmem>>, %arg8: memref<32x10xbf16, #tpu.memory_space<vmem>>, %arg9: memref<1x10xf32, #tpu.memory_space<vmem>>, %arg10: memref<8x768xf32, #tpu.memory_space<vmem>>, %arg11: memref<16x256xf32, #tpu.memory_space<vmem>>, %arg12: memref<2x32xf32, #tpu.memory_space<vmem>>, %arg13: memref<2x10xf32, #tpu.memory_space<vmem>>) attributes {dimension_semantics = [], scalar_prefetch = 0 : i64, scratch_operands = 0 : i64, tpu.core_type = #tpu.core_type<tc>} {
    %c0 = arith.constant 0 : index
    %c0_0 = arith.constant 0 : index
    %0 = vector.load %arg0[%c0, %c0_0] : memref<8x896xf32, #tpu.memory_space<vmem>>, vector<8x896xf32>
    %1 = vector.extract_strided_slice %0 {offsets = [0, 0], sizes = [8, 768], strides = [1, 1]} : vector<8x896xf32> to vector<8x768xf32>
    %2 = vector.extract_strided_slice %0 {offsets = [0, 1], sizes = [8, 768], strides = [1, 1]} : vector<8x896xf32> to vector<8x768xf32>
    %3 = vector.extract_strided_slice %0 {offsets = [0, 2], sizes = [8, 768], strides = [1, 1]} : vector<8x896xf32> to vector<8x768xf32>
    %4 = vector.extract_strided_slice %0 {offsets = [0, 18], sizes = [8, 768], strides = [1, 1]} : vector<8x896xf32> to vector<8x768xf32>
    %5 = vector.extract_strided_slice %0 {offsets = [0, 19], sizes = [8, 768], strides = [1, 1]} : vector<8x896xf32> to vector<8x768xf32>
    %6 = vector.extract_strided_slice %0 {offsets = [0, 20], sizes = [8, 768], strides = [1, 1]} : vector<8x896xf32> to vector<8x768xf32>
    %7 = vector.extract_strided_slice %0 {offsets = [0, 36], sizes = [8, 768], strides = [1, 1]} : vector<8x896xf32> to vector<8x768xf32>
    %8 = vector.extract_strided_slice %0 {offsets = [0, 37], sizes = [8, 768], strides = [1, 1]} : vector<8x896xf32> to vector<8x768xf32>
    %9 = vector.extract_strided_slice %0 {offsets = [0, 38], sizes = [8, 768], strides = [1, 1]} : vector<8x896xf32> to vector<8x768xf32>
    %10 = tpu.concatenate %1, %2, %3, %4, %5, %6, %7, %8, %9 in 0 : vector<8x768xf32>, vector<8x768xf32>, vector<8x768xf32>, vector<8x768xf32>, vector<8x768xf32>, vector<8x768xf32>, vector<8x768xf32>, vector<8x768xf32>, vector<8x768xf32> -> vector<72x768xf32>
    %c0_1 = arith.constant 0 : index
    %c0_2 = arith.constant 0 : index
    %11 = vector.load %arg1[%c0_1, %c0_2] : memref<8x72xbf16, #tpu.memory_space<vmem>>, vector<8x72xbf16>
    %12 = arith.truncf %10 : vector<72x768xf32> to vector<72x768xbf16>
    %cst = arith.constant dense<0.000000e+00> : vector<8x768xf32>
    %13 = tpu.matmul %11, %12, %cst {dimension_numbers = #tpu.dot_dimension_numbers<[1], [0], [0], [1], [0, 0, 1, 1], [], []>} : vector<8x72xbf16>, vector<72x768xbf16>, vector<8x768xf32> -> vector<8x768xf32>
    %c0_3 = arith.constant 0 : index
    %c0_4 = arith.constant 0 : index
    %14 = vector.load %arg2[%c0_3, %c0_4] : memref<8x1xf32, #tpu.memory_space<vmem>>, vector<8x1xf32>
    %15 = vector.broadcast %14 : vector<8x1xf32> to vector<8x768xf32>
    %16 = arith.addf %13, %15 : vector<8x768xf32>
    %c0_5 = arith.constant 0 : index
    %c0_6 = arith.constant 0 : index
    %17 = vector.load %arg10[%c0_5, %c0_6] : memref<8x768xf32, #tpu.memory_space<vmem>>, vector<8x768xf32>
    tpu.vector_store %arg10[%c0_5, %c0_6], %16 {strides = array<i32>} : memref<8x768xf32, #tpu.memory_space<vmem>>, vector<8x768xf32>,
    %cst_7 = arith.constant 0.000000e+00 : f32
    %18 = vector.broadcast %cst_7 : f32 to vector<8x768xf32>
    %19 = arith.maximumf %16, %18 : vector<8x768xf32>
    %c0_8 = arith.constant 0 : index
    %c0_9 = arith.constant 0 : index
    %20 = vector.load %arg5[%c0_8, %c0_9] : memref<272x128xbf16, #tpu.memory_space<vmem>>, vector<272x128xbf16>
    %21 = vector.extract_strided_slice %19 {offsets = [0, 0], sizes = [8, 272], strides = [1, 1]} : vector<8x768xf32> to vector<8x272xf32>
    %22 = vector.extract_strided_slice %19 {offsets = [0, 1], sizes = [8, 272], strides = [1, 1]} : vector<8x768xf32> to vector<8x272xf32>
    %23 = arith.maximumf %21, %22 : vector<8x272xf32>
    %24 = vector.extract_strided_slice %19 {offsets = [0, 18], sizes = [8, 272], strides = [1, 1]} : vector<8x768xf32> to vector<8x272xf32>
    %25 = arith.maximumf %23, %24 : vector<8x272xf32>
    %26 = vector.extract_strided_slice %19 {offsets = [0, 19], sizes = [8, 272], strides = [1, 1]} : vector<8x768xf32> to vector<8x272xf32>
    %27 = arith.maximumf %25, %26 : vector<8x272xf32>
    %28 = arith.truncf %27 : vector<8x272xf32> to vector<8x272xbf16>
    %cst_10 = arith.constant dense<0.000000e+00> : vector<8x128xf32>
    %29 = tpu.matmul %28, %20, %cst_10 {dimension_numbers = #tpu.dot_dimension_numbers<[1], [0], [0], [1], [0, 0, 1, 1], [], []>} : vector<8x272xbf16>, vector<272x128xbf16>, vector<8x128xf32> -> vector<8x128xf32>
    %30 = vector.extract_strided_slice %19 {offsets = [0, 384], sizes = [8, 272], strides = [1, 1]} : vector<8x768xf32> to vector<8x272xf32>
    %31 = vector.extract_strided_slice %19 {offsets = [0, 385], sizes = [8, 272], strides = [1, 1]} : vector<8x768xf32> to vector<8x272xf32>
    %32 = arith.maximumf %30, %31 : vector<8x272xf32>
    %33 = vector.extract_strided_slice %19 {offsets = [0, 402], sizes = [8, 272], strides = [1, 1]} : vector<8x768xf32> to vector<8x272xf32>
    %34 = arith.maximumf %32, %33 : vector<8x272xf32>
    %35 = vector.extract_strided_slice %19 {offsets = [0, 403], sizes = [8, 272], strides = [1, 1]} : vector<8x768xf32> to vector<8x272xf32>
    %36 = arith.maximumf %34, %35 : vector<8x272xf32>
    %37 = arith.truncf %36 : vector<8x272xf32> to vector<8x272xbf16>
    %cst_11 = arith.constant dense<0.000000e+00> : vector<8x128xf32>
    %38 = tpu.matmul %37, %20, %cst_11 {dimension_numbers = #tpu.dot_dimension_numbers<[1], [0], [0], [1], [0, 0, 1, 1], [], []>} : vector<8x272xbf16>, vector<272x128xbf16>, vector<8x128xf32> -> vector<8x128xf32>
    %cst_12 = arith.constant 0.000000e+00 : f32
    %39 = vector.broadcast %cst_12 : f32 to vector<8x128xf32>
    %40 = tpu.concatenate %29, %38, %39 in 1 : vector<8x128xf32>, vector<8x128xf32>, vector<8x128xf32> -> vector<8x384xf32>
    %41 = vector.extract_strided_slice %40 {offsets = [0, 0], sizes = [8, 256], strides = [1, 1]} : vector<8x384xf32> to vector<8x256xf32>
    %42 = vector.extract_strided_slice %40 {offsets = [0, 1], sizes = [8, 256], strides = [1, 1]} : vector<8x384xf32> to vector<8x256xf32>
    %43 = vector.extract_strided_slice %40 {offsets = [0, 2], sizes = [8, 256], strides = [1, 1]} : vector<8x384xf32> to vector<8x256xf32>
    %44 = vector.extract_strided_slice %40 {offsets = [0, 10], sizes = [8, 256], strides = [1, 1]} : vector<8x384xf32> to vector<8x256xf32>
    %45 = vector.extract_strided_slice %40 {offsets = [0, 11], sizes = [8, 256], strides = [1, 1]} : vector<8x384xf32> to vector<8x256xf32>
    %46 = vector.extract_strided_slice %40 {offsets = [0, 12], sizes = [8, 256], strides = [1, 1]} : vector<8x384xf32> to vector<8x256xf32>
    %47 = vector.extract_strided_slice %40 {offsets = [0, 20], sizes = [8, 256], strides = [1, 1]} : vector<8x384xf32> to vector<8x256xf32>
    %48 = vector.extract_strided_slice %40 {offsets = [0, 21], sizes = [8, 256], strides = [1, 1]} : vector<8x384xf32> to vector<8x256xf32>
    %49 = vector.extract_strided_slice %40 {offsets = [0, 22], sizes = [8, 256], strides = [1, 1]} : vector<8x384xf32> to vector<8x256xf32>
    %50 = tpu.concatenate %41, %42, %43, %44, %45, %46, %47, %48, %49 in 0 : vector<8x256xf32>, vector<8x256xf32>, vector<8x256xf32>, vector<8x256xf32>, vector<8x256xf32>, vector<8x256xf32>, vector<8x256xf32>, vector<8x256xf32>, vector<8x256xf32> -> vector<72x256xf32>
    %c0_13 = arith.constant 0 : index
    %c0_14 = arith.constant 0 : index
    %51 = vector.load %arg3[%c0_13, %c0_14] : memref<16x72xbf16, #tpu.memory_space<vmem>>, vector<16x72xbf16>
    %52 = arith.truncf %50 : vector<72x256xf32> to vector<72x256xbf16>
    %cst_15 = arith.constant dense<0.000000e+00> : vector<16x256xf32>
    %53 = tpu.matmul %51, %52, %cst_15 {dimension_numbers = #tpu.dot_dimension_numbers<[1], [0], [0], [1], [0, 0, 1, 1], [], []>} : vector<16x72xbf16>, vector<72x256xbf16>, vector<16x256xf32> -> vector<16x256xf32>
    %c0_16 = arith.constant 0 : index
    %c0_17 = arith.constant 0 : index
    %54 = vector.load %arg4[%c0_16, %c0_17] : memref<16x1xf32, #tpu.memory_space<vmem>>, vector<16x1xf32>
    %55 = vector.broadcast %54 : vector<16x1xf32> to vector<16x256xf32>
    %56 = arith.addf %53, %55 : vector<16x256xf32>
    %cst_18 = arith.constant 0.000000e+00 : f32
    %57 = vector.broadcast %cst_18 : f32 to vector<16x256xf32>
    %58 = arith.maximumf %56, %57 : vector<16x256xf32>
    %c0_19 = arith.constant 0 : index
    %c0_20 = arith.constant 0 : index
    %59 = vector.load %arg11[%c0_19, %c0_20] : memref<16x256xf32, #tpu.memory_space<vmem>>, vector<16x256xf32>
    tpu.vector_store %arg11[%c0_19, %c0_20], %58 {strides = array<i32>} : memref<16x256xf32, #tpu.memory_space<vmem>>, vector<16x256xf32>,
    %60 = vector.extract_strided_slice %58 {offsets = [0, 0], sizes = [1, 128], strides = [1, 1]} : vector<16x256xf32> to vector<1x128xf32>
    %61 = vector.extract_strided_slice %58 {offsets = [1, 0], sizes = [1, 128], strides = [1, 1]} : vector<16x256xf32> to vector<1x128xf32>
    %62 = vector.extract_strided_slice %58 {offsets = [2, 0], sizes = [1, 128], strides = [1, 1]} : vector<16x256xf32> to vector<1x128xf32>
    %63 = vector.extract_strided_slice %58 {offsets = [3, 0], sizes = [1, 128], strides = [1, 1]} : vector<16x256xf32> to vector<1x128xf32>
    %64 = vector.extract_strided_slice %58 {offsets = [4, 0], sizes = [1, 128], strides = [1, 1]} : vector<16x256xf32> to vector<1x128xf32>
    %65 = vector.extract_strided_slice %58 {offsets = [5, 0], sizes = [1, 128], strides = [1, 1]} : vector<16x256xf32> to vector<1x128xf32>
    %66 = vector.extract_strided_slice %58 {offsets = [6, 0], sizes = [1, 128], strides = [1, 1]} : vector<16x256xf32> to vector<1x128xf32>
    %67 = vector.extract_strided_slice %58 {offsets = [7, 0], sizes = [1, 128], strides = [1, 1]} : vector<16x256xf32> to vector<1x128xf32>
    %68 = vector.extract_strided_slice %58 {offsets = [8, 0], sizes = [1, 128], strides = [1, 1]} : vector<16x256xf32> to vector<1x128xf32>
    %69 = vector.extract_strided_slice %58 {offsets = [9, 0], sizes = [1, 128], strides = [1, 1]} : vector<16x256xf32> to vector<1x128xf32>
    %70 = vector.extract_strided_slice %58 {offsets = [10, 0], sizes = [1, 128], strides = [1, 1]} : vector<16x256xf32> to vector<1x128xf32>
    %71 = vector.extract_strided_slice %58 {offsets = [11, 0], sizes = [1, 128], strides = [1, 1]} : vector<16x256xf32> to vector<1x128xf32>
    %72 = vector.extract_strided_slice %58 {offsets = [12, 0], sizes = [1, 128], strides = [1, 1]} : vector<16x256xf32> to vector<1x128xf32>
    %73 = vector.extract_strided_slice %58 {offsets = [13, 0], sizes = [1, 128], strides = [1, 1]} : vector<16x256xf32> to vector<1x128xf32>
    %74 = vector.extract_strided_slice %58 {offsets = [14, 0], sizes = [1, 128], strides = [1, 1]} : vector<16x256xf32> to vector<1x128xf32>
    %75 = vector.extract_strided_slice %58 {offsets = [15, 0], sizes = [1, 128], strides = [1, 1]} : vector<16x256xf32> to vector<1x128xf32>
    %76 = tpu.concatenate %60, %61, %62, %63, %64, %65, %66, %67, %68, %69, %70, %71, %72, %73, %74, %75 in 1 : vector<1x128xf32>, vector<1x128xf32>, vector<1x128xf32>, vector<1x128xf32>, vector<1x128xf32>, vector<1x128xf32>, vector<1x128xf32>, vector<1x128xf32>, vector<1x128xf32>, vector<1x128xf32>, vector<1x128xf32>, vector<1x128xf32>, vector<1x128xf32>, vector<1x128xf32>, vector<1x128xf32>, vector<1x128xf32> -> vector<1x2048xf32>
    %77 = arith.truncf %76 : vector<1x2048xf32> to vector<1x2048xbf16>
    %c0_21 = arith.constant 0 : index
    %c0_22 = arith.constant 0 : index
    %78 = vector.load %arg6[%c0_21, %c0_22] : memref<2048x32xbf16, #tpu.memory_space<vmem>>, vector<2048x32xbf16>
    %cst_23 = arith.constant dense<0.000000e+00> : vector<1x32xf32>
    %79 = tpu.matmul %77, %78, %cst_23 {dimension_numbers = #tpu.dot_dimension_numbers<[1], [0], [0], [1], [0, 0, 1, 1], [], []>} : vector<1x2048xbf16>, vector<2048x32xbf16>, vector<1x32xf32> -> vector<1x32xf32>
    %c0_24 = arith.constant 0 : index
    %c0_25 = arith.constant 0 : index
    %80 = vector.load %arg7[%c0_24, %c0_25] : memref<1x32xf32, #tpu.memory_space<vmem>>, vector<1x32xf32>
    %81 = arith.addf %79, %80 : vector<1x32xf32>
    %c0_26 = arith.constant 0 : index
    %c0_27 = arith.constant 0 : index
    %82 = vector.load %arg12[%c0_26, %c0_27] : memref<2x32xf32, #tpu.memory_space<vmem>>, vector<1x32xf32>
    tpu.vector_store %arg12[%c0_26, %c0_27], %81 {strides = array<i32>} : memref<2x32xf32, #tpu.memory_space<vmem>>, vector<1x32xf32>,
    %83 = arith.truncf %81 : vector<1x32xf32> to vector<1x32xbf16>
    %c0_28 = arith.constant 0 : index
    %c0_29 = arith.constant 0 : index
    %84 = vector.load %arg8[%c0_28, %c0_29] : memref<32x10xbf16, #tpu.memory_space<vmem>>, vector<32x10xbf16>
    %cst_30 = arith.constant dense<0.000000e+00> : vector<1x10xf32>
    %85 = tpu.matmul %83, %84, %cst_30 {dimension_numbers = #tpu.dot_dimension_numbers<[1], [0], [0], [1], [0, 0, 1, 1], [], []>} : vector<1x32xbf16>, vector<32x10xbf16>, vector<1x10xf32> -> vector<1x10xf32>
    %c0_31 = arith.constant 0 : index
    %c0_32 = arith.constant 0 : index
    %86 = vector.load %arg9[%c0_31, %c0_32] : memref<1x10xf32, #tpu.memory_space<vmem>>, vector<1x10xf32>
    %87 = arith.addf %85, %86 : vector<1x10xf32>
    %c0_33 = arith.constant 0 : index
    %c0_34 = arith.constant 0 : index
    %88 = vector.load %arg13[%c0_33, %c0_34] : memref<2x10xf32, #tpu.memory_space<vmem>>, vector<1x10xf32>
    tpu.vector_store %arg13[%c0_33, %c0_34], %87 {strides = array<i32>} : memref<2x10xf32, #tpu.memory_space<vmem>>, vector<1x10xf32>,
    %89 = vector.extract_strided_slice %58 {offsets = [0, 128], sizes = [1, 128], strides = [1, 1]} : vector<16x256xf32> to vector<1x128xf32>
    %90 = vector.extract_strided_slice %58 {offsets = [1, 128], sizes = [1, 128], strides = [1, 1]} : vector<16x256xf32> to vector<1x128xf32>
    %91 = vector.extract_strided_slice %58 {offsets = [2, 128], sizes = [1, 128], strides = [1, 1]} : vector<16x256xf32> to vector<1x128xf32>
    %92 = vector.extract_strided_slice %58 {offsets = [3, 128], sizes = [1, 128], strides = [1, 1]} : vector<16x256xf32> to vector<1x128xf32>
    %93 = vector.extract_strided_slice %58 {offsets = [4, 128], sizes = [1, 128], strides = [1, 1]} : vector<16x256xf32> to vector<1x128xf32>
    %94 = vector.extract_strided_slice %58 {offsets = [5, 128], sizes = [1, 128], strides = [1, 1]} : vector<16x256xf32> to vector<1x128xf32>
    %95 = vector.extract_strided_slice %58 {offsets = [6, 128], sizes = [1, 128], strides = [1, 1]} : vector<16x256xf32> to vector<1x128xf32>
    %96 = vector.extract_strided_slice %58 {offsets = [7, 128], sizes = [1, 128], strides = [1, 1]} : vector<16x256xf32> to vector<1x128xf32>
    %97 = vector.extract_strided_slice %58 {offsets = [8, 128], sizes = [1, 128], strides = [1, 1]} : vector<16x256xf32> to vector<1x128xf32>
    %98 = vector.extract_strided_slice %58 {offsets = [9, 128], sizes = [1, 128], strides = [1, 1]} : vector<16x256xf32> to vector<1x128xf32>
    %99 = vector.extract_strided_slice %58 {offsets = [10, 128], sizes = [1, 128], strides = [1, 1]} : vector<16x256xf32> to vector<1x128xf32>
    %100 = vector.extract_strided_slice %58 {offsets = [11, 128], sizes = [1, 128], strides = [1, 1]} : vector<16x256xf32> to vector<1x128xf32>
    %101 = vector.extract_strided_slice %58 {offsets = [12, 128], sizes = [1, 128], strides = [1, 1]} : vector<16x256xf32> to vector<1x128xf32>
    %102 = vector.extract_strided_slice %58 {offsets = [13, 128], sizes = [1, 128], strides = [1, 1]} : vector<16x256xf32> to vector<1x128xf32>
    %103 = vector.extract_strided_slice %58 {offsets = [14, 128], sizes = [1, 128], strides = [1, 1]} : vector<16x256xf32> to vector<1x128xf32>
    %104 = vector.extract_strided_slice %58 {offsets = [15, 128], sizes = [1, 128], strides = [1, 1]} : vector<16x256xf32> to vector<1x128xf32>
    %105 = tpu.concatenate %89, %90, %91, %92, %93, %94, %95, %96, %97, %98, %99, %100, %101, %102, %103, %104 in 1 : vector<1x128xf32>, vector<1x128xf32>, vector<1x128xf32>, vector<1x128xf32>, vector<1x128xf32>, vector<1x128xf32>, vector<1x128xf32>, vector<1x128xf32>, vector<1x128xf32>, vector<1x128xf32>, vector<1x128xf32>, vector<1x128xf32>, vector<1x128xf32>, vector<1x128xf32>, vector<1x128xf32>, vector<1x128xf32> -> vector<1x2048xf32>
    %106 = arith.truncf %105 : vector<1x2048xf32> to vector<1x2048xbf16>
    %c0_35 = arith.constant 0 : index
    %c0_36 = arith.constant 0 : index
    %107 = vector.load %arg6[%c0_35, %c0_36] : memref<2048x32xbf16, #tpu.memory_space<vmem>>, vector<2048x32xbf16>
    %cst_37 = arith.constant dense<0.000000e+00> : vector<1x32xf32>
    %108 = tpu.matmul %106, %107, %cst_37 {dimension_numbers = #tpu.dot_dimension_numbers<[1], [0], [0], [1], [0, 0, 1, 1], [], []>} : vector<1x2048xbf16>, vector<2048x32xbf16>, vector<1x32xf32> -> vector<1x32xf32>
    %c0_38 = arith.constant 0 : index
    %c0_39 = arith.constant 0 : index
    %109 = vector.load %arg7[%c0_38, %c0_39] : memref<1x32xf32, #tpu.memory_space<vmem>>, vector<1x32xf32>
    %110 = arith.addf %108, %109 : vector<1x32xf32>
    %c1 = arith.constant 1 : index
    %c0_40 = arith.constant 0 : index
    %111 = vector.load %arg12[%c1, %c0_40] : memref<2x32xf32, #tpu.memory_space<vmem>>, vector<1x32xf32>
    tpu.vector_store %arg12[%c1, %c0_40], %110 {strides = array<i32>} : memref<2x32xf32, #tpu.memory_space<vmem>>, vector<1x32xf32>,
    %112 = arith.truncf %110 : vector<1x32xf32> to vector<1x32xbf16>
    %c0_41 = arith.constant 0 : index
    %c0_42 = arith.constant 0 : index
    %113 = vector.load %arg8[%c0_41, %c0_42] : memref<32x10xbf16, #tpu.memory_space<vmem>>, vector<32x10xbf16>
    %cst_43 = arith.constant dense<0.000000e+00> : vector<1x10xf32>
    %114 = tpu.matmul %112, %113, %cst_43 {dimension_numbers = #tpu.dot_dimension_numbers<[1], [0], [0], [1], [0, 0, 1, 1], [], []>} : vector<1x32xbf16>, vector<32x10xbf16>, vector<1x10xf32> -> vector<1x10xf32>
    %c0_44 = arith.constant 0 : index
    %c0_45 = arith.constant 0 : index
    %115 = vector.load %arg9[%c0_44, %c0_45] : memref<1x10xf32, #tpu.memory_space<vmem>>, vector<1x10xf32>
    %116 = arith.addf %114, %115 : vector<1x10xf32>
    %c1_46 = arith.constant 1 : index
    %c0_47 = arith.constant 0 : index
    %117 = vector.load %arg13[%c1_46, %c0_47] : memref<2x10xf32, #tpu.memory_space<vmem>>, vector<1x10xf32>
    tpu.vector_store %arg13[%c1_46, %c0_47], %116 {strides = array<i32>} : memref<2x10xf32, #tpu.memory_space<vmem>>, vector<1x10xf32>,
    return
  }
}

</mosaic_0001>

<llo_original>
// kernel: forward.1
$region0: #{forward.1}
  #allocation0 [shape = 'u32[]', space=smem, size = 0x4, offset = 0x4, fixed_abs, tag = 'smem constant byte address 0x4 - core index']
  #allocation1 [shape = 'u32[144,128]{1,0:T(1,128)}', space=vmem, size = 0x12000, scoped, tag = 'internal scratch']
  %s0 = inlined_call_operand.vmem [shape: f32[8,896], index: 0, kind: input, shape index: {}]
  %s1 = inlined_call_operand.vmem [shape: bf16[8,72], index: 1, kind: input, shape index: {}]
  %s2 = inlined_call_operand.vmem [shape: f32[8,1], index: 2, kind: input, shape index: {}]
  %s3 = inlined_call_operand.vmem [shape: bf16[16,72], index: 3, kind: input, shape index: {}]
  %s4 = inlined_call_operand.vmem [shape: f32[16,1], index: 4, kind: input, shape index: {}]
  %s5 = inlined_call_operand.vmem [shape: bf16[272,128], index: 5, kind: input, shape index: {}]
  %s6 = inlined_call_operand.hbm [shape: bf16[2048,32], index: 6, kind: input, shape index: {}]
  %s7 = inlined_call_operand.vmem [shape: f32[1,32], index: 7, kind: input, shape index: {}]
  %s8 = inlined_call_operand.vmem [shape: bf16[32,10], index: 8, kind: input, shape index: {}]
  %s9 = inlined_call_operand.vmem [shape: f32[1,10], index: 9, kind: input, shape index: {}]
  %s10 = inlined_call_operand.vmem [shape: f32[8,768], index: 10, kind: output, shape index: {0}]
  %s11 = inlined_call_operand.vmem [shape: f32[16,256], index: 11, kind: output, shape index: {1}]
  %s12 = inlined_call_operand.hbm [shape: f32[2,32], index: 12, kind: output, shape index: {2}]
  %s13 = inlined_call_operand.hbm [shape: f32[2,10], index: 13, kind: output, shape index: {3}]
  %14 = xla_tuple %s10, %s11, %s12, %s13
  %s15 = sld [smem:[#allocation0]]
  $region78: #{forward.1} parent=0
    _
  %s17 = ssub.s32 1, %s15
  %s18 = scalar_select 0, %s17, %s15
  $region1: #{forward.1} parent=0
    #allocation2 [shape = 'u8[524288]{0}', space=vmem, size = 0x80000, scoped, tag = 'input window, operand 6, single buffered']
    #allocation3 [shape = 's32[1]{0}', space=sflag, size = 0x4, scoped, tag = 'scoped memory for forward.1']
    #allocation4 [shape = 's32[1]{0}', space=sflag, size = 0x4, scoped, tag = 'scoped memory for forward.1']
    #allocation5 [shape = 'u8[1024]{0}', space=vmem, size = 0x400, scoped, tag = 'output window, operand 2, single buffered']
    #allocation6 [shape = 'u8[1024]{0}', space=vmem, size = 0x400, scoped, tag = 'output window, operand 3, single buffered']
    #allocation7 [shape = 's32[1]{0}', space=sflag, size = 0x4, scoped, tag = 'scoped memory for forward.1']
    %19 = vsyncpa [#allocation3], 0
    %20 = vsyncpa [#allocation4], 0
    %21 = vsyncpa [#allocation7], 0
    // Predicated region
    $region2: #{forward.1} parent=1 // pred_check
      _
    $region3: #{forward.1} parent=1 // pred_check_branch
      %23 = sbr.rel (0) target = $region5
    $region4: #{forward.1} parent=1 // pred_region
      _
    $region5: #{forward.1} parent=1 // pred_fallthru
      _
    // Predicated region
    $region6: #{forward.1} parent=1 // pred_check
      _
    $region7: #{forward.1} parent=1 // pred_check_branch
      %25 = sbr.rel (0) target = $region9
    $region8: #{forward.1} parent=1 // pred_region
      _
    $region9: #{forward.1} parent=1 // pred_fallthru
      _
    // Predicated region
    $region10: #{forward.1} parent=1 // pred_check
      _
    $region11: #{forward.1} parent=1 // pred_check_branch
      %27 = sbr.rel (0) target = $region13
    $region12: #{forward.1} parent=1 // pred_region
      _
    $region13: #{forward.1} parent=1 // pred_fallthru
      _
    // Predicated region
    $region14: #{forward.1} parent=1 // pred_check
      _
    $region15: #{forward.1} parent=1 // pred_check_branch
      %29 = sbr.rel (0) target = $region17
    $region16: #{forward.1} parent=1 // pred_region
      _
    $region17: #{forward.1} parent=1 // pred_fallthru
      _
    // Predicated region
    $region18: #{forward.1} parent=1 // pred_check
      _
    $region19: #{forward.1} parent=1 // pred_check_branch
      %31 = sbr.rel (0) target = $region21
    $region20: #{forward.1} parent=1 // pred_region
      _
    $region21: #{forward.1} parent=1 // pred_fallthru
      _
    // Predicated region
    $region22: #{forward.1} parent=1 // pred_check
      _
    $region23: #{forward.1} parent=1 // pred_check_branch
      %33 = sbr.rel (0) target = $region25
    $region24: #{forward.1} parent=1 // pred_region
      _
    $region25: #{forward.1} parent=1 // pred_fallthru
      _
    // Predicated region
    $region26: #{forward.1} parent=1 // pred_check
      _
    $region27: #{forward.1} parent=1 // pred_check_branch
      %35 = sbr.rel (0) target = $region29
    $region28: #{forward.1} parent=1 // pred_region
      %s37 = ssub.s32 16384, 16384
      %38 = vsyncadd [#allocation3], %s37
      %s39 = sshll.u32 [#allocation2], 4
      %s40 = int_to_ptr.vmem [resolvable:$true] %s39
      %45 = dma.hbm_to_vmem [thread:$0]  %s6, 16384, %s40, [#allocation3], 64, 64, 4
    $region29: #{forward.1} parent=1 // pred_fallthru
      _
    // Predicated region
    $region30: #{forward.1} parent=1 // pred_check
      _
    $region31: #{forward.1} parent=1 // pred_check_branch
      %47 = sbr.rel (0) target = $region33
    $region32: #{forward.1} parent=1 // pred_region
      _
    $region33: #{forward.1} parent=1 // pred_fallthru
      _
    // Predicated region
    $region34: #{forward.1} parent=1 // pred_check
      _
    $region35: #{forward.1} parent=1 // pred_check_branch
      %49 = sbr.rel (0) target = $region37
    $region36: #{forward.1} parent=1 // pred_region
      _
    $region37: #{forward.1} parent=1 // pred_fallthru
      _
    // Predicated region
    $region38: #{forward.1} parent=1 // pred_check
      _
    $region39: #{forward.1} parent=1 // pred_check_branch
      %51 = sbr.rel (0) target = $region41
    $region40: #{forward.1} parent=1 // pred_region
      _
    $region41: #{forward.1} parent=1 // pred_fallthru
      _
    // Predicated region
    $region42: #{forward.1} parent=1 // pred_check
      _
    $region43: #{forward.1} parent=1 // pred_check_branch
      %53 = sbr.rel (0) target = $region45
    $region44: #{forward.1} parent=1 // pred_region
      %54 = dma.done [#allocation3], 16384
    $region45: #{forward.1} parent=1 // pred_fallthru
      _
    %v56 = vld [vmem:[%s0] sm:$0xff]
    %v57 = vld [vmem:[%s0 + $0x8] sm:$0xff]
    %v58 = vld [vmem:[%s0 + $0x10] sm:$0xff]
    %v59 = vld [vmem:[%s0 + $0x18] sm:$0xff]
    %v60 = vld [vmem:[%s0 + $0x20] sm:$0xff]
    %v61 = vld [vmem:[%s0 + $0x28] sm:$0xff]
    %v62 = vld [vmem:[%s0 + $0x30] sm:$0xff]
    %70 = vrot.lane.b32.xlu0 %v56, 127
    %v71 = vpop.permute.xlu0 %70
    %72 = vrot.lane.b32.xlu0 %v57, 127
    %v73 = vpop.permute.xlu0 %72
    %74 = vrot.lane.b32.xlu0 %v58, 127
    %v75 = vpop.permute.xlu0 %74
    %76 = vrot.lane.b32.xlu0 %v59, 127
    %v77 = vpop.permute.xlu0 %76
    %78 = vrot.lane.b32.xlu0 %v60, 127
    %v79 = vpop.permute.xlu0 %78
    %80 = vrot.lane.b32.xlu0 %v61, 127
    %v81 = vpop.permute.xlu0 %80
    %82 = vrot.lane.b32.xlu0 %v62, 127
    %v83 = vpop.permute.xlu0 %82
    %vm84 = vcmask 1039360
    %v85 = vsel %vm84, %v71, %v73
    %v86 = vsel %vm84, %v73, %v75
    %v87 = vsel %vm84, %v75, %v77
    %v88 = vsel %vm84, %v77, %v79
    %v89 = vsel %vm84, %v79, %v81
    %v90 = vsel %vm84, %v81, %v83
    %97 = vrot.lane.b32.xlu0 %v56, 126
    %v98 = vpop.permute.xlu0 %97
    %99 = vrot.lane.b32.xlu0 %v57, 126
    %v100 = vpop.permute.xlu0 %99
    %101 = vrot.lane.b32.xlu0 %v58, 126
    %v102 = vpop.permute.xlu0 %101
    %103 = vrot.lane.b32.xlu0 %v59, 126
    %v104 = vpop.permute.xlu0 %103
    %105 = vrot.lane.b32.xlu0 %v60, 126
    %v106 = vpop.permute.xlu0 %105
    %107 = vrot.lane.b32.xlu0 %v61, 126
    %v108 = vpop.permute.xlu0 %107
    %109 = vrot.lane.b32.xlu0 %v62, 126
    %v110 = vpop.permute.xlu0 %109
    %vm111 = vcmask 1031168
    %v112 = vsel %vm111, %v98, %v100
    %v113 = vsel %vm111, %v100, %v102
    %v114 = vsel %vm111, %v102, %v104
    %v115 = vsel %vm111, %v104, %v106
    %v116 = vsel %vm111, %v106, %v108
    %v117 = vsel %vm111, %v108, %v110
    %124 = vrot.lane.b32.xlu0 %v56, 110
    %v125 = vpop.permute.xlu0 %124
    %126 = vrot.lane.b32.xlu0 %v57, 110
    %v127 = vpop.permute.xlu0 %126
    %128 = vrot.lane.b32.xlu0 %v58, 110
    %v129 = vpop.permute.xlu0 %128
    %130 = vrot.lane.b32.xlu0 %v59, 110
    %v131 = vpop.permute.xlu0 %130
    %132 = vrot.lane.b32.xlu0 %v60, 110
    %v133 = vpop.permute.xlu0 %132
    %134 = vrot.lane.b32.xlu0 %v61, 110
    %v135 = vpop.permute.xlu0 %134
    %136 = vrot.lane.b32.xlu0 %v62, 110
    %v137 = vpop.permute.xlu0 %136
    %vm138 = vcmask 900096
    %v139 = vsel %vm138, %v125, %v127
    %v140 = vsel %vm138, %v127, %v129
    %v141 = vsel %vm138, %v129, %v131
    %v142 = vsel %vm138, %v131, %v133
    %v143 = vsel %vm138, %v133, %v135
    %v144 = vsel %vm138, %v135, %v137
    %151 = vrot.lane.b32.xlu0 %v56, 109
    %v152 = vpop.permute.xlu0 %151
    %153 = vrot.lane.b32.xlu0 %v57, 109
    %v154 = vpop.permute.xlu0 %153
    %155 = vrot.lane.b32.xlu0 %v58, 109
    %v156 = vpop.permute.xlu0 %155
    %157 = vrot.lane.b32.xlu0 %v59, 109
    %v158 = vpop.permute.xlu0 %157
    %159 = vrot.lane.b32.xlu0 %v60, 109
    %v160 = vpop.permute.xlu0 %159
    %161 = vrot.lane.b32.xlu0 %v61, 109
    %v162 = vpop.permute.xlu0 %161
    %163 = vrot.lane.b32.xlu0 %v62, 109
    %v164 = vpop.permute.xlu0 %163
    %vm165 = vcmask 891904
    %v166 = vsel %vm165, %v152, %v154
    %v167 = vsel %vm165, %v154, %v156
    %v168 = vsel %vm165, %v156, %v158
    %v169 = vsel %vm165, %v158, %v160
    %v170 = vsel %vm165, %v160, %v162
    %v171 = vsel %vm165, %v162, %v164
    %178 = vrot.lane.b32.xlu0 %v56, 108
    %v179 = vpop.permute.xlu0 %178
    %180 = vrot.lane.b32.xlu0 %v57, 108
    %v181 = vpop.permute.xlu0 %180
    %182 = vrot.lane.b32.xlu0 %v58, 108
    %v183 = vpop.permute.xlu0 %182
    %184 = vrot.lane.b32.xlu0 %v59, 108
    %v185 = vpop.permute.xlu0 %184
    %186 = vrot.lane.b32.xlu0 %v60, 108
    %v187 = vpop.permute.xlu0 %186
    %188 = vrot.lane.b32.xlu0 %v61, 108
    %v189 = vpop.permute.xlu0 %188
    %190 = vrot.lane.b32.xlu0 %v62, 108
    %v191 = vpop.permute.xlu0 %190
    %vm192 = vcmask 883712
    %v193 = vsel %vm192, %v179, %v181
    %v194 = vsel %vm192, %v181, %v183
    %v195 = vsel %vm192, %v183, %v185
    %v196 = vsel %vm192, %v185, %v187
    %v197 = vsel %vm192, %v187, %v189
    %v198 = vsel %vm192, %v189, %v191
    %205 = vrot.lane.b32.xlu0 %v56, 92
    %v206 = vpop.permute.xlu0 %205
    %207 = vrot.lane.b32.xlu0 %v57, 92
    %v208 = vpop.permute.xlu0 %207
    %209 = vrot.lane.b32.xlu0 %v58, 92
    %v210 = vpop.permute.xlu0 %209
    %211 = vrot.lane.b32.xlu0 %v59, 92
    %v212 = vpop.permute.xlu0 %211
    %213 = vrot.lane.b32.xlu0 %v60, 92
    %v214 = vpop.permute.xlu0 %213
    %215 = vrot.lane.b32.xlu0 %v61, 92
    %v216 = vpop.permute.xlu0 %215
    %217 = vrot.lane.b32.xlu0 %v62, 92
    %v218 = vpop.permute.xlu0 %217
    %vm219 = vcmask 752640
    %v220 = vsel %vm219, %v206, %v208
    %v221 = vsel %vm219, %v208, %v210
    %v222 = vsel %vm219, %v210, %v212
    %v223 = vsel %vm219, %v212, %v214
    %v224 = vsel %vm219, %v214, %v216
    %v225 = vsel %vm219, %v216, %v218
    %232 = vrot.lane.b32.xlu0 %v56, 91
    %v233 = vpop.permute.xlu0 %232
    %234 = vrot.lane.b32.xlu0 %v57, 91
    %v235 = vpop.permute.xlu0 %234
    %236 = vrot.lane.b32.xlu0 %v58, 91
    %v237 = vpop.permute.xlu0 %236
    %238 = vrot.lane.b32.xlu0 %v59, 91
    %v239 = vpop.permute.xlu0 %238
    %240 = vrot.lane.b32.xlu0 %v60, 91
    %v241 = vpop.permute.xlu0 %240
    %242 = vrot.lane.b32.xlu0 %v61, 91
    %v243 = vpop.permute.xlu0 %242
    %244 = vrot.lane.b32.xlu0 %v62, 91
    %v245 = vpop.permute.xlu0 %244
    %vm246 = vcmask 744448
    %v247 = vsel %vm246, %v233, %v235
    %v248 = vsel %vm246, %v235, %v237
    %v249 = vsel %vm246, %v237, %v239
    %v250 = vsel %vm246, %v239, %v241
    %v251 = vsel %vm246, %v241, %v243
    %v252 = vsel %vm246, %v243, %v245
    %259 = vrot.lane.b32.xlu0 %v56, 90
    %v260 = vpop.permute.xlu0 %259
    %261 = vrot.lane.b32.xlu0 %v57, 90
    %v262 = vpop.permute.xlu0 %261
    %263 = vrot.lane.b32.xlu0 %v58, 90
    %v264 = vpop.permute.xlu0 %263
    %265 = vrot.lane.b32.xlu0 %v59, 90
    %v266 = vpop.permute.xlu0 %265
    %267 = vrot.lane.b32.xlu0 %v60, 90
    %v268 = vpop.permute.xlu0 %267
    %269 = vrot.lane.b32.xlu0 %v61, 90
    %v270 = vpop.permute.xlu0 %269
    %271 = vrot.lane.b32.xlu0 %v62, 90
    %v272 = vpop.permute.xlu0 %271
    %vm273 = vcmask 736256
    %v274 = vsel %vm273, %v260, %v262
    %v275 = vsel %vm273, %v262, %v264
    %v276 = vsel %vm273, %v264, %v266
    %v277 = vsel %vm273, %v266, %v268
    %v278 = vsel %vm273, %v268, %v270
    %v279 = vsel %vm273, %v270, %v272
    %v286 = vld [vmem:[%s1] sm:$0xf]
    %v287 = vpack.c.bf16 %v85, %v56
    %v288 = vpack.c.bf16 %v86, %v57
    %v289 = vpack.c.bf16 %v87, %v58
    %v290 = vpack.c.bf16 %v88, %v59
    %v291 = vpack.c.bf16 %v89, %v60
    %v292 = vpack.c.bf16 %v90, %v61
    %v293 = vpack.c.bf16 %v139, %v112
    %v294 = vpack.c.bf16 %v140, %v113
    %v295 = vpack.c.bf16 %v141, %v114
    %v296 = vpack.c.bf16 %v142, %v115
    %v297 = vpack.c.bf16 %v143, %v116
    %v298 = vpack.c.bf16 %v144, %v117
    %v299 = vpack.c.bf16 %v193, %v166
    %v300 = vpack.c.bf16 %v194, %v167
    %v301 = vpack.c.bf16 %v195, %v168
    %v302 = vpack.c.bf16 %v196, %v169
    %v303 = vpack.c.bf16 %v197, %v170
    %v304 = vpack.c.bf16 %v198, %v171
    %v305 = vpack.c.bf16 %v247, %v220
    %v306 = vpack.c.bf16 %v248, %v221
    %v307 = vpack.c.bf16 %v249, %v222
    %v308 = vpack.c.bf16 %v250, %v223
    %v309 = vpack.c.bf16 %v251, %v224
    %v310 = vpack.c.bf16 %v252, %v225
    %v311 = vpack.c.bf16 %v274, %v274
    %v312 = vpack.c.bf16 %v275, %v275
    %v313 = vpack.c.bf16 %v276, %v276
    %v314 = vpack.c.bf16 %v277, %v277
    %v315 = vpack.c.bf16 %v278, %v278
    %v316 = vpack.c.bf16 %v279, %v279
    %v317 = vld [vmem:[%s2] sm:$0xff]
    %319 = vset.pattern.permute.xlu0 0
    %320 = vperm.xlu0 %319, %v317
    %v321 = vpop.permute.xlu0 %320
    %vm323 = vcmask 588800
    %v325 = vsel %vm323, %v286, 0
    %vm327 = vcmask 1043456
    %v329 = vsel %vm327, %v311, 0
    %v332 = vsel %vm327, %v312, 0
    %v335 = vsel %vm327, %v313, 0
    %v338 = vsel %vm327, %v314, 0
    %v341 = vsel %vm327, %v315, 0
    %v344 = vsel %vm327, %v316, 0
    %346 = vmatprep.subr.bf16.mxu0 %v288
    %347 = vmatpush1.bf16.msra.mxu0 %v287
    %348 = vmatprep.subr.bf16.mxu0 %v294
    %349 = vmatpush1.bf16.msra.mxu0 %v293
    %350 = vmatprep.subr.bf16.mxu0 %v300
    %351 = vmatpush1.bf16.msra.mxu0 %v299
    %352 = vmatprep.subr.bf16.mxu0 %v306
    %353 = vmatpush1.bf16.msra.mxu0 %v305
    %354 = vmatprep.subr.bf16.mxu0 %v332
    %355 = vmatpush1.bf16.msra.mxu0 %v329
    %356 = vmatprep.subr.bf16.mxu0 0
    %357 = vmatpush1.bf16.msra.mxu0 0
    %358 = vmatprep.subr.bf16.mxu0 0
    %359 = vmatpush1.bf16.msra.mxu0 0
    %360 = vmatprep.subr.bf16.mxu0 0
    %361 = vmatpush1.bf16.msra.mxu0 0
    %362 = vmatprep.subr.bf16.mxu0 0
    %363 = vmatpush1.bf16.msra.mxu0 0
    %364 = vmatprep.subr.bf16.mxu0 0
    %365 = vmatpush1.bf16.msra.mxu0 0
    %366 = vmatprep.subr.bf16.mxu0 0
    %367 = vmatpush1.bf16.msra.mxu0 0
    %368 = vmatprep.subr.bf16.mxu0 0
    %369 = vmatpush1.bf16.msra.mxu0 0
    %370 = vmatprep.subr.bf16.mxu0 0
    %371 = vmatpush1.bf16.msra.mxu0 0
    %372 = vmatprep.subr.bf16.mxu0 0
    %373 = vmatpush1.bf16.msra.mxu0 0
    %374 = vmatprep.subr.bf16.mxu0 0
    %375 = vmatpush1.bf16.msra.mxu0 0
    %376 = vmatprep.subr.bf16.mxu0 0
    %377 = vmatpush1.bf16.msra.mxu0 0
    %378 = vmatprep.mubr.bf16.mxu0 0
    %379 = vmatmul.mubr.bf16.gmra.mrb[0].mxu0 %v325
    %v380 = vpop.f32.mrb[0].mxu0
    %v381 = vadd.f32 %v321, %v380
    %v382 = vpop.f32.mrb[0].mxu0
    %v383 = vadd.f32 %v321, %v382
    %v384 = vpop.f32.mrb[0].mxu0
    %v385 = vpop.f32.mrb[0].mxu0
    %386 = vdwg.mxu0
    %387 = vmatprep.subr.bf16.mxu0 %v290
    %388 = vmatpush1.bf16.msra.mxu0 %v289
    %389 = vmatprep.subr.bf16.mxu0 %v296
    %390 = vmatpush1.bf16.msra.mxu0 %v295
    %391 = vmatprep.subr.bf16.mxu0 %v302
    %392 = vmatpush1.bf16.msra.mxu0 %v301
    %393 = vmatprep.subr.bf16.mxu0 %v308
    %394 = vmatpush1.bf16.msra.mxu0 %v307
    %395 = vmatprep.subr.bf16.mxu0 %v338
    %396 = vmatpush1.bf16.msra.mxu0 %v335
    %397 = vmatprep.subr.bf16.mxu0 0
    %398 = vmatpush1.bf16.msra.mxu0 0
    %399 = vmatprep.subr.bf16.mxu0 0
    %400 = vmatpush1.bf16.msra.mxu0 0
    %401 = vmatprep.subr.bf16.mxu0 0
    %402 = vmatpush1.bf16.msra.mxu0 0
    %403 = vmatprep.subr.bf16.mxu0 0
    %404 = vmatpush1.bf16.msra.mxu0 0
    %405 = vmatprep.subr.bf16.mxu0 0
    %406 = vmatpush1.bf16.msra.mxu0 0
    %407 = vmatprep.subr.bf16.mxu0 0
    %408 = vmatpush1.bf16.msra.mxu0 0
    %409 = vmatprep.subr.bf16.mxu0 0
    %410 = vmatpush1.bf16.msra.mxu0 0
    %411 = vmatprep.subr.bf16.mxu0 0
    %412 = vmatpush1.bf16.msra.mxu0 0
    %413 = vmatprep.subr.bf16.mxu0 0
    %414 = vmatpush1.bf16.msra.mxu0 0
    %415 = vmatprep.subr.bf16.mxu0 0
    %416 = vmatpush1.bf16.msra.mxu0 0
    %417 = vmatprep.subr.bf16.mxu0 0
    %418 = vmatpush1.bf16.msra.mxu0 0
    %419 = vmatprep.mubr.bf16.mxu0 0
    %420 = vmatmul.mubr.bf16.gmra.mrb[0].mxu0 %v325
    %v421 = vpop.f32.mrb[0].mxu0
    %v422 = vadd.f32 %v321, %v421
    %v423 = vpop.f32.mrb[0].mxu0
    %v424 = vadd.f32 %v321, %v423
    %v425 = vpop.f32.mrb[0].mxu0
    %v426 = vpop.f32.mrb[0].mxu0
    %427 = vdwg.mxu0
    %428 = vmatprep.subr.bf16.mxu0 %v292
    %429 = vmatpush1.bf16.msra.mxu0 %v291
    %430 = vmatprep.subr.bf16.mxu0 %v298
    %431 = vmatpush1.bf16.msra.mxu0 %v297
    %432 = vmatprep.subr.bf16.mxu0 %v304
    %433 = vmatpush1.bf16.msra.mxu0 %v303
    %434 = vmatprep.subr.bf16.mxu0 %v310
    %435 = vmatpush1.bf16.msra.mxu0 %v309
    %436 = vmatprep.subr.bf16.mxu0 %v344
    %437 = vmatpush1.bf16.msra.mxu0 %v341
    %438 = vmatprep.subr.bf16.mxu0 0
    %439 = vmatpush1.bf16.msra.mxu0 0
    %440 = vmatprep.subr.bf16.mxu0 0
    %441 = vmatpush1.bf16.msra.mxu0 0
    %442 = vmatprep.subr.bf16.mxu0 0
    %443 = vmatpush1.bf16.msra.mxu0 0
    %444 = vmatprep.subr.bf16.mxu0 0
    %445 = vmatpush1.bf16.msra.mxu0 0
    %446 = vmatprep.subr.bf16.mxu0 0
    %447 = vmatpush1.bf16.msra.mxu0 0
    %448 = vmatprep.subr.bf16.mxu0 0
    %449 = vmatpush1.bf16.msra.mxu0 0
    %450 = vmatprep.subr.bf16.mxu0 0
    %451 = vmatpush1.bf16.msra.mxu0 0
    %452 = vmatprep.subr.bf16.mxu0 0
    %453 = vmatpush1.bf16.msra.mxu0 0
    %454 = vmatprep.subr.bf16.mxu0 0
    %455 = vmatpush1.bf16.msra.mxu0 0
    %456 = vmatprep.subr.bf16.mxu0 0
    %457 = vmatpush1.bf16.msra.mxu0 0
    %458 = vmatprep.subr.bf16.mxu0 0
    %459 = vmatpush1.bf16.msra.mxu0 0
    %460 = vmatprep.mubr.bf16.mxu0 0
    %461 = vmatmul.mubr.bf16.gmra.mrb[0].mxu0 %v325
    %v462 = vpop.f32.mrb[0].mxu0
    %v463 = vadd.f32 %v321, %v462
    %v464 = vpop.f32.mrb[0].mxu0
    %v465 = vadd.f32 %v321, %v464
    %v466 = vpop.f32.mrb[0].mxu0
    %v467 = vpop.f32.mrb[0].mxu0
    %468 = vdwg.mxu0
    %469 = vst [vmem:[%s10] sm:$0xff] %v381
    %470 = vst [vmem:[%s10 + $0x8] sm:$0xff] %v383
    %471 = vst [vmem:[%s10 + $0x10] sm:$0xff] %v422
    %472 = vst [vmem:[%s10 + $0x18] sm:$0xff] %v424
    %473 = vst [vmem:[%s10 + $0x20] sm:$0xff] %v463
    %474 = vst [vmem:[%s10 + $0x28] sm:$0xff] %v465
    %v475 = vmax.f32 %v381, 0.0
    %v476 = vmax.f32 %v383, 0.0
    %v477 = vmax.f32 %v422, 0.0
    %v478 = vmax.f32 %v424, 0.0
    %v479 = vmax.f32 %v463, 0.0
    %v480 = vmax.f32 %v465, 0.0
    %v481 = vld [vmem:[%s5] sm:$0xf]
    %v482 = vld [vmem:[%s5 + $0x4] sm:$0xf]
    %v483 = vld [vmem:[%s5 + $0x8] sm:$0xf]
    %v484 = vld [vmem:[%s5 + $0xc] sm:$0xf]
    %v485 = vld [vmem:[%s5 + $0x10] sm:$0xf]
    %v486 = vld [vmem:[%s5 + $0x14] sm:$0xf]
    %v487 = vld [vmem:[%s5 + $0x18] sm:$0xf]
    %v488 = vld [vmem:[%s5 + $0x1c] sm:$0xf]
    %v489 = vld [vmem:[%s5 + $0x20] sm:$0xf]
    %v490 = vld [vmem:[%s5 + $0x24] sm:$0xf]
    %v491 = vld [vmem:[%s5 + $0x28] sm:$0xf]
    %v492 = vld [vmem:[%s5 + $0x2c] sm:$0xf]
    %v493 = vld [vmem:[%s5 + $0x30] sm:$0xf]
    %v494 = vld [vmem:[%s5 + $0x34] sm:$0xf]
    %v495 = vld [vmem:[%s5 + $0x38] sm:$0xf]
    %v496 = vld [vmem:[%s5 + $0x3c] sm:$0xf]
    %v497 = vld [vmem:[%s5 + $0x40] sm:$0xf]
    %v498 = vld [vmem:[%s5 + $0x44] sm:$0xf]
    %v499 = vld [vmem:[%s5 + $0x48] sm:$0xf]
    %v500 = vld [vmem:[%s5 + $0x4c] sm:$0xf]
    %v501 = vld [vmem:[%s5 + $0x50] sm:$0xf]
    %v502 = vld [vmem:[%s5 + $0x54] sm:$0xf]
    %v503 = vld [vmem:[%s5 + $0x58] sm:$0xf]
    %v504 = vld [vmem:[%s5 + $0x5c] sm:$0xf]
    %v505 = vld [vmem:[%s5 + $0x60] sm:$0xf]
    %v506 = vld [vmem:[%s5 + $0x64] sm:$0xf]
    %v507 = vld [vmem:[%s5 + $0x68] sm:$0xf]
    %v508 = vld [vmem:[%s5 + $0x6c] sm:$0xf]
    %v509 = vld [vmem:[%s5 + $0x70] sm:$0xf]
    %v510 = vld [vmem:[%s5 + $0x74] sm:$0xf]
    %v511 = vld [vmem:[%s5 + $0x78] sm:$0xf]
    %v512 = vld [vmem:[%s5 + $0x7c] sm:$0xf]
    %v513 = vld [vmem:[%s5 + $0x80] sm:$0xf]
    %v514 = vld [vmem:[%s5 + $0x84] sm:$0xf]
    %518 = vrot.lane.b32.xlu0 %v475, 127
    %v519 = vpop.permute.xlu0 %518
    %520 = vrot.lane.b32.xlu0 %v476, 127
    %v521 = vpop.permute.xlu0 %520
    %522 = vrot.lane.b32.xlu0 %v477, 127
    %v523 = vpop.permute.xlu0 %522
    %v524 = vsel %vm84, %v519, %v521
    %v525 = vsel %vm84, %v521, %v523
    %v529 = vmax.f32 %v475, %v524
    %v530 = vmax.f32 %v476, %v525
    %v531 = vmax.f32 %v477, %v523
    %532 = vrot.lane.b32.xlu0 %v475, 110
    %v533 = vpop.permute.xlu0 %532
    %534 = vrot.lane.b32.xlu0 %v476, 110
    %v535 = vpop.permute.xlu0 %534
    %536 = vrot.lane.b32.xlu0 %v477, 110
    %v537 = vpop.permute.xlu0 %536
    %v538 = vsel %vm138, %v533, %v535
    %v539 = vsel %vm138, %v535, %v537
    %v543 = vmax.f32 %v529, %v538
    %v544 = vmax.f32 %v530, %v539
    %v545 = vmax.f32 %v531, %v537
    %546 = vrot.lane.b32.xlu0 %v475, 109
    %v547 = vpop.permute.xlu0 %546
    %548 = vrot.lane.b32.xlu0 %v476, 109
    %v549 = vpop.permute.xlu0 %548
    %550 = vrot.lane.b32.xlu0 %v477, 109
    %v551 = vpop.permute.xlu0 %550
    %v552 = vsel %vm165, %v547, %v549
    %v553 = vsel %vm165, %v549, %v551
    %v557 = vmax.f32 %v543, %v552
    %v558 = vmax.f32 %v544, %v553
    %v559 = vmax.f32 %v545, %v551
    %v560 = vpack.c.bf16 %v557, %v557
    %v561 = vpack.c.bf16 %v558, %v558
    %v562 = vpack.c.bf16 %v559, %v559
    %v597 = vunpack.c.l.b16 %v481
    %v598 = vunpack.c.l.b16 %v482
    %v599 = vunpack.c.l.b16 %v483
    %v600 = vunpack.c.l.b16 %v484
    %v601 = vunpack.c.l.b16 %v485
    %v602 = vunpack.c.l.b16 %v486
    %v603 = vunpack.c.l.b16 %v487
    %v604 = vunpack.c.l.b16 %v488
    %v605 = vunpack.c.l.b16 %v489
    %v606 = vunpack.c.l.b16 %v490
    %v607 = vunpack.c.l.b16 %v491
    %v608 = vunpack.c.l.b16 %v492
    %v609 = vunpack.c.l.b16 %v493
    %v610 = vunpack.c.l.b16 %v494
    %v611 = vunpack.c.l.b16 %v495
    %v612 = vunpack.c.l.b16 %v496
    %v613 = vunpack.c.l.b16 %v497
    %v614 = vunpack.c.l.b16 %v498
    %v615 = vunpack.c.l.b16 %v499
    %v616 = vunpack.c.l.b16 %v500
    %v617 = vunpack.c.l.b16 %v501
    %v618 = vunpack.c.l.b16 %v502
    %v619 = vunpack.c.l.b16 %v503
    %v620 = vunpack.c.l.b16 %v504
    %v621 = vunpack.c.l.b16 %v505
    %v622 = vunpack.c.l.b16 %v506
    %v623 = vunpack.c.l.b16 %v507
    %v624 = vunpack.c.l.b16 %v508
    %v625 = vunpack.c.l.b16 %v509
    %v626 = vunpack.c.l.b16 %v510
    %v627 = vunpack.c.l.b16 %v511
    %v628 = vunpack.c.l.b16 %v512
    %v629 = vunpack.c.l.b16 %v513
    %v630 = vunpack.c.l.b16 %v514
    %v631 = vpack.c.b16 %v598, %v597
    %v632 = vpack.c.b16 %v600, %v599
    %v633 = vpack.c.b16 %v602, %v601
    %v634 = vpack.c.b16 %v604, %v603
    %v635 = vpack.c.b16 %v606, %v605
    %v636 = vpack.c.b16 %v608, %v607
    %v637 = vpack.c.b16 %v610, %v609
    %v638 = vpack.c.b16 %v612, %v611
    %v639 = vpack.c.b16 %v614, %v613
    %v640 = vpack.c.b16 %v616, %v615
    %v641 = vpack.c.b16 %v618, %v617
    %v642 = vpack.c.b16 %v620, %v619
    %v643 = vpack.c.b16 %v622, %v621
    %v644 = vpack.c.b16 %v624, %v623
    %v645 = vpack.c.b16 %v626, %v625
    %v646 = vpack.c.b16 %v628, %v627
    %v647 = vpack.c.b16 %v630, %v629
    %vm665 = vcmask 130048
    %v667 = vsel %vm665, %v562, 0
    %669 = vmatprep.subr.bf16.mxu0 0
    %670 = vmatpush1.bf16.msra.mxu0 %v631
    %671 = vmatprep.subr.bf16.mxu0 0
    %672 = vmatpush1.bf16.msra.mxu0 %v632
    %673 = vmatprep.subr.bf16.mxu0 0
    %674 = vmatpush1.bf16.msra.mxu0 %v633
    %675 = vmatprep.subr.bf16.mxu0 0
    %676 = vmatpush1.bf16.msra.mxu0 %v634
    %677 = vmatprep.subr.bf16.mxu0 0
    %678 = vmatpush1.bf16.msra.mxu0 %v635
    %679 = vmatprep.subr.bf16.mxu0 0
    %680 = vmatpush1.bf16.msra.mxu0 %v636
    %681 = vmatprep.subr.bf16.mxu0 0
    %682 = vmatpush1.bf16.msra.mxu0 %v637
    %683 = vmatprep.subr.bf16.mxu0 0
    %684 = vmatpush1.bf16.msra.mxu0 %v638
    %685 = vmatprep.subr.bf16.mxu0 0
    %686 = vmatpush1.bf16.msra.mxu0 %v639
    %687 = vmatprep.subr.bf16.mxu0 0
    %688 = vmatpush1.bf16.msra.mxu0 %v640
    %689 = vmatprep.subr.bf16.mxu0 0
    %690 = vmatpush1.bf16.msra.mxu0 %v641
    %691 = vmatprep.subr.bf16.mxu0 0
    %692 = vmatpush1.bf16.msra.mxu0 %v642
    %693 = vmatprep.subr.bf16.mxu0 0
    %694 = vmatpush1.bf16.msra.mxu0 %v643
    %695 = vmatprep.subr.bf16.mxu0 0
    %696 = vmatpush1.bf16.msra.mxu0 %v644
    %697 = vmatprep.subr.bf16.mxu0 0
    %698 = vmatpush1.bf16.msra.mxu0 %v645
    %699 = vmatprep.subr.bf16.mxu0 0
    %700 = vmatpush1.bf16.msra.mxu0 %v646
    %701 = vmatprep.mubr.bf16.mxu0 %v561
    %702 = vmatmul.mubr.bf16.gmra.mrb[0].mxu0 %v560
    %v703 = vpop.f32.mrb[0].mxu0
    %v704 = vadd.f32 0.0, %v703
    %v705 = vpop.f32.mrb[0].mxu0
    %v706 = vpop.f32.mrb[0].mxu0
    %v707 = vpop.f32.mrb[0].mxu0
    %708 = vdwg.mxu0
    %709 = vmatprep.subr.bf16.mxu0 0
    %710 = vmatpush1.bf16.msra.mxu0 %v647
    %711 = vmatprep.subr.bf16.mxu0 0
    %712 = vmatpush1.bf16.msra.mxu0 0
    %713 = vmatprep.subr.bf16.mxu0 0
    %714 = vmatpush1.bf16.msra.mxu0 0
    %715 = vmatprep.subr.bf16.mxu0 0
    %716 = vmatpush1.bf16.msra.mxu0 0
    %717 = vmatprep.subr.bf16.mxu0 0
    %718 = vmatpush1.bf16.msra.mxu0 0
    %719 = vmatprep.subr.bf16.mxu0 0
    %720 = vmatpush1.bf16.msra.mxu0 0
    %721 = vmatprep.subr.bf16.mxu0 0
    %722 = vmatpush1.bf16.msra.mxu0 0
    %723 = vmatprep.subr.bf16.mxu0 0
    %724 = vmatpush1.bf16.msra.mxu0 0
    %725 = vmatprep.subr.bf16.mxu0 0
    %726 = vmatpush1.bf16.msra.mxu0 0
    %727 = vmatprep.subr.bf16.mxu0 0
    %728 = vmatpush1.bf16.msra.mxu0 0
    %729 = vmatprep.subr.bf16.mxu0 0
    %730 = vmatpush1.bf16.msra.mxu0 0
    %731 = vmatprep.subr.bf16.mxu0 0
    %732 = vmatpush1.bf16.msra.mxu0 0
    %733 = vmatprep.subr.bf16.mxu0 0
    %734 = vmatpush1.bf16.msra.mxu0 0
    %735 = vmatprep.subr.bf16.mxu0 0
    %736 = vmatpush1.bf16.msra.mxu0 0
    %737 = vmatprep.subr.bf16.mxu0 0
    %738 = vmatpush1.bf16.msra.mxu0 0
    %739 = vmatprep.subr.bf16.mxu0 0
    %740 = vmatpush1.bf16.msra.mxu0 0
    %741 = vmatprep.mubr.bf16.mxu0 0
    %742 = vmatmul.mubr.bf16.gmra.mrb[0].mxu0 %v667
    %v743 = vpop.f32.mrb[0].mxu0
    %v744 = vadd.f32 %v704, %v743
    %v745 = vpop.f32.mrb[0].mxu0
    %v746 = vpop.f32.mrb[0].mxu0
    %v747 = vpop.f32.mrb[0].mxu0
    %748 = vdwg.mxu0
    %752 = vrot.lane.b32.xlu0 %v478, 127
    %v753 = vpop.permute.xlu0 %752
    %754 = vrot.lane.b32.xlu0 %v479, 127
    %v755 = vpop.permute.xlu0 %754
    %756 = vrot.lane.b32.xlu0 %v480, 127
    %v757 = vpop.permute.xlu0 %756
    %v758 = vsel %vm84, %v753, %v755
    %v759 = vsel %vm84, %v755, %v757
    %v763 = vmax.f32 %v478, %v758
    %v764 = vmax.f32 %v479, %v759
    %v765 = vmax.f32 %v480, %v757
    %766 = vrot.lane.b32.xlu0 %v478, 110
    %v767 = vpop.permute.xlu0 %766
    %768 = vrot.lane.b32.xlu0 %v479, 110
    %v769 = vpop.permute.xlu0 %768
    %770 = vrot.lane.b32.xlu0 %v480, 110
    %v771 = vpop.permute.xlu0 %770
    %v772 = vsel %vm138, %v767, %v769
    %v773 = vsel %vm138, %v769, %v771
    %v777 = vmax.f32 %v763, %v772
    %v778 = vmax.f32 %v764, %v773
    %v779 = vmax.f32 %v765, %v771
    %780 = vrot.lane.b32.xlu0 %v478, 109
    %v781 = vpop.permute.xlu0 %780
    %782 = vrot.lane.b32.xlu0 %v479, 109
    %v783 = vpop.permute.xlu0 %782
    %784 = vrot.lane.b32.xlu0 %v480, 109
    %v785 = vpop.permute.xlu0 %784
    %v786 = vsel %vm165, %v781, %v783
    %v787 = vsel %vm165, %v783, %v785
    %v791 = vmax.f32 %v777, %v786
    %v792 = vmax.f32 %v778, %v787
    %v793 = vmax.f32 %v779, %v785
    %v794 = vpack.c.bf16 %v791, %v791
    %v795 = vpack.c.bf16 %v792, %v792
    %v796 = vpack.c.bf16 %v793, %v793
    %v798 = vsel %vm665, %v796, 0
    %800 = vmatprep.subr.bf16.mxu0 0
    %801 = vmatpush1.bf16.msra.mxu0 %v631
    %802 = vmatprep.subr.bf16.mxu0 0
    %803 = vmatpush1.bf16.msra.mxu0 %v632
    %804 = vmatprep.subr.bf16.mxu0 0
    %805 = vmatpush1.bf16.msra.mxu0 %v633
    %806 = vmatprep.subr.bf16.mxu0 0
    %807 = vmatpush1.bf16.msra.mxu0 %v634
    %808 = vmatprep.subr.bf16.mxu0 0
    %809 = vmatpush1.bf16.msra.mxu0 %v635
    %810 = vmatprep.subr.bf16.mxu0 0
    %811 = vmatpush1.bf16.msra.mxu0 %v636
    %812 = vmatprep.subr.bf16.mxu0 0
    %813 = vmatpush1.bf16.msra.mxu0 %v637
    %814 = vmatprep.subr.bf16.mxu0 0
    %815 = vmatpush1.bf16.msra.mxu0 %v638
    %816 = vmatprep.subr.bf16.mxu0 0
    %817 = vmatpush1.bf16.msra.mxu0 %v639
    %818 = vmatprep.subr.bf16.mxu0 0
    %819 = vmatpush1.bf16.msra.mxu0 %v640
    %820 = vmatprep.subr.bf16.mxu0 0
    %821 = vmatpush1.bf16.msra.mxu0 %v641
    %822 = vmatprep.subr.bf16.mxu0 0
    %823 = vmatpush1.bf16.msra.mxu0 %v642
    %824 = vmatprep.subr.bf16.mxu0 0
    %825 = vmatpush1.bf16.msra.mxu0 %v643
    %826 = vmatprep.subr.bf16.mxu0 0
    %827 = vmatpush1.bf16.msra.mxu0 %v644
    %828 = vmatprep.subr.bf16.mxu0 0
    %829 = vmatpush1.bf16.msra.mxu0 %v645
    %830 = vmatprep.subr.bf16.mxu0 0
    %831 = vmatpush1.bf16.msra.mxu0 %v646
    %832 = vmatprep.mubr.bf16.mxu0 %v795
    %833 = vmatmul.mubr.bf16.gmra.mrb[0].mxu0 %v794
    %v834 = vpop.f32.mrb[0].mxu0
    %v835 = vadd.f32 0.0, %v834
    %v836 = vpop.f32.mrb[0].mxu0
    %v837 = vpop.f32.mrb[0].mxu0
    %v838 = vpop.f32.mrb[0].mxu0
    %839 = vdwg.mxu0
    %840 = vmatprep.subr.bf16.mxu0 0
    %841 = vmatpush1.bf16.msra.mxu0 %v647
    %842 = vmatprep.subr.bf16.mxu0 0
    %843 = vmatpush1.bf16.msra.mxu0 0
    %844 = vmatprep.subr.bf16.mxu0 0
    %845 = vmatpush1.bf16.msra.mxu0 0
    %846 = vmatprep.subr.bf16.mxu0 0
    %847 = vmatpush1.bf16.msra.mxu0 0
    %848 = vmatprep.subr.bf16.mxu0 0
    %849 = vmatpush1.bf16.msra.mxu0 0
    %850 = vmatprep.subr.bf16.mxu0 0
    %851 = vmatpush1.bf16.msra.mxu0 0
    %852 = vmatprep.subr.bf16.mxu0 0
    %853 = vmatpush1.bf16.msra.mxu0 0
    %854 = vmatprep.subr.bf16.mxu0 0
    %855 = vmatpush1.bf16.msra.mxu0 0
    %856 = vmatprep.subr.bf16.mxu0 0
    %857 = vmatpush1.bf16.msra.mxu0 0
    %858 = vmatprep.subr.bf16.mxu0 0
    %859 = vmatpush1.bf16.msra.mxu0 0
    %860 = vmatprep.subr.bf16.mxu0 0
    %861 = vmatpush1.bf16.msra.mxu0 0
    %862 = vmatprep.subr.bf16.mxu0 0
    %863 = vmatpush1.bf16.msra.mxu0 0
    %864 = vmatprep.subr.bf16.mxu0 0
    %865 = vmatpush1.bf16.msra.mxu0 0
    %866 = vmatprep.subr.bf16.mxu0 0
    %867 = vmatpush1.bf16.msra.mxu0 0
    %868 = vmatprep.subr.bf16.mxu0 0
    %869 = vmatpush1.bf16.msra.mxu0 0
    %870 = vmatprep.subr.bf16.mxu0 0
    %871 = vmatpush1.bf16.msra.mxu0 0
    %872 = vmatprep.mubr.bf16.mxu0 0
    %873 = vmatmul.mubr.bf16.gmra.mrb[0].mxu0 %v798
    %v874 = vpop.f32.mrb[0].mxu0
    %v875 = vadd.f32 %v835, %v874
    %v876 = vpop.f32.mrb[0].mxu0
    %v877 = vpop.f32.mrb[0].mxu0
    %v878 = vpop.f32.mrb[0].mxu0
    %879 = vdwg.mxu0
    %883 = vrot.lane.b32.xlu0 %v744, 127
    %v884 = vpop.permute.xlu0 %883
    %885 = vrot.lane.b32.xlu0 %v875, 127
    %v886 = vpop.permute.xlu0 %885
    %887 = vrot.lane.b32.xlu0 0.0, 127
    %v888 = vpop.permute.xlu0 %887
    %v889 = vsel %vm84, %v884, %v886
    %v890 = vsel %vm84, %v886, %v888
    %893 = vrot.lane.b32.xlu0 %v744, 126
    %v894 = vpop.permute.xlu0 %893
    %895 = vrot.lane.b32.xlu0 %v875, 126
    %v896 = vpop.permute.xlu0 %895
    %897 = vrot.lane.b32.xlu0 0.0, 126
    %v898 = vpop.permute.xlu0 %897
    %v899 = vsel %vm111, %v894, %v896
    %v900 = vsel %vm111, %v896, %v898
    %903 = vrot.lane.b32.xlu0 %v744, 118
    %v904 = vpop.permute.xlu0 %903
    %905 = vrot.lane.b32.xlu0 %v875, 118
    %v906 = vpop.permute.xlu0 %905
    %907 = vrot.lane.b32.xlu0 0.0, 118
    %v908 = vpop.permute.xlu0 %907
    %vm909 = vcmask 965632
    %v910 = vsel %vm909, %v904, %v906
    %v911 = vsel %vm909, %v906, %v908
    %914 = vrot.lane.b32.xlu0 %v744, 117
    %v915 = vpop.permute.xlu0 %914
    %916 = vrot.lane.b32.xlu0 %v875, 117
    %v917 = vpop.permute.xlu0 %916
    %918 = vrot.lane.b32.xlu0 0.0, 117
    %v919 = vpop.permute.xlu0 %918
    %vm920 = vcmask 957440
    %v921 = vsel %vm920, %v915, %v917
    %v922 = vsel %vm920, %v917, %v919
    %925 = vrot.lane.b32.xlu0 %v744, 116
    %v926 = vpop.permute.xlu0 %925
    %927 = vrot.lane.b32.xlu0 %v875, 116
    %v928 = vpop.permute.xlu0 %927
    %929 = vrot.lane.b32.xlu0 0.0, 116
    %v930 = vpop.permute.xlu0 %929
    %vm931 = vcmask 949248
    %v932 = vsel %vm931, %v926, %v928
    %v933 = vsel %vm931, %v928, %v930
    %936 = vrot.lane.b32.xlu0 %v744, 108
    %v937 = vpop.permute.xlu0 %936
    %938 = vrot.lane.b32.xlu0 %v875, 108
    %v939 = vpop.permute.xlu0 %938
    %940 = vrot.lane.b32.xlu0 0.0, 108
    %v941 = vpop.permute.xlu0 %940
    %v942 = vsel %vm192, %v937, %v939
    %v943 = vsel %vm192, %v939, %v941
    %946 = vrot.lane.b32.xlu0 %v744, 107
    %v947 = vpop.permute.xlu0 %946
    %948 = vrot.lane.b32.xlu0 %v875, 107
    %v949 = vpop.permute.xlu0 %948
    %950 = vrot.lane.b32.xlu0 0.0, 107
    %v951 = vpop.permute.xlu0 %950
    %vm952 = vcmask 875520
    %v953 = vsel %vm952, %v947, %v949
    %v954 = vsel %vm952, %v949, %v951
    %957 = vrot.lane.b32.xlu0 %v744, 106
    %v958 = vpop.permute.xlu0 %957
    %959 = vrot.lane.b32.xlu0 %v875, 106
    %v960 = vpop.permute.xlu0 %959
    %961 = vrot.lane.b32.xlu0 0.0, 106
    %v962 = vpop.permute.xlu0 %961
    %vm963 = vcmask 867328
    %v964 = vsel %vm963, %v958, %v960
    %v965 = vsel %vm963, %v960, %v962
    %v968 = vld [vmem:[%s3] sm:$0xf]
    %v969 = vld [vmem:[%s3 + $0x4] sm:$0xf]
    %v970 = vpack.c.bf16 %v889, %v744
    %v971 = vpack.c.bf16 %v890, %v875
    %v972 = vpack.c.bf16 %v910, %v899
    %v973 = vpack.c.bf16 %v911, %v900
    %v974 = vpack.c.bf16 %v932, %v921
    %v975 = vpack.c.bf16 %v933, %v922
    %v976 = vpack.c.bf16 %v953, %v942
    %v977 = vpack.c.bf16 %v954, %v943
    %v978 = vpack.c.bf16 %v964, %v964
    %v979 = vpack.c.bf16 %v965, %v965
    %v980 = vld [vmem:[%s4] sm:$0xff]
    %v981 = vld [vmem:[%s4 + $0x8] sm:$0xff]
    %983 = vset.pattern.permute.xlu0 0
    %984 = vperm.xlu0 %983, %v980
    %v985 = vpop.permute.xlu0 %984
    %988 = vset.pattern.permute.xlu0 0
    %989 = vperm.xlu0 %988, %v981
    %v990 = vpop.permute.xlu0 %989
    %v994 = vunpack.c.l.b16 %v968
    %v995 = vunpack.c.l.b16 %v969
    %v996 = vpack.c.b16 %v995, %v994
    %v998 = vsel %vm323, %v996, 0
    %v1001 = vsel %vm327, %v978, 0
    %v1004 = vsel %vm327, %v979, 0
    %1006 = vmatprep.subr.bf16.mxu0 %v971
    %1007 = vmatpush1.bf16.msra.mxu0 %v970
    %1008 = vmatprep.subr.bf16.mxu0 %v973
    %1009 = vmatpush1.bf16.msra.mxu0 %v972
    %1010 = vmatprep.subr.bf16.mxu0 %v975
    %1011 = vmatpush1.bf16.msra.mxu0 %v974
    %1012 = vmatprep.subr.bf16.mxu0 %v977
    %1013 = vmatpush1.bf16.msra.mxu0 %v976
    %1014 = vmatprep.subr.bf16.mxu0 %v1004
    %1015 = vmatpush1.bf16.msra.mxu0 %v1001
    %1016 = vmatprep.subr.bf16.mxu0 0
    %1017 = vmatpush1.bf16.msra.mxu0 0
    %1018 = vmatprep.subr.bf16.mxu0 0
    %1019 = vmatpush1.bf16.msra.mxu0 0
    %1020 = vmatprep.subr.bf16.mxu0 0
    %1021 = vmatpush1.bf16.msra.mxu0 0
    %1022 = vmatprep.subr.bf16.mxu0 0
    %1023 = vmatpush1.bf16.msra.mxu0 0
    %1024 = vmatprep.subr.bf16.mxu0 0
    %1025 = vmatpush1.bf16.msra.mxu0 0
    %1026 = vmatprep.subr.bf16.mxu0 0
    %1027 = vmatpush1.bf16.msra.mxu0 0
    %1028 = vmatprep.subr.bf16.mxu0 0
    %1029 = vmatpush1.bf16.msra.mxu0 0
    %1030 = vmatprep.subr.bf16.mxu0 0
    %1031 = vmatpush1.bf16.msra.mxu0 0
    %1032 = vmatprep.subr.bf16.mxu0 0
    %1033 = vmatpush1.bf16.msra.mxu0 0
    %1034 = vmatprep.subr.bf16.mxu0 0
    %1035 = vmatpush1.bf16.msra.mxu0 0
    %1036 = vmatprep.subr.bf16.mxu0 0
    %1037 = vmatpush1.bf16.msra.mxu0 0
    %1038 = vmatprep.mubr.bf16.mxu0 0
    %1039 = vmatmul.mubr.bf16.gmra.mrb[0].mxu0 %v998
    %v1040 = vpop.f32.mrb[0].mxu0
    %v1041 = vadd.f32 %v985, %v1040
    %v1042 = vpop.f32.mrb[0].mxu0
    %v1043 = vadd.f32 %v985, %v1042
    %v1044 = vpop.f32.mrb[0].mxu0
    %v1045 = vadd.f32 %v990, %v1044
    %v1046 = vpop.f32.mrb[0].mxu0
    %v1047 = vadd.f32 %v990, %v1046
    %1048 = vdwg.mxu0
    %v1049 = vmax.f32 %v1041, 0.0
    %v1050 = vmax.f32 %v1043, 0.0
    %v1051 = vmax.f32 %v1045, 0.0
    %v1052 = vmax.f32 %v1047, 0.0
    %1053 = vst [vmem:[%s11] sm:$0xff] %v1049
    %1054 = vst [vmem:[%s11 + $0x8] sm:$0xff] %v1050
    %1055 = vst [vmem:[%s11 + $0x10] sm:$0xff] %v1051
    %1056 = vst [vmem:[%s11 + $0x18] sm:$0xff] %v1052
    %v1058 = vrot.slane %v1049, 1
    %v1060 = vrot.slane %v1049, 2
    %v1062 = vrot.slane %v1049, 3
    %v1064 = vrot.slane %v1049, 4
    %v1066 = vrot.slane %v1049, 5
    %v1068 = vrot.slane %v1049, 6
    %v1070 = vrot.slane %v1049, 7
    %v1073 = vrot.slane %v1051, 1
    %v1075 = vrot.slane %v1051, 2
    %v1077 = vrot.slane %v1051, 3
    %v1079 = vrot.slane %v1051, 4
    %v1081 = vrot.slane %v1051, 5
    %v1083 = vrot.slane %v1051, 6
    %v1085 = vrot.slane %v1051, 7
    %v1087 = vpack.c.bf16 %v1049, %v1049
    %v1088 = vpack.c.bf16 %v1058, %v1058
    %v1089 = vpack.c.bf16 %v1060, %v1060
    %v1090 = vpack.c.bf16 %v1062, %v1062
    %v1091 = vpack.c.bf16 %v1064, %v1064
    %v1092 = vpack.c.bf16 %v1066, %v1066
    %v1093 = vpack.c.bf16 %v1068, %v1068
    %v1094 = vpack.c.bf16 %v1070, %v1070
    %v1095 = vpack.c.bf16 %v1051, %v1051
    %v1096 = vpack.c.bf16 %v1073, %v1073
    %v1097 = vpack.c.bf16 %v1075, %v1075
    %v1098 = vpack.c.bf16 %v1077, %v1077
    %v1099 = vpack.c.bf16 %v1079, %v1079
    %v1100 = vpack.c.bf16 %v1081, %v1081
    %v1101 = vpack.c.bf16 %v1083, %v1083
    %v1102 = vpack.c.bf16 %v1085, %v1085
    %v1103 = vld [vmem:[#allocation2] sm:$0xf]
    %v1104 = vld [vmem:[#allocation2 + $0x4] sm:$0xf]
    %v1105 = vld [vmem:[#allocation2 + $0x8] sm:$0xf]
    %v1106 = vld [vmem:[#allocation2 + $0xc] sm:$0xf]
    %v1107 = vld [vmem:[#allocation2 + $0x10] sm:$0xf]
    %v1108 = vld [vmem:[#allocation2 + $0x14] sm:$0xf]
    %v1109 = vld [vmem:[#allocation2 + $0x18] sm:$0xf]
    %v1110 = vld [vmem:[#allocation2 + $0x1c] sm:$0xf]
    %v1111 = vld [vmem:[#allocation2 + $0x20] sm:$0xf]
    %v1112 = vld [vmem:[#allocation2 + $0x24] sm:$0xf]
    %v1113 = vld [vmem:[#allocation2 + $0x28] sm:$0xf]
    %v1114 = vld [vmem:[#allocation2 + $0x2c] sm:$0xf]
    %v1115 = vld [vmem:[#allocation2 + $0x30] sm:$0xf]
    %v1116 = vld [vmem:[#allocation2 + $0x34] sm:$0xf]
    %v1117 = vld [vmem:[#allocation2 + $0x38] sm:$0xf]
    %v1118 = vld [vmem:[#allocation2 + $0x3c] sm:$0xf]
    %v1119 = vld [vmem:[#allocation2 + $0x40] sm:$0xf]
    %v1120 = vld [vmem:[#allocation2 + $0x44] sm:$0xf]
    %v1121 = vld [vmem:[#allocation2 + $0x48] sm:$0xf]
    %v1122 = vld [vmem:[#allocation2 + $0x4c] sm:$0xf]
    %v1123 = vld [vmem:[#allocation2 + $0x50] sm:$0xf]
    %v1124 = vld [vmem:[#allocation2 + $0x54] sm:$0xf]
    %v1125 = vld [vmem:[#allocation2 + $0x58] sm:$0xf]
    %v1126 = vld [vmem:[#allocation2 + $0x5c] sm:$0xf]
    %v1127 = vld [vmem:[#allocation2 + $0x60] sm:$0xf]
    %v1128 = vld [vmem:[#allocation2 + $0x64] sm:$0xf]
    %v1129 = vld [vmem:[#allocation2 + $0x68] sm:$0xf]
    %v1130 = vld [vmem:[#allocation2 + $0x6c] sm:$0xf]
    %v1131 = vld [vmem:[#allocation2 + $0x70] sm:$0xf]
    %v1132 = vld [vmem:[#allocation2 + $0x74] sm:$0xf]
    %v1133 = vld [vmem:[#allocation2 + $0x78] sm:$0xf]
    %v1134 = vld [vmem:[#allocation2 + $0x7c] sm:$0xf]
    %v1135 = vld [vmem:[#allocation2 + $0x80] sm:$0xf]
    %v1136 = vld [vmem:[#allocation2 + $0x84] sm:$0xf]
    %v1137 = vld [vmem:[#allocation2 + $0x88] sm:$0xf]
    %v1138 = vld [vmem:[#allocation2 + $0x8c] sm:$0xf]
    %v1139 = vld [vmem:[#allocation2 + $0x90] sm:$0xf]
    %v1140 = vld [vmem:[#allocation2 + $0x94] sm:$0xf]
    %v1141 = vld [vmem:[#allocation2 + $0x98] sm:$0xf]
    %v1142 = vld [vmem:[#allocation2 + $0x9c] sm:$0xf]
    %v1143 = vld [vmem:[#allocation2 + $0xa0] sm:$0xf]
    %v1144 = vld [vmem:[#allocation2 + $0xa4] sm:$0xf]
    %v1145 = vld [vmem:[#allocation2 + $0xa8] sm:$0xf]
    %v1146 = vld [vmem:[#allocation2 + $0xac] sm:$0xf]
    %v1147 = vld [vmem:[#allocation2 + $0xb0] sm:$0xf]
    %v1148 = vld [vmem:[#allocation2 + $0xb4] sm:$0xf]
    %v1149 = vld [vmem:[#allocation2 + $0xb8] sm:$0xf]
    %v1150 = vld [vmem:[#allocation2 + $0xbc] sm:$0xf]
    %v1151 = vld [vmem:[#allocation2 + $0xc0] sm:$0xf]
    %v1152 = vld [vmem:[#allocation2 + $0xc4] sm:$0xf]
    %v1153 = vld [vmem:[#allocation2 + $0xc8] sm:$0xf]
    %v1154 = vld [vmem:[#allocation2 + $0xcc] sm:$0xf]
    %v1155 = vld [vmem:[#allocation2 + $0xd0] sm:$0xf]
    %v1156 = vld [vmem:[#allocation2 + $0xd4] sm:$0xf]
    %v1157 = vld [vmem:[#allocation2 + $0xd8] sm:$0xf]
    %v1158 = vld [vmem:[#allocation2 + $0xdc] sm:$0xf]
    %v1159 = vld [vmem:[#allocation2 + $0xe0] sm:$0xf]
    %v1160 = vld [vmem:[#allocation2 + $0xe4] sm:$0xf]
    %v1161 = vld [vmem:[#allocation2 + $0xe8] sm:$0xf]
    %v1162 = vld [vmem:[#allocation2 + $0xec] sm:$0xf]
    %v1163 = vld [vmem:[#allocation2 + $0xf0] sm:$0xf]
    %v1164 = vld [vmem:[#allocation2 + $0xf4] sm:$0xf]
    %v1165 = vld [vmem:[#allocation2 + $0xf8] sm:$0xf]
    %v1166 = vld [vmem:[#allocation2 + $0xfc] sm:$0xf]
    %v1167 = vld [vmem:[#allocation2 + $0x100] sm:$0xf]
    %v1168 = vld [vmem:[#allocation2 + $0x104] sm:$0xf]
    %v1169 = vld [vmem:[#allocation2 + $0x108] sm:$0xf]
    %v1170 = vld [vmem:[#allocation2 + $0x10c] sm:$0xf]
    %v1171 = vld [vmem:[#allocation2 + $0x110] sm:$0xf]
    %v1172 = vld [vmem:[#allocation2 + $0x114] sm:$0xf]
    %v1173 = vld [vmem:[#allocation2 + $0x118] sm:$0xf]
    %v1174 = vld [vmem:[#allocation2 + $0x11c] sm:$0xf]
    %v1175 = vld [vmem:[#allocation2 + $0x120] sm:$0xf]
    %v1176 = vld [vmem:[#allocation2 + $0x124] sm:$0xf]
    %v1177 = vld [vmem:[#allocation2 + $0x128] sm:$0xf]
    %v1178 = vld [vmem:[#allocation2 + $0x12c] sm:$0xf]
    %v1179 = vld [vmem:[#allocation2 + $0x130] sm:$0xf]
    %v1180 = vld [vmem:[#allocation2 + $0x134] sm:$0xf]
    %v1181 = vld [vmem:[#allocation2 + $0x138] sm:$0xf]
    %v1182 = vld [vmem:[#allocation2 + $0x13c] sm:$0xf]
    %v1183 = vld [vmem:[#allocation2 + $0x140] sm:$0xf]
    %v1184 = vld [vmem:[#allocation2 + $0x144] sm:$0xf]
    %v1185 = vld [vmem:[#allocation2 + $0x148] sm:$0xf]
    %v1186 = vld [vmem:[#allocation2 + $0x14c] sm:$0xf]
    %v1187 = vld [vmem:[#allocation2 + $0x150] sm:$0xf]
    %v1188 = vld [vmem:[#allocation2 + $0x154] sm:$0xf]
    %v1189 = vld [vmem:[#allocation2 + $0x158] sm:$0xf]
    %v1190 = vld [vmem:[#allocation2 + $0x15c] sm:$0xf]
    %v1191 = vld [vmem:[#allocation2 + $0x160] sm:$0xf]
    %v1192 = vld [vmem:[#allocation2 + $0x164] sm:$0xf]
    %v1193 = vld [vmem:[#allocation2 + $0x168] sm:$0xf]
    %v1194 = vld [vmem:[#allocation2 + $0x16c] sm:$0xf]
    %v1195 = vld [vmem:[#allocation2 + $0x170] sm:$0xf]
    %v1196 = vld [vmem:[#allocation2 + $0x174] sm:$0xf]
    %v1197 = vld [vmem:[#allocation2 + $0x178] sm:$0xf]
    %v1198 = vld [vmem:[#allocation2 + $0x17c] sm:$0xf]
    %v1199 = vld [vmem:[#allocation2 + $0x180] sm:$0xf]
    %v1200 = vld [vmem:[#allocation2 + $0x184] sm:$0xf]
    %v1201 = vld [vmem:[#allocation2 + $0x188] sm:$0xf]
    %v1202 = vld [vmem:[#allocation2 + $0x18c] sm:$0xf]
    %v1203 = vld [vmem:[#allocation2 + $0x190] sm:$0xf]
    %v1204 = vld [vmem:[#allocation2 + $0x194] sm:$0xf]
    %v1205 = vld [vmem:[#allocation2 + $0x198] sm:$0xf]
    %v1206 = vld [vmem:[#allocation2 + $0x19c] sm:$0xf]
    %v1207 = vld [vmem:[#allocation2 + $0x1a0] sm:$0xf]
    %v1208 = vld [vmem:[#allocation2 + $0x1a4] sm:$0xf]
    %v1209 = vld [vmem:[#allocation2 + $0x1a8] sm:$0xf]
    %v1210 = vld [vmem:[#allocation2 + $0x1ac] sm:$0xf]
    %v1211 = vld [vmem:[#allocation2 + $0x1b0] sm:$0xf]
    %v1212 = vld [vmem:[#allocation2 + $0x1b4] sm:$0xf]
    %v1213 = vld [vmem:[#allocation2 + $0x1b8] sm:$0xf]
    %v1214 = vld [vmem:[#allocation2 + $0x1bc] sm:$0xf]
    %v1215 = vld [vmem:[#allocation2 + $0x1c0] sm:$0xf]
    %v1216 = vld [vmem:[#allocation2 + $0x1c4] sm:$0xf]
    %v1217 = vld [vmem:[#allocation2 + $0x1c8] sm:$0xf]
    %v1218 = vld [vmem:[#allocation2 + $0x1cc] sm:$0xf]
    %v1219 = vld [vmem:[#allocation2 + $0x1d0] sm:$0xf]
    %v1220 = vld [vmem:[#allocation2 + $0x1d4] sm:$0xf]
    %v1221 = vld [vmem:[#allocation2 + $0x1d8] sm:$0xf]
    %v1222 = vld [vmem:[#allocation2 + $0x1dc] sm:$0xf]
    %v1223 = vld [vmem:[#allocation2 + $0x1e0] sm:$0xf]
    %v1224 = vld [vmem:[#allocation2 + $0x1e4] sm:$0xf]
    %v1225 = vld [vmem:[#allocation2 + $0x1e8] sm:$0xf]
    %v1226 = vld [vmem:[#allocation2 + $0x1ec] sm:$0xf]
    %v1227 = vld [vmem:[#allocation2 + $0x1f0] sm:$0xf]
    %v1228 = vld [vmem:[#allocation2 + $0x1f4] sm:$0xf]
    %v1229 = vld [vmem:[#allocation2 + $0x1f8] sm:$0xf]
    %v1230 = vld [vmem:[#allocation2 + $0x1fc] sm:$0xf]
    %v1231 = vld [vmem:[#allocation2 + $0x200] sm:$0xf]
    %v1232 = vld [vmem:[#allocation2 + $0x204] sm:$0xf]
    %v1233 = vld [vmem:[#allocation2 + $0x208] sm:$0xf]
    %v1234 = vld [vmem:[#allocation2 + $0x20c] sm:$0xf]
    %v1235 = vld [vmem:[#allocation2 + $0x210] sm:$0xf]
    %v1236 = vld [vmem:[#allocation2 + $0x214] sm:$0xf]
    %v1237 = vld [vmem:[#allocation2 + $0x218] sm:$0xf]
    %v1238 = vld [vmem:[#allocation2 + $0x21c] sm:$0xf]
    %v1239 = vld [vmem:[#allocation2 + $0x220] sm:$0xf]
    %v1240 = vld [vmem:[#allocation2 + $0x224] sm:$0xf]
    %v1241 = vld [vmem:[#allocation2 + $0x228] sm:$0xf]
    %v1242 = vld [vmem:[#allocation2 + $0x22c] sm:$0xf]
    %v1243 = vld [vmem:[#allocation2 + $0x230] sm:$0xf]
    %v1244 = vld [vmem:[#allocation2 + $0x234] sm:$0xf]
    %v1245 = vld [vmem:[#allocation2 + $0x238] sm:$0xf]
    %v1246 = vld [vmem:[#allocation2 + $0x23c] sm:$0xf]
    %v1247 = vld [vmem:[#allocation2 + $0x240] sm:$0xf]
    %v1248 = vld [vmem:[#allocation2 + $0x244] sm:$0xf]
    %v1249 = vld [vmem:[#allocation2 + $0x248] sm:$0xf]
    %v1250 = vld [vmem:[#allocation2 + $0x24c] sm:$0xf]
    %v1251 = vld [vmem:[#allocation2 + $0x250] sm:$0xf]
    %v1252 = vld [vmem:[#allocation2 + $0x254] sm:$0xf]
    %v1253 = vld [vmem:[#allocation2 + $0x258] sm:$0xf]
    %v1254 = vld [vmem:[#allocation2 + $0x25c] sm:$0xf]
    %v1255 = vld [vmem:[#allocation2 + $0x260] sm:$0xf]
    %v1256 = vld [vmem:[#allocation2 + $0x264] sm:$0xf]
    %v1257 = vld [vmem:[#allocation2 + $0x268] sm:$0xf]
    %v1258 = vld [vmem:[#allocation2 + $0x26c] sm:$0xf]
    %v1259 = vld [vmem:[#allocation2 + $0x270] sm:$0xf]
    %v1260 = vld [vmem:[#allocation2 + $0x274] sm:$0xf]
    %v1261 = vld [vmem:[#allocation2 + $0x278] sm:$0xf]
    %v1262 = vld [vmem:[#allocation2 + $0x27c] sm:$0xf]
    %v1263 = vld [vmem:[#allocation2 + $0x280] sm:$0xf]
    %v1264 = vld [vmem:[#allocation2 + $0x284] sm:$0xf]
    %v1265 = vld [vmem:[#allocation2 + $0x288] sm:$0xf]
    %v1266 = vld [vmem:[#allocation2 + $0x28c] sm:$0xf]
    %v1267 = vld [vmem:[#allocation2 + $0x290] sm:$0xf]
    %v1268 = vld [vmem:[#allocation2 + $0x294] sm:$0xf]
    %v1269 = vld [vmem:[#allocation2 + $0x298] sm:$0xf]
    %v1270 = vld [vmem:[#allocation2 + $0x29c] sm:$0xf]
    %v1271 = vld [vmem:[#allocation2 + $0x2a0] sm:$0xf]
    %v1272 = vld [vmem:[#allocation2 + $0x2a4] sm:$0xf]
    %v1273 = vld [vmem:[#allocation2 + $0x2a8] sm:$0xf]
    %v1274 = vld [vmem:[#allocation2 + $0x2ac] sm:$0xf]
    %v1275 = vld [vmem:[#allocation2 + $0x2b0] sm:$0xf]
    %v1276 = vld [vmem:[#allocation2 + $0x2b4] sm:$0xf]
    %v1277 = vld [vmem:[#allocation2 + $0x2b8] sm:$0xf]
    %v1278 = vld [vmem:[#allocation2 + $0x2bc] sm:$0xf]
    %v1279 = vld [vmem:[#allocation2 + $0x2c0] sm:$0xf]
    %v1280 = vld [vmem:[#allocation2 + $0x2c4] sm:$0xf]
    %v1281 = vld [vmem:[#allocation2 + $0x2c8] sm:$0xf]
    %v1282 = vld [vmem:[#allocation2 + $0x2cc] sm:$0xf]
    %v1283 = vld [vmem:[#allocation2 + $0x2d0] sm:$0xf]
    %v1284 = vld [vmem:[#allocation2 + $0x2d4] sm:$0xf]
    %v1285 = vld [vmem:[#allocation2 + $0x2d8] sm:$0xf]
    %v1286 = vld [vmem:[#allocation2 + $0x2dc] sm:$0xf]
    %v1287 = vld [vmem:[#allocation2 + $0x2e0] sm:$0xf]
    %v1288 = vld [vmem:[#allocation2 + $0x2e4] sm:$0xf]
    %v1289 = vld [vmem:[#allocation2 + $0x2e8] sm:$0xf]
    %v1290 = vld [vmem:[#allocation2 + $0x2ec] sm:$0xf]
    %v1291 = vld [vmem:[#allocation2 + $0x2f0] sm:$0xf]
    %v1292 = vld [vmem:[#allocation2 + $0x2f4] sm:$0xf]
    %v1293 = vld [vmem:[#allocation2 + $0x2f8] sm:$0xf]
    %v1294 = vld [vmem:[#allocation2 + $0x2fc] sm:$0xf]
    %v1295 = vld [vmem:[#allocation2 + $0x300] sm:$0xf]
    %v1296 = vld [vmem:[#allocation2 + $0x304] sm:$0xf]
    %v1297 = vld [vmem:[#allocation2 + $0x308] sm:$0xf]
    %v1298 = vld [vmem:[#allocation2 + $0x30c] sm:$0xf]
    %v1299 = vld [vmem:[#allocation2 + $0x310] sm:$0xf]
    %v1300 = vld [vmem:[#allocation2 + $0x314] sm:$0xf]
    %v1301 = vld [vmem:[#allocation2 + $0x318] sm:$0xf]
    %v1302 = vld [vmem:[#allocation2 + $0x31c] sm:$0xf]
    %v1303 = vld [vmem:[#allocation2 + $0x320] sm:$0xf]
    %v1304 = vld [vmem:[#allocation2 + $0x324] sm:$0xf]
    %v1305 = vld [vmem:[#allocation2 + $0x328] sm:$0xf]
    %v1306 = vld [vmem:[#allocation2 + $0x32c] sm:$0xf]
    %v1307 = vld [vmem:[#allocation2 + $0x330] sm:$0xf]
    %v1308 = vld [vmem:[#allocation2 + $0x334] sm:$0xf]
    %v1309 = vld [vmem:[#allocation2 + $0x338] sm:$0xf]
    %v1310 = vld [vmem:[#allocation2 + $0x33c] sm:$0xf]
    %v1311 = vld [vmem:[#allocation2 + $0x340] sm:$0xf]
    %v1312 = vld [vmem:[#allocation2 + $0x344] sm:$0xf]
    %v1313 = vld [vmem:[#allocation2 + $0x348] sm:$0xf]
    %v1314 = vld [vmem:[#allocation2 + $0x34c] sm:$0xf]
    %v1315 = vld [vmem:[#allocation2 + $0x350] sm:$0xf]
    %v1316 = vld [vmem:[#allocation2 + $0x354] sm:$0xf]
    %v1317 = vld [vmem:[#allocation2 + $0x358] sm:$0xf]
    %v1318 = vld [vmem:[#allocation2 + $0x35c] sm:$0xf]
    %v1319 = vld [vmem:[#allocation2 + $0x360] sm:$0xf]
    %v1320 = vld [vmem:[#allocation2 + $0x364] sm:$0xf]
    %v1321 = vld [vmem:[#allocation2 + $0x368] sm:$0xf]
    %v1322 = vld [vmem:[#allocation2 + $0x36c] sm:$0xf]
    %v1323 = vld [vmem:[#allocation2 + $0x370] sm:$0xf]
    %v1324 = vld [vmem:[#allocation2 + $0x374] sm:$0xf]
    %v1325 = vld [vmem:[#allocation2 + $0x378] sm:$0xf]
    %v1326 = vld [vmem:[#allocation2 + $0x37c] sm:$0xf]
    %v1327 = vld [vmem:[#allocation2 + $0x380] sm:$0xf]
    %v1328 = vld [vmem:[#allocation2 + $0x384] sm:$0xf]
    %v1329 = vld [vmem:[#allocation2 + $0x388] sm:$0xf]
    %v1330 = vld [vmem:[#allocation2 + $0x38c] sm:$0xf]
    %v1331 = vld [vmem:[#allocation2 + $0x390] sm:$0xf]
    %v1332 = vld [vmem:[#allocation2 + $0x394] sm:$0xf]
    %v1333 = vld [vmem:[#allocation2 + $0x398] sm:$0xf]
    %v1334 = vld [vmem:[#allocation2 + $0x39c] sm:$0xf]
    %v1335 = vld [vmem:[#allocation2 + $0x3a0] sm:$0xf]
    %v1336 = vld [vmem:[#allocation2 + $0x3a4] sm:$0xf]
    %v1337 = vld [vmem:[#allocation2 + $0x3a8] sm:$0xf]
    %v1338 = vld [vmem:[#allocation2 + $0x3ac] sm:$0xf]
    %v1339 = vld [vmem:[#allocation2 + $0x3b0] sm:$0xf]
    %v1340 = vld [vmem:[#allocation2 + $0x3b4] sm:$0xf]
    %v1341 = vld [vmem:[#allocation2 + $0x3b8] sm:$0xf]
    %v1342 = vld [vmem:[#allocation2 + $0x3bc] sm:$0xf]
    %v1343 = vld [vmem:[#allocation2 + $0x3c0] sm:$0xf]
    %v1344 = vld [vmem:[#allocation2 + $0x3c4] sm:$0xf]
    %v1345 = vld [vmem:[#allocation2 + $0x3c8] sm:$0xf]
    %v1346 = vld [vmem:[#allocation2 + $0x3cc] sm:$0xf]
    %v1347 = vld [vmem:[#allocation2 + $0x3d0] sm:$0xf]
    %v1348 = vld [vmem:[#allocation2 + $0x3d4] sm:$0xf]
    %v1349 = vld [vmem:[#allocation2 + $0x3d8] sm:$0xf]
    %v1350 = vld [vmem:[#allocation2 + $0x3dc] sm:$0xf]
    %v1351 = vld [vmem:[#allocation2 + $0x3e0] sm:$0xf]
    %v1352 = vld [vmem:[#allocation2 + $0x3e4] sm:$0xf]
    %v1353 = vld [vmem:[#allocation2 + $0x3e8] sm:$0xf]
    %v1354 = vld [vmem:[#allocation2 + $0x3ec] sm:$0xf]
    %v1355 = vld [vmem:[#allocation2 + $0x3f0] sm:$0xf]
    %v1356 = vld [vmem:[#allocation2 + $0x3f4] sm:$0xf]
    %v1357 = vld [vmem:[#allocation2 + $0x3f8] sm:$0xf]
    %v1358 = vld [vmem:[#allocation2 + $0x3fc] sm:$0xf]
    %v1359 = vld [vmem:[%s7] sm:$0x1]
    %v1616 = vunpack.c.l.b16 %v1103
    %v1617 = vunpack.c.l.b16 %v1104
    %v1618 = vunpack.c.l.b16 %v1105
    %v1619 = vunpack.c.l.b16 %v1106
    %v1620 = vunpack.c.l.b16 %v1107
    %v1621 = vunpack.c.l.b16 %v1108
    %v1622 = vunpack.c.l.b16 %v1109
    %v1623 = vunpack.c.l.b16 %v1110
    %v1624 = vunpack.c.l.b16 %v1111
    %v1625 = vunpack.c.l.b16 %v1112
    %v1626 = vunpack.c.l.b16 %v1113
    %v1627 = vunpack.c.l.b16 %v1114
    %v1628 = vunpack.c.l.b16 %v1115
    %v1629 = vunpack.c.l.b16 %v1116
    %v1630 = vunpack.c.l.b16 %v1117
    %v1631 = vunpack.c.l.b16 %v1118
    %v1632 = vunpack.c.l.b16 %v1119
    %v1633 = vunpack.c.l.b16 %v1120
    %v1634 = vunpack.c.l.b16 %v1121
    %v1635 = vunpack.c.l.b16 %v1122
    %v1636 = vunpack.c.l.b16 %v1123
    %v1637 = vunpack.c.l.b16 %v1124
    %v1638 = vunpack.c.l.b16 %v1125
    %v1639 = vunpack.c.l.b16 %v1126
    %v1640 = vunpack.c.l.b16 %v1127
    %v1641 = vunpack.c.l.b16 %v1128
    %v1642 = vunpack.c.l.b16 %v1129
    %v1643 = vunpack.c.l.b16 %v1130
    %v1644 = vunpack.c.l.b16 %v1131
    %v1645 = vunpack.c.l.b16 %v1132
    %v1646 = vunpack.c.l.b16 %v1133
    %v1647 = vunpack.c.l.b16 %v1134
    %v1648 = vunpack.c.l.b16 %v1135
    %v1649 = vunpack.c.l.b16 %v1136
    %v1650 = vunpack.c.l.b16 %v1137
    %v1651 = vunpack.c.l.b16 %v1138
    %v1652 = vunpack.c.l.b16 %v1139
    %v1653 = vunpack.c.l.b16 %v1140
    %v1654 = vunpack.c.l.b16 %v1141
    %v1655 = vunpack.c.l.b16 %v1142
    %v1656 = vunpack.c.l.b16 %v1143
    %v1657 = vunpack.c.l.b16 %v1144
    %v1658 = vunpack.c.l.b16 %v1145
    %v1659 = vunpack.c.l.b16 %v1146
    %v1660 = vunpack.c.l.b16 %v1147
    %v1661 = vunpack.c.l.b16 %v1148
    %v1662 = vunpack.c.l.b16 %v1149
    %v1663 = vunpack.c.l.b16 %v1150
    %v1664 = vunpack.c.l.b16 %v1151
    %v1665 = vunpack.c.l.b16 %v1152
    %v1666 = vunpack.c.l.b16 %v1153
    %v1667 = vunpack.c.l.b16 %v1154
    %v1668 = vunpack.c.l.b16 %v1155
    %v1669 = vunpack.c.l.b16 %v1156
    %v1670 = vunpack.c.l.b16 %v1157
    %v1671 = vunpack.c.l.b16 %v1158
    %v1672 = vunpack.c.l.b16 %v1159
    %v1673 = vunpack.c.l.b16 %v1160
    %v1674 = vunpack.c.l.b16 %v1161
    %v1675 = vunpack.c.l.b16 %v1162
    %v1676 = vunpack.c.l.b16 %v1163
    %v1677 = vunpack.c.l.b16 %v1164
    %v1678 = vunpack.c.l.b16 %v1165
    %v1679 = vunpack.c.l.b16 %v1166
    %v1680 = vunpack.c.l.b16 %v1167
    %v1681 = vunpack.c.l.b16 %v1168
    %v1682 = vunpack.c.l.b16 %v1169
    %v1683 = vunpack.c.l.b16 %v1170
    %v1684 = vunpack.c.l.b16 %v1171
    %v1685 = vunpack.c.l.b16 %v1172
    %v1686 = vunpack.c.l.b16 %v1173
    %v1687 = vunpack.c.l.b16 %v1174
    %v1688 = vunpack.c.l.b16 %v1175
    %v1689 = vunpack.c.l.b16 %v1176
    %v1690 = vunpack.c.l.b16 %v1177
    %v1691 = vunpack.c.l.b16 %v1178
    %v1692 = vunpack.c.l.b16 %v1179
    %v1693 = vunpack.c.l.b16 %v1180
    %v1694 = vunpack.c.l.b16 %v1181
    %v1695 = vunpack.c.l.b16 %v1182
    %v1696 = vunpack.c.l.b16 %v1183
    %v1697 = vunpack.c.l.b16 %v1184
    %v1698 = vunpack.c.l.b16 %v1185
    %v1699 = vunpack.c.l.b16 %v1186
    %v1700 = vunpack.c.l.b16 %v1187
    %v1701 = vunpack.c.l.b16 %v1188
    %v1702 = vunpack.c.l.b16 %v1189
    %v1703 = vunpack.c.l.b16 %v1190
    %v1704 = vunpack.c.l.b16 %v1191
    %v1705 = vunpack.c.l.b16 %v1192
    %v1706 = vunpack.c.l.b16 %v1193
    %v1707 = vunpack.c.l.b16 %v1194
    %v1708 = vunpack.c.l.b16 %v1195
    %v1709 = vunpack.c.l.b16 %v1196
    %v1710 = vunpack.c.l.b16 %v1197
    %v1711 = vunpack.c.l.b16 %v1198
    %v1712 = vunpack.c.l.b16 %v1199
    %v1713 = vunpack.c.l.b16 %v1200
    %v1714 = vunpack.c.l.b16 %v1201
    %v1715 = vunpack.c.l.b16 %v1202
    %v1716 = vunpack.c.l.b16 %v1203
    %v1717 = vunpack.c.l.b16 %v1204
    %v1718 = vunpack.c.l.b16 %v1205
    %v1719 = vunpack.c.l.b16 %v1206
    %v1720 = vunpack.c.l.b16 %v1207
    %v1721 = vunpack.c.l.b16 %v1208
    %v1722 = vunpack.c.l.b16 %v1209
    %v1723 = vunpack.c.l.b16 %v1210
    %v1724 = vunpack.c.l.b16 %v1211
    %v1725 = vunpack.c.l.b16 %v1212
    %v1726 = vunpack.c.l.b16 %v1213
    %v1727 = vunpack.c.l.b16 %v1214
    %v1728 = vunpack.c.l.b16 %v1215
    %v1729 = vunpack.c.l.b16 %v1216
    %v1730 = vunpack.c.l.b16 %v1217
    %v1731 = vunpack.c.l.b16 %v1218
    %v1732 = vunpack.c.l.b16 %v1219
    %v1733 = vunpack.c.l.b16 %v1220
    %v1734 = vunpack.c.l.b16 %v1221
    %v1735 = vunpack.c.l.b16 %v1222
    %v1736 = vunpack.c.l.b16 %v1223
    %v1737 = vunpack.c.l.b16 %v1224
    %v1738 = vunpack.c.l.b16 %v1225
    %v1739 = vunpack.c.l.b16 %v1226
    %v1740 = vunpack.c.l.b16 %v1227
    %v1741 = vunpack.c.l.b16 %v1228
    %v1742 = vunpack.c.l.b16 %v1229
    %v1743 = vunpack.c.l.b16 %v1230
    %v1744 = vunpack.c.l.b16 %v1231
    %v1745 = vunpack.c.l.b16 %v1232
    %v1746 = vunpack.c.l.b16 %v1233
    %v1747 = vunpack.c.l.b16 %v1234
    %v1748 = vunpack.c.l.b16 %v1235
    %v1749 = vunpack.c.l.b16 %v1236
    %v1750 = vunpack.c.l.b16 %v1237
    %v1751 = vunpack.c.l.b16 %v1238
    %v1752 = vunpack.c.l.b16 %v1239
    %v1753 = vunpack.c.l.b16 %v1240
    %v1754 = vunpack.c.l.b16 %v1241
    %v1755 = vunpack.c.l.b16 %v1242
    %v1756 = vunpack.c.l.b16 %v1243
    %v1757 = vunpack.c.l.b16 %v1244
    %v1758 = vunpack.c.l.b16 %v1245
    %v1759 = vunpack.c.l.b16 %v1246
    %v1760 = vunpack.c.l.b16 %v1247
    %v1761 = vunpack.c.l.b16 %v1248
    %v1762 = vunpack.c.l.b16 %v1249
    %v1763 = vunpack.c.l.b16 %v1250
    %v1764 = vunpack.c.l.b16 %v1251
    %v1765 = vunpack.c.l.b16 %v1252
    %v1766 = vunpack.c.l.b16 %v1253
    %v1767 = vunpack.c.l.b16 %v1254
    %v1768 = vunpack.c.l.b16 %v1255
    %v1769 = vunpack.c.l.b16 %v1256
    %v1770 = vunpack.c.l.b16 %v1257
    %v1771 = vunpack.c.l.b16 %v1258
    %v1772 = vunpack.c.l.b16 %v1259
    %v1773 = vunpack.c.l.b16 %v1260
    %v1774 = vunpack.c.l.b16 %v1261
    %v1775 = vunpack.c.l.b16 %v1262
    %v1776 = vunpack.c.l.b16 %v1263
    %v1777 = vunpack.c.l.b16 %v1264
    %v1778 = vunpack.c.l.b16 %v1265
    %v1779 = vunpack.c.l.b16 %v1266
    %v1780 = vunpack.c.l.b16 %v1267
    %v1781 = vunpack.c.l.b16 %v1268
    %v1782 = vunpack.c.l.b16 %v1269
    %v1783 = vunpack.c.l.b16 %v1270
    %v1784 = vunpack.c.l.b16 %v1271
    %v1785 = vunpack.c.l.b16 %v1272
    %v1786 = vunpack.c.l.b16 %v1273
    %v1787 = vunpack.c.l.b16 %v1274
    %v1788 = vunpack.c.l.b16 %v1275
    %v1789 = vunpack.c.l.b16 %v1276
    %v1790 = vunpack.c.l.b16 %v1277
    %v1791 = vunpack.c.l.b16 %v1278
    %v1792 = vunpack.c.l.b16 %v1279
    %v1793 = vunpack.c.l.b16 %v1280
    %v1794 = vunpack.c.l.b16 %v1281
    %v1795 = vunpack.c.l.b16 %v1282
    %v1796 = vunpack.c.l.b16 %v1283
    %v1797 = vunpack.c.l.b16 %v1284
    %v1798 = vunpack.c.l.b16 %v1285
    %v1799 = vunpack.c.l.b16 %v1286
    %v1800 = vunpack.c.l.b16 %v1287
    %v1801 = vunpack.c.l.b16 %v1288
    %v1802 = vunpack.c.l.b16 %v1289
    %v1803 = vunpack.c.l.b16 %v1290
    %v1804 = vunpack.c.l.b16 %v1291
    %v1805 = vunpack.c.l.b16 %v1292
    %v1806 = vunpack.c.l.b16 %v1293
    %v1807 = vunpack.c.l.b16 %v1294
    %v1808 = vunpack.c.l.b16 %v1295
    %v1809 = vunpack.c.l.b16 %v1296
    %v1810 = vunpack.c.l.b16 %v1297
    %v1811 = vunpack.c.l.b16 %v1298
    %v1812 = vunpack.c.l.b16 %v1299
    %v1813 = vunpack.c.l.b16 %v1300
    %v1814 = vunpack.c.l.b16 %v1301
    %v1815 = vunpack.c.l.b16 %v1302
    %v1816 = vunpack.c.l.b16 %v1303
    %v1817 = vunpack.c.l.b16 %v1304
    %v1818 = vunpack.c.l.b16 %v1305
    %v1819 = vunpack.c.l.b16 %v1306
    %v1820 = vunpack.c.l.b16 %v1307
    %v1821 = vunpack.c.l.b16 %v1308
    %v1822 = vunpack.c.l.b16 %v1309
    %v1823 = vunpack.c.l.b16 %v1310
    %v1824 = vunpack.c.l.b16 %v1311
    %v1825 = vunpack.c.l.b16 %v1312
    %v1826 = vunpack.c.l.b16 %v1313
    %v1827 = vunpack.c.l.b16 %v1314
    %v1828 = vunpack.c.l.b16 %v1315
    %v1829 = vunpack.c.l.b16 %v1316
    %v1830 = vunpack.c.l.b16 %v1317
    %v1831 = vunpack.c.l.b16 %v1318
    %v1832 = vunpack.c.l.b16 %v1319
    %v1833 = vunpack.c.l.b16 %v1320
    %v1834 = vunpack.c.l.b16 %v1321
    %v1835 = vunpack.c.l.b16 %v1322
    %v1836 = vunpack.c.l.b16 %v1323
    %v1837 = vunpack.c.l.b16 %v1324
    %v1838 = vunpack.c.l.b16 %v1325
    %v1839 = vunpack.c.l.b16 %v1326
    %v1840 = vunpack.c.l.b16 %v1327
    %v1841 = vunpack.c.l.b16 %v1328
    %v1842 = vunpack.c.l.b16 %v1329
    %v1843 = vunpack.c.l.b16 %v1330
    %v1844 = vunpack.c.l.b16 %v1331
    %v1845 = vunpack.c.l.b16 %v1332
    %v1846 = vunpack.c.l.b16 %v1333
    %v1847 = vunpack.c.l.b16 %v1334
    %v1848 = vunpack.c.l.b16 %v1335
    %v1849 = vunpack.c.l.b16 %v1336
    %v1850 = vunpack.c.l.b16 %v1337
    %v1851 = vunpack.c.l.b16 %v1338
    %v1852 = vunpack.c.l.b16 %v1339
    %v1853 = vunpack.c.l.b16 %v1340
    %v1854 = vunpack.c.l.b16 %v1341
    %v1855 = vunpack.c.l.b16 %v1342
    %v1856 = vunpack.c.l.b16 %v1343
    %v1857 = vunpack.c.l.b16 %v1344
    %v1858 = vunpack.c.l.b16 %v1345
    %v1859 = vunpack.c.l.b16 %v1346
    %v1860 = vunpack.c.l.b16 %v1347
    %v1861 = vunpack.c.l.b16 %v1348
    %v1862 = vunpack.c.l.b16 %v1349
    %v1863 = vunpack.c.l.b16 %v1350
    %v1864 = vunpack.c.l.b16 %v1351
    %v1865 = vunpack.c.l.b16 %v1352
    %v1866 = vunpack.c.l.b16 %v1353
    %v1867 = vunpack.c.l.b16 %v1354
    %v1868 = vunpack.c.l.b16 %v1355
    %v1869 = vunpack.c.l.b16 %v1356
    %v1870 = vunpack.c.l.b16 %v1357
    %v1871 = vunpack.c.l.b16 %v1358
    %v1872 = vpack.c.b16 %v1617, %v1616
    %v1873 = vpack.c.b16 %v1619, %v1618
    %v1874 = vpack.c.b16 %v1621, %v1620
    %v1875 = vpack.c.b16 %v1623, %v1622
    %v1876 = vpack.c.b16 %v1625, %v1624
    %v1877 = vpack.c.b16 %v1627, %v1626
    %v1878 = vpack.c.b16 %v1629, %v1628
    %v1879 = vpack.c.b16 %v1631, %v1630
    %v1880 = vpack.c.b16 %v1633, %v1632
    %v1881 = vpack.c.b16 %v1635, %v1634
    %v1882 = vpack.c.b16 %v1637, %v1636
    %v1883 = vpack.c.b16 %v1639, %v1638
    %v1884 = vpack.c.b16 %v1641, %v1640
    %v1885 = vpack.c.b16 %v1643, %v1642
    %v1886 = vpack.c.b16 %v1645, %v1644
    %v1887 = vpack.c.b16 %v1647, %v1646
    %v1888 = vpack.c.b16 %v1649, %v1648
    %v1889 = vpack.c.b16 %v1651, %v1650
    %v1890 = vpack.c.b16 %v1653, %v1652
    %v1891 = vpack.c.b16 %v1655, %v1654
    %v1892 = vpack.c.b16 %v1657, %v1656
    %v1893 = vpack.c.b16 %v1659, %v1658
    %v1894 = vpack.c.b16 %v1661, %v1660
    %v1895 = vpack.c.b16 %v1663, %v1662
    %v1896 = vpack.c.b16 %v1665, %v1664
    %v1897 = vpack.c.b16 %v1667, %v1666
    %v1898 = vpack.c.b16 %v1669, %v1668
    %v1899 = vpack.c.b16 %v1671, %v1670
    %v1900 = vpack.c.b16 %v1673, %v1672
    %v1901 = vpack.c.b16 %v1675, %v1674
    %v1902 = vpack.c.b16 %v1677, %v1676
    %v1903 = vpack.c.b16 %v1679, %v1678
    %v1904 = vpack.c.b16 %v1681, %v1680
    %v1905 = vpack.c.b16 %v1683, %v1682
    %v1906 = vpack.c.b16 %v1685, %v1684
    %v1907 = vpack.c.b16 %v1687, %v1686
    %v1908 = vpack.c.b16 %v1689, %v1688
    %v1909 = vpack.c.b16 %v1691, %v1690
    %v1910 = vpack.c.b16 %v1693, %v1692
    %v1911 = vpack.c.b16 %v1695, %v1694
    %v1912 = vpack.c.b16 %v1697, %v1696
    %v1913 = vpack.c.b16 %v1699, %v1698
    %v1914 = vpack.c.b16 %v1701, %v1700
    %v1915 = vpack.c.b16 %v1703, %v1702
    %v1916 = vpack.c.b16 %v1705, %v1704
    %v1917 = vpack.c.b16 %v1707, %v1706
    %v1918 = vpack.c.b16 %v1709, %v1708
    %v1919 = vpack.c.b16 %v1711, %v1710
    %v1920 = vpack.c.b16 %v1713, %v1712
    %v1921 = vpack.c.b16 %v1715, %v1714
    %v1922 = vpack.c.b16 %v1717, %v1716
    %v1923 = vpack.c.b16 %v1719, %v1718
    %v1924 = vpack.c.b16 %v1721, %v1720
    %v1925 = vpack.c.b16 %v1723, %v1722
    %v1926 = vpack.c.b16 %v1725, %v1724
    %v1927 = vpack.c.b16 %v1727, %v1726
    %v1928 = vpack.c.b16 %v1729, %v1728
    %v1929 = vpack.c.b16 %v1731, %v1730
    %v1930 = vpack.c.b16 %v1733, %v1732
    %v1931 = vpack.c.b16 %v1735, %v1734
    %v1932 = vpack.c.b16 %v1737, %v1736
    %v1933 = vpack.c.b16 %v1739, %v1738
    %v1934 = vpack.c.b16 %v1741, %v1740
    %v1935 = vpack.c.b16 %v1743, %v1742
    %v1936 = vpack.c.b16 %v1745, %v1744
    %v1937 = vpack.c.b16 %v1747, %v1746
    %v1938 = vpack.c.b16 %v1749, %v1748
    %v1939 = vpack.c.b16 %v1751, %v1750
    %v1940 = vpack.c.b16 %v1753, %v1752
    %v1941 = vpack.c.b16 %v1755, %v1754
    %v1942 = vpack.c.b16 %v1757, %v1756
    %v1943 = vpack.c.b16 %v1759, %v1758
    %v1944 = vpack.c.b16 %v1761, %v1760
    %v1945 = vpack.c.b16 %v1763, %v1762
    %v1946 = vpack.c.b16 %v1765, %v1764
    %v1947 = vpack.c.b16 %v1767, %v1766
    %v1948 = vpack.c.b16 %v1769, %v1768
    %v1949 = vpack.c.b16 %v1771, %v1770
    %v1950 = vpack.c.b16 %v1773, %v1772
    %v1951 = vpack.c.b16 %v1775, %v1774
    %v1952 = vpack.c.b16 %v1777, %v1776
    %v1953 = vpack.c.b16 %v1779, %v1778
    %v1954 = vpack.c.b16 %v1781, %v1780
    %v1955 = vpack.c.b16 %v1783, %v1782
    %v1956 = vpack.c.b16 %v1785, %v1784
    %v1957 = vpack.c.b16 %v1787, %v1786
    %v1958 = vpack.c.b16 %v1789, %v1788
    %v1959 = vpack.c.b16 %v1791, %v1790
    %v1960 = vpack.c.b16 %v1793, %v1792
    %v1961 = vpack.c.b16 %v1795, %v1794
    %v1962 = vpack.c.b16 %v1797, %v1796
    %v1963 = vpack.c.b16 %v1799, %v1798
    %v1964 = vpack.c.b16 %v1801, %v1800
    %v1965 = vpack.c.b16 %v1803, %v1802
    %v1966 = vpack.c.b16 %v1805, %v1804
    %v1967 = vpack.c.b16 %v1807, %v1806
    %v1968 = vpack.c.b16 %v1809, %v1808
    %v1969 = vpack.c.b16 %v1811, %v1810
    %v1970 = vpack.c.b16 %v1813, %v1812
    %v1971 = vpack.c.b16 %v1815, %v1814
    %v1972 = vpack.c.b16 %v1817, %v1816
    %v1973 = vpack.c.b16 %v1819, %v1818
    %v1974 = vpack.c.b16 %v1821, %v1820
    %v1975 = vpack.c.b16 %v1823, %v1822
    %v1976 = vpack.c.b16 %v1825, %v1824
    %v1977 = vpack.c.b16 %v1827, %v1826
    %v1978 = vpack.c.b16 %v1829, %v1828
    %v1979 = vpack.c.b16 %v1831, %v1830
    %v1980 = vpack.c.b16 %v1833, %v1832
    %v1981 = vpack.c.b16 %v1835, %v1834
    %v1982 = vpack.c.b16 %v1837, %v1836
    %v1983 = vpack.c.b16 %v1839, %v1838
    %v1984 = vpack.c.b16 %v1841, %v1840
    %v1985 = vpack.c.b16 %v1843, %v1842
    %v1986 = vpack.c.b16 %v1845, %v1844
    %v1987 = vpack.c.b16 %v1847, %v1846
    %v1988 = vpack.c.b16 %v1849, %v1848
    %v1989 = vpack.c.b16 %v1851, %v1850
    %v1990 = vpack.c.b16 %v1853, %v1852
    %v1991 = vpack.c.b16 %v1855, %v1854
    %v1992 = vpack.c.b16 %v1857, %v1856
    %v1993 = vpack.c.b16 %v1859, %v1858
    %v1994 = vpack.c.b16 %v1861, %v1860
    %v1995 = vpack.c.b16 %v1863, %v1862
    %v1996 = vpack.c.b16 %v1865, %v1864
    %v1997 = vpack.c.b16 %v1867, %v1866
    %v1998 = vpack.c.b16 %v1869, %v1868
    %v1999 = vpack.c.b16 %v1871, %v1870
    %2128 = vmatprep.subr.bf16.mxu0 0
    %2129 = vmatpush1.bf16.msra.mxu0 %v1872
    %2130 = vmatprep.subr.bf16.mxu0 0
    %2131 = vmatpush1.bf16.msra.mxu0 %v1873
    %2132 = vmatprep.subr.bf16.mxu0 0
    %2133 = vmatpush1.bf16.msra.mxu0 %v1874
    %2134 = vmatprep.subr.bf16.mxu0 0
    %2135 = vmatpush1.bf16.msra.mxu0 %v1875
    %2136 = vmatprep.subr.bf16.mxu0 0
    %2137 = vmatpush1.bf16.msra.mxu0 %v1876
    %2138 = vmatprep.subr.bf16.mxu0 0
    %2139 = vmatpush1.bf16.msra.mxu0 %v1877
    %2140 = vmatprep.subr.bf16.mxu0 0
    %2141 = vmatpush1.bf16.msra.mxu0 %v1878
    %2142 = vmatprep.subr.bf16.mxu0 0
    %2143 = vmatpush1.bf16.msra.mxu0 %v1879
    %2144 = vmatprep.subr.bf16.mxu0 0
    %2145 = vmatpush1.bf16.msra.mxu0 %v1880
    %2146 = vmatprep.subr.bf16.mxu0 0
    %2147 = vmatpush1.bf16.msra.mxu0 %v1881
    %2148 = vmatprep.subr.bf16.mxu0 0
    %2149 = vmatpush1.bf16.msra.mxu0 %v1882
    %2150 = vmatprep.subr.bf16.mxu0 0
    %2151 = vmatpush1.bf16.msra.mxu0 %v1883
    %2152 = vmatprep.subr.bf16.mxu0 0
    %2153 = vmatpush1.bf16.msra.mxu0 %v1884
    %2154 = vmatprep.subr.bf16.mxu0 0
    %2155 = vmatpush1.bf16.msra.mxu0 %v1885
    %2156 = vmatprep.subr.bf16.mxu0 0
    %2157 = vmatpush1.bf16.msra.mxu0 %v1886
    %2158 = vmatprep.subr.bf16.mxu0 0
    %2159 = vmatpush1.bf16.msra.mxu0 %v1887
    %2160 = vmatprep.mubr.bf16.mxu0 %v1088
    %2161 = vmatmul.mubr.bf16.gmra.mrb[0].mxu0 %v1087
    %v2162 = vpop.f32.mrb[0].mxu0
    %v2163 = vadd.f32 %v1359, %v2162
    %v2164 = vpop.f32.mrb[0].mxu0
    %v2165 = vpop.f32.mrb[0].mxu0
    %v2166 = vpop.f32.mrb[0].mxu0
    %2167 = vdwg.mxu0
    %2168 = vmatprep.subr.bf16.mxu0 0
    %2169 = vmatpush1.bf16.msra.mxu0 %v1888
    %2170 = vmatprep.subr.bf16.mxu0 0
    %2171 = vmatpush1.bf16.msra.mxu0 %v1889
    %2172 = vmatprep.subr.bf16.mxu0 0
    %2173 = vmatpush1.bf16.msra.mxu0 %v1890
    %2174 = vmatprep.subr.bf16.mxu0 0
    %2175 = vmatpush1.bf16.msra.mxu0 %v1891
    %2176 = vmatprep.subr.bf16.mxu0 0
    %2177 = vmatpush1.bf16.msra.mxu0 %v1892
    %2178 = vmatprep.subr.bf16.mxu0 0
    %2179 = vmatpush1.bf16.msra.mxu0 %v1893
    %2180 = vmatprep.subr.bf16.mxu0 0
    %2181 = vmatpush1.bf16.msra.mxu0 %v1894
    %2182 = vmatprep.subr.bf16.mxu0 0
    %2183 = vmatpush1.bf16.msra.mxu0 %v1895
    %2184 = vmatprep.subr.bf16.mxu0 0
    %2185 = vmatpush1.bf16.msra.mxu0 %v1896
    %2186 = vmatprep.subr.bf16.mxu0 0
    %2187 = vmatpush1.bf16.msra.mxu0 %v1897
    %2188 = vmatprep.subr.bf16.mxu0 0
    %2189 = vmatpush1.bf16.msra.mxu0 %v1898
    %2190 = vmatprep.subr.bf16.mxu0 0
    %2191 = vmatpush1.bf16.msra.mxu0 %v1899
    %2192 = vmatprep.subr.bf16.mxu0 0
    %2193 = vmatpush1.bf16.msra.mxu0 %v1900
    %2194 = vmatprep.subr.bf16.mxu0 0
    %2195 = vmatpush1.bf16.msra.mxu0 %v1901
    %2196 = vmatprep.subr.bf16.mxu0 0
    %2197 = vmatpush1.bf16.msra.mxu0 %v1902
    %2198 = vmatprep.subr.bf16.mxu0 0
    %2199 = vmatpush1.bf16.msra.mxu0 %v1903
    %2200 = vmatprep.mubr.bf16.mxu0 %v1090
    %2201 = vmatmul.mubr.bf16.gmra.mrb[0].mxu0 %v1089
    %v2202 = vpop.f32.mrb[0].mxu0
    %v2203 = vadd.f32 %v2163, %v2202
    %v2204 = vpop.f32.mrb[0].mxu0
    %v2205 = vpop.f32.mrb[0].mxu0
    %v2206 = vpop.f32.mrb[0].mxu0
    %2207 = vdwg.mxu0
    %2208 = vmatprep.subr.bf16.mxu0 0
    %2209 = vmatpush1.bf16.msra.mxu0 %v1904
    %2210 = vmatprep.subr.bf16.mxu0 0
    %2211 = vmatpush1.bf16.msra.mxu0 %v1905
    %2212 = vmatprep.subr.bf16.mxu0 0
    %2213 = vmatpush1.bf16.msra.mxu0 %v1906
    %2214 = vmatprep.subr.bf16.mxu0 0
    %2215 = vmatpush1.bf16.msra.mxu0 %v1907
    %2216 = vmatprep.subr.bf16.mxu0 0
    %2217 = vmatpush1.bf16.msra.mxu0 %v1908
    %2218 = vmatprep.subr.bf16.mxu0 0
    %2219 = vmatpush1.bf16.msra.mxu0 %v1909
    %2220 = vmatprep.subr.bf16.mxu0 0
    %2221 = vmatpush1.bf16.msra.mxu0 %v1910
    %2222 = vmatprep.subr.bf16.mxu0 0
    %2223 = vmatpush1.bf16.msra.mxu0 %v1911
    %2224 = vmatprep.subr.bf16.mxu0 0
    %2225 = vmatpush1.bf16.msra.mxu0 %v1912
    %2226 = vmatprep.subr.bf16.mxu0 0
    %2227 = vmatpush1.bf16.msra.mxu0 %v1913
    %2228 = vmatprep.subr.bf16.mxu0 0
    %2229 = vmatpush1.bf16.msra.mxu0 %v1914
    %2230 = vmatprep.subr.bf16.mxu0 0
    %2231 = vmatpush1.bf16.msra.mxu0 %v1915
    %2232 = vmatprep.subr.bf16.mxu0 0
    %2233 = vmatpush1.bf16.msra.mxu0 %v1916
    %2234 = vmatprep.subr.bf16.mxu0 0
    %2235 = vmatpush1.bf16.msra.mxu0 %v1917
    %2236 = vmatprep.subr.bf16.mxu0 0
    %2237 = vmatpush1.bf16.msra.mxu0 %v1918
    %2238 = vmatprep.subr.bf16.mxu0 0
    %2239 = vmatpush1.bf16.msra.mxu0 %v1919
    %2240 = vmatprep.mubr.bf16.mxu0 %v1092
    %2241 = vmatmul.mubr.bf16.gmra.mrb[0].mxu0 %v1091
    %v2242 = vpop.f32.mrb[0].mxu0
    %v2243 = vadd.f32 %v2203, %v2242
    %v2244 = vpop.f32.mrb[0].mxu0
    %v2245 = vpop.f32.mrb[0].mxu0
    %v2246 = vpop.f32.mrb[0].mxu0
    %2247 = vdwg.mxu0
    %2248 = vmatprep.subr.bf16.mxu0 0
    %2249 = vmatpush1.bf16.msra.mxu0 %v1920
    %2250 = vmatprep.subr.bf16.mxu0 0
    %2251 = vmatpush1.bf16.msra.mxu0 %v1921
    %2252 = vmatprep.subr.bf16.mxu0 0
    %2253 = vmatpush1.bf16.msra.mxu0 %v1922
    %2254 = vmatprep.subr.bf16.mxu0 0
    %2255 = vmatpush1.bf16.msra.mxu0 %v1923
    %2256 = vmatprep.subr.bf16.mxu0 0
    %2257 = vmatpush1.bf16.msra.mxu0 %v1924
    %2258 = vmatprep.subr.bf16.mxu0 0
    %2259 = vmatpush1.bf16.msra.mxu0 %v1925
    %2260 = vmatprep.subr.bf16.mxu0 0
    %2261 = vmatpush1.bf16.msra.mxu0 %v1926
    %2262 = vmatprep.subr.bf16.mxu0 0
    %2263 = vmatpush1.bf16.msra.mxu0 %v1927
    %2264 = vmatprep.subr.bf16.mxu0 0
    %2265 = vmatpush1.bf16.msra.mxu0 %v1928
    %2266 = vmatprep.subr.bf16.mxu0 0
    %2267 = vmatpush1.bf16.msra.mxu0 %v1929
    %2268 = vmatprep.subr.bf16.mxu0 0
    %2269 = vmatpush1.bf16.msra.mxu0 %v1930
    %2270 = vmatprep.subr.bf16.mxu0 0
    %2271 = vmatpush1.bf16.msra.mxu0 %v1931
    %2272 = vmatprep.subr.bf16.mxu0 0
    %2273 = vmatpush1.bf16.msra.mxu0 %v1932
    %2274 = vmatprep.subr.bf16.mxu0 0
    %2275 = vmatpush1.bf16.msra.mxu0 %v1933
    %2276 = vmatprep.subr.bf16.mxu0 0
    %2277 = vmatpush1.bf16.msra.mxu0 %v1934
    %2278 = vmatprep.subr.bf16.mxu0 0
    %2279 = vmatpush1.bf16.msra.mxu0 %v1935
    %2280 = vmatprep.mubr.bf16.mxu0 %v1094
    %2281 = vmatmul.mubr.bf16.gmra.mrb[0].mxu0 %v1093
    %v2282 = vpop.f32.mrb[0].mxu0
    %v2283 = vadd.f32 %v2243, %v2282
    %v2284 = vpop.f32.mrb[0].mxu0
    %v2285 = vpop.f32.mrb[0].mxu0
    %v2286 = vpop.f32.mrb[0].mxu0
    %2287 = vdwg.mxu0
    %2288 = vmatprep.subr.bf16.mxu0 0
    %2289 = vmatpush1.bf16.msra.mxu0 %v1936
    %2290 = vmatprep.subr.bf16.mxu0 0
    %2291 = vmatpush1.bf16.msra.mxu0 %v1937
    %2292 = vmatprep.subr.bf16.mxu0 0
    %2293 = vmatpush1.bf16.msra.mxu0 %v1938
    %2294 = vmatprep.subr.bf16.mxu0 0
    %2295 = vmatpush1.bf16.msra.mxu0 %v1939
    %2296 = vmatprep.subr.bf16.mxu0 0
    %2297 = vmatpush1.bf16.msra.mxu0 %v1940
    %2298 = vmatprep.subr.bf16.mxu0 0
    %2299 = vmatpush1.bf16.msra.mxu0 %v1941
    %2300 = vmatprep.subr.bf16.mxu0 0
    %2301 = vmatpush1.bf16.msra.mxu0 %v1942
    %2302 = vmatprep.subr.bf16.mxu0 0
    %2303 = vmatpush1.bf16.msra.mxu0 %v1943
    %2304 = vmatprep.subr.bf16.mxu0 0
    %2305 = vmatpush1.bf16.msra.mxu0 %v1944
    %2306 = vmatprep.subr.bf16.mxu0 0
    %2307 = vmatpush1.bf16.msra.mxu0 %v1945
    %2308 = vmatprep.subr.bf16.mxu0 0
    %2309 = vmatpush1.bf16.msra.mxu0 %v1946
    %2310 = vmatprep.subr.bf16.mxu0 0
    %2311 = vmatpush1.bf16.msra.mxu0 %v1947
    %2312 = vmatprep.subr.bf16.mxu0 0
    %2313 = vmatpush1.bf16.msra.mxu0 %v1948
    %2314 = vmatprep.subr.bf16.mxu0 0
    %2315 = vmatpush1.bf16.msra.mxu0 %v1949
    %2316 = vmatprep.subr.bf16.mxu0 0
    %2317 = vmatpush1.bf16.msra.mxu0 %v1950
    %2318 = vmatprep.subr.bf16.mxu0 0
    %2319 = vmatpush1.bf16.msra.mxu0 %v1951
    %2320 = vmatprep.mubr.bf16.mxu0 %v1096
    %2321 = vmatmul.mubr.bf16.gmra.mrb[0].mxu0 %v1095
    %v2322 = vpop.f32.mrb[0].mxu0
    %v2323 = vadd.f32 %v2283, %v2322
    %v2324 = vpop.f32.mrb[0].mxu0
    %v2325 = vpop.f32.mrb[0].mxu0
    %v2326 = vpop.f32.mrb[0].mxu0
    %2327 = vdwg.mxu0
    %2328 = vmatprep.subr.bf16.mxu0 0
    %2329 = vmatpush1.bf16.msra.mxu0 %v1952
    %2330 = vmatprep.subr.bf16.mxu0 0
    %2331 = vmatpush1.bf16.msra.mxu0 %v1953
    %2332 = vmatprep.subr.bf16.mxu0 0
    %2333 = vmatpush1.bf16.msra.mxu0 %v1954
    %2334 = vmatprep.subr.bf16.mxu0 0
    %2335 = vmatpush1.bf16.msra.mxu0 %v1955
    %2336 = vmatprep.subr.bf16.mxu0 0
    %2337 = vmatpush1.bf16.msra.mxu0 %v1956
    %2338 = vmatprep.subr.bf16.mxu0 0
    %2339 = vmatpush1.bf16.msra.mxu0 %v1957
    %2340 = vmatprep.subr.bf16.mxu0 0
    %2341 = vmatpush1.bf16.msra.mxu0 %v1958
    %2342 = vmatprep.subr.bf16.mxu0 0
    %2343 = vmatpush1.bf16.msra.mxu0 %v1959
    %2344 = vmatprep.subr.bf16.mxu0 0
    %2345 = vmatpush1.bf16.msra.mxu0 %v1960
    %2346 = vmatprep.subr.bf16.mxu0 0
    %2347 = vmatpush1.bf16.msra.mxu0 %v1961
    %2348 = vmatprep.subr.bf16.mxu0 0
    %2349 = vmatpush1.bf16.msra.mxu0 %v1962
    %2350 = vmatprep.subr.bf16.mxu0 0
    %2351 = vmatpush1.bf16.msra.mxu0 %v1963
    %2352 = vmatprep.subr.bf16.mxu0 0
    %2353 = vmatpush1.bf16.msra.mxu0 %v1964
    %2354 = vmatprep.subr.bf16.mxu0 0
    %2355 = vmatpush1.bf16.msra.mxu0 %v1965
    %2356 = vmatprep.subr.bf16.mxu0 0
    %2357 = vmatpush1.bf16.msra.mxu0 %v1966
    %2358 = vmatprep.subr.bf16.mxu0 0
    %2359 = vmatpush1.bf16.msra.mxu0 %v1967
    %2360 = vmatprep.mubr.bf16.mxu0 %v1098
    %2361 = vmatmul.mubr.bf16.gmra.mrb[0].mxu0 %v1097
    %v2362 = vpop.f32.mrb[0].mxu0
    %v2363 = vadd.f32 %v2323, %v2362
    %v2364 = vpop.f32.mrb[0].mxu0
    %v2365 = vpop.f32.mrb[0].mxu0
    %v2366 = vpop.f32.mrb[0].mxu0
    %2367 = vdwg.mxu0
    %2368 = vmatprep.subr.bf16.mxu0 0
    %2369 = vmatpush1.bf16.msra.mxu0 %v1968
    %2370 = vmatprep.subr.bf16.mxu0 0
    %2371 = vmatpush1.bf16.msra.mxu0 %v1969
    %2372 = vmatprep.subr.bf16.mxu0 0
    %2373 = vmatpush1.bf16.msra.mxu0 %v1970
    %2374 = vmatprep.subr.bf16.mxu0 0
    %2375 = vmatpush1.bf16.msra.mxu0 %v1971
    %2376 = vmatprep.subr.bf16.mxu0 0
    %2377 = vmatpush1.bf16.msra.mxu0 %v1972
    %2378 = vmatprep.subr.bf16.mxu0 0
    %2379 = vmatpush1.bf16.msra.mxu0 %v1973
    %2380 = vmatprep.subr.bf16.mxu0 0
    %2381 = vmatpush1.bf16.msra.mxu0 %v1974
    %2382 = vmatprep.subr.bf16.mxu0 0
    %2383 = vmatpush1.bf16.msra.mxu0 %v1975
    %2384 = vmatprep.subr.bf16.mxu0 0
    %2385 = vmatpush1.bf16.msra.mxu0 %v1976
    %2386 = vmatprep.subr.bf16.mxu0 0
    %2387 = vmatpush1.bf16.msra.mxu0 %v1977
    %2388 = vmatprep.subr.bf16.mxu0 0
    %2389 = vmatpush1.bf16.msra.mxu0 %v1978
    %2390 = vmatprep.subr.bf16.mxu0 0
    %2391 = vmatpush1.bf16.msra.mxu0 %v1979
    %2392 = vmatprep.subr.bf16.mxu0 0
    %2393 = vmatpush1.bf16.msra.mxu0 %v1980
    %2394 = vmatprep.subr.bf16.mxu0 0
    %2395 = vmatpush1.bf16.msra.mxu0 %v1981
    %2396 = vmatprep.subr.bf16.mxu0 0
    %2397 = vmatpush1.bf16.msra.mxu0 %v1982
    %2398 = vmatprep.subr.bf16.mxu0 0
    %2399 = vmatpush1.bf16.msra.mxu0 %v1983
    %2400 = vmatprep.mubr.bf16.mxu0 %v1100
    %2401 = vmatmul.mubr.bf16.gmra.mrb[0].mxu0 %v1099
    %v2402 = vpop.f32.mrb[0].mxu0
    %v2403 = vadd.f32 %v2363, %v2402
    %v2404 = vpop.f32.mrb[0].mxu0
    %v2405 = vpop.f32.mrb[0].mxu0
    %v2406 = vpop.f32.mrb[0].mxu0
    %2407 = vdwg.mxu0
    %2408 = vmatprep.subr.bf16.mxu0 0
    %2409 = vmatpush1.bf16.msra.mxu0 %v1984
    %2410 = vmatprep.subr.bf16.mxu0 0
    %2411 = vmatpush1.bf16.msra.mxu0 %v1985
    %2412 = vmatprep.subr.bf16.mxu0 0
    %2413 = vmatpush1.bf16.msra.mxu0 %v1986
    %2414 = vmatprep.subr.bf16.mxu0 0
    %2415 = vmatpush1.bf16.msra.mxu0 %v1987
    %2416 = vmatprep.subr.bf16.mxu0 0
    %2417 = vmatpush1.bf16.msra.mxu0 %v1988
    %2418 = vmatprep.subr.bf16.mxu0 0
    %2419 = vmatpush1.bf16.msra.mxu0 %v1989
    %2420 = vmatprep.subr.bf16.mxu0 0
    %2421 = vmatpush1.bf16.msra.mxu0 %v1990
    %2422 = vmatprep.subr.bf16.mxu0 0
    %2423 = vmatpush1.bf16.msra.mxu0 %v1991
    %2424 = vmatprep.subr.bf16.mxu0 0
    %2425 = vmatpush1.bf16.msra.mxu0 %v1992
    %2426 = vmatprep.subr.bf16.mxu0 0
    %2427 = vmatpush1.bf16.msra.mxu0 %v1993
    %2428 = vmatprep.subr.bf16.mxu0 0
    %2429 = vmatpush1.bf16.msra.mxu0 %v1994
    %2430 = vmatprep.subr.bf16.mxu0 0
    %2431 = vmatpush1.bf16.msra.mxu0 %v1995
    %2432 = vmatprep.subr.bf16.mxu0 0
    %2433 = vmatpush1.bf16.msra.mxu0 %v1996
    %2434 = vmatprep.subr.bf16.mxu0 0
    %2435 = vmatpush1.bf16.msra.mxu0 %v1997
    %2436 = vmatprep.subr.bf16.mxu0 0
    %2437 = vmatpush1.bf16.msra.mxu0 %v1998
    %2438 = vmatprep.subr.bf16.mxu0 0
    %2439 = vmatpush1.bf16.msra.mxu0 %v1999
    %2440 = vmatprep.mubr.bf16.mxu0 %v1102
    %2441 = vmatmul.mubr.bf16.gmra.mrb[0].mxu0 %v1101
    %v2442 = vpop.f32.mrb[0].mxu0
    %v2443 = vadd.f32 %v2403, %v2442
    %v2444 = vpop.f32.mrb[0].mxu0
    %v2445 = vpop.f32.mrb[0].mxu0
    %v2446 = vpop.f32.mrb[0].mxu0
    %2447 = vdwg.mxu0
    %vm2448 = vcmask 253952
    %2449 = vst.msk [vmem:[#allocation5] sm:$0x1] %vm2448, %v2443
    %v2450 = vpack.c.bf16 %v2443, %v2443
    %v2451 = vld [vmem:[%s8] sm:$0xf]
    %v2452 = vld [vmem:[%s8 + $0x4] sm:$0xf]
    %v2453 = vld [vmem:[%s8 + $0x8] sm:$0xf]
    %v2454 = vld [vmem:[%s8 + $0xc] sm:$0xf]
    %v2455 = vld [vmem:[%s9] sm:$0x1]
    %v2460 = vunpack.c.l.b16 %v2451
    %v2461 = vunpack.c.l.b16 %v2452
    %v2462 = vunpack.c.l.b16 %v2453
    %v2463 = vunpack.c.l.b16 %v2454
    %v2464 = vpack.c.b16 %v2461, %v2460
    %v2465 = vpack.c.b16 %v2463, %v2462
    %vm2468 = vcmask 261120
    %v2470 = vsel %vm2468, %v2450, 0
    %2472 = vmatprep.subr.bf16.mxu0 0
    %2473 = vmatpush1.bf16.msra.mxu0 %v2464
    %2474 = vmatprep.subr.bf16.mxu0 0
    %2475 = vmatpush1.bf16.msra.mxu0 %v2465
    %2476 = vmatprep.subr.bf16.mxu0 0
    %2477 = vmatpush1.bf16.msra.mxu0 0
    %2478 = vmatprep.subr.bf16.mxu0 0
    %2479 = vmatpush1.bf16.msra.mxu0 0
    %2480 = vmatprep.subr.bf16.mxu0 0
    %2481 = vmatpush1.bf16.msra.mxu0 0
    %2482 = vmatprep.subr.bf16.mxu0 0
    %2483 = vmatpush1.bf16.msra.mxu0 0
    %2484 = vmatprep.subr.bf16.mxu0 0
    %2485 = vmatpush1.bf16.msra.mxu0 0
    %2486 = vmatprep.subr.bf16.mxu0 0
    %2487 = vmatpush1.bf16.msra.mxu0 0
    %2488 = vmatprep.subr.bf16.mxu0 0
    %2489 = vmatpush1.bf16.msra.mxu0 0
    %2490 = vmatprep.subr.bf16.mxu0 0
    %2491 = vmatpush1.bf16.msra.mxu0 0
    %2492 = vmatprep.subr.bf16.mxu0 0
    %2493 = vmatpush1.bf16.msra.mxu0 0
    %2494 = vmatprep.subr.bf16.mxu0 0
    %2495 = vmatpush1.bf16.msra.mxu0 0
    %2496 = vmatprep.subr.bf16.mxu0 0
    %2497 = vmatpush1.bf16.msra.mxu0 0
    %2498 = vmatprep.subr.bf16.mxu0 0
    %2499 = vmatpush1.bf16.msra.mxu0 0
    %2500 = vmatprep.subr.bf16.mxu0 0
    %2501 = vmatpush1.bf16.msra.mxu0 0
    %2502 = vmatprep.subr.bf16.mxu0 0
    %2503 = vmatpush1.bf16.msra.mxu0 0
    %2504 = vmatprep.mubr.bf16.mxu0 0
    %2505 = vmatmul.mubr.bf16.gmra.mrb[0].mxu0 %v2470
    %v2506 = vpop.f32.mrb[0].mxu0
    %v2507 = vadd.f32 %v2455, %v2506
    %v2508 = vpop.f32.mrb[0].mxu0
    %v2509 = vpop.f32.mrb[0].mxu0
    %v2510 = vpop.f32.mrb[0].mxu0
    %2511 = vdwg.mxu0
    %vm2512 = vcmask 73728
    %2513 = vst.msk [vmem:[#allocation6] sm:$0x1] %vm2512, %v2507
    %v2515 = vrot.slane %v1050, 1
    %v2517 = vrot.slane %v1050, 2
    %v2519 = vrot.slane %v1050, 3
    %v2521 = vrot.slane %v1050, 4
    %v2523 = vrot.slane %v1050, 5
    %v2525 = vrot.slane %v1050, 6
    %v2527 = vrot.slane %v1050, 7
    %v2530 = vrot.slane %v1052, 1
    %v2532 = vrot.slane %v1052, 2
    %v2534 = vrot.slane %v1052, 3
    %v2536 = vrot.slane %v1052, 4
    %v2538 = vrot.slane %v1052, 5
    %v2540 = vrot.slane %v1052, 6
    %v2542 = vrot.slane %v1052, 7
    %v2544 = vpack.c.bf16 %v1050, %v1050
    %v2545 = vpack.c.bf16 %v2515, %v2515
    %v2546 = vpack.c.bf16 %v2517, %v2517
    %v2547 = vpack.c.bf16 %v2519, %v2519
    %v2548 = vpack.c.bf16 %v2521, %v2521
    %v2549 = vpack.c.bf16 %v2523, %v2523
    %v2550 = vpack.c.bf16 %v2525, %v2525
    %v2551 = vpack.c.bf16 %v2527, %v2527
    %v2552 = vpack.c.bf16 %v1052, %v1052
    %v2553 = vpack.c.bf16 %v2530, %v2530
    %v2554 = vpack.c.bf16 %v2532, %v2532
    %v2555 = vpack.c.bf16 %v2534, %v2534
    %v2556 = vpack.c.bf16 %v2536, %v2536
    %v2557 = vpack.c.bf16 %v2538, %v2538
    %v2558 = vpack.c.bf16 %v2540, %v2540
    %v2559 = vpack.c.bf16 %v2542, %v2542
    %v2560 = vld [vmem:[#allocation2] sm:$0xf]
    %v2561 = vld [vmem:[#allocation2 + $0x4] sm:$0xf]
    %v2562 = vld [vmem:[#allocation2 + $0x8] sm:$0xf]
    %v2563 = vld [vmem:[#allocation2 + $0xc] sm:$0xf]
    %v2564 = vld [vmem:[#allocation2 + $0x10] sm:$0xf]
    %v2565 = vld [vmem:[#allocation2 + $0x14] sm:$0xf]
    %v2566 = vld [vmem:[#allocation2 + $0x18] sm:$0xf]
    %v2567 = vld [vmem:[#allocation2 + $0x1c] sm:$0xf]
    %v2568 = vld [vmem:[#allocation2 + $0x20] sm:$0xf]
    %v2569 = vld [vmem:[#allocation2 + $0x24] sm:$0xf]
    %v2570 = vld [vmem:[#allocation2 + $0x28] sm:$0xf]
    %v2571 = vld [vmem:[#allocation2 + $0x2c] sm:$0xf]
    %v2572 = vld [vmem:[#allocation2 + $0x30] sm:$0xf]
    %v2573 = vld [vmem:[#allocation2 + $0x34] sm:$0xf]
    %v2574 = vld [vmem:[#allocation2 + $0x38] sm:$0xf]
    %v2575 = vld [vmem:[#allocation2 + $0x3c] sm:$0xf]
    %v2576 = vld [vmem:[#allocation2 + $0x40] sm:$0xf]
    %v2577 = vld [vmem:[#allocation2 + $0x44] sm:$0xf]
    %v2578 = vld [vmem:[#allocation2 + $0x48] sm:$0xf]
    %v2579 = vld [vmem:[#allocation2 + $0x4c] sm:$0xf]
    %v2580 = vld [vmem:[#allocation2 + $0x50] sm:$0xf]
    %v2581 = vld [vmem:[#allocation2 + $0x54] sm:$0xf]
    %v2582 = vld [vmem:[#allocation2 + $0x58] sm:$0xf]
    %v2583 = vld [vmem:[#allocation2 + $0x5c] sm:$0xf]
    %v2584 = vld [vmem:[#allocation2 + $0x60] sm:$0xf]
    %v2585 = vld [vmem:[#allocation2 + $0x64] sm:$0xf]
    %v2586 = vld [vmem:[#allocation2 + $0x68] sm:$0xf]
    %v2587 = vld [vmem:[#allocation2 + $0x6c] sm:$0xf]
    %v2588 = vld [vmem:[#allocation2 + $0x70] sm:$0xf]
    %v2589 = vld [vmem:[#allocation2 + $0x74] sm:$0xf]
    %v2590 = vld [vmem:[#allocation2 + $0x78] sm:$0xf]
    %v2591 = vld [vmem:[#allocation2 + $0x7c] sm:$0xf]
    %v2592 = vld [vmem:[#allocation2 + $0x80] sm:$0xf]
    %v2593 = vld [vmem:[#allocation2 + $0x84] sm:$0xf]
    %v2594 = vld [vmem:[#allocation2 + $0x88] sm:$0xf]
    %v2595 = vld [vmem:[#allocation2 + $0x8c] sm:$0xf]
    %v2596 = vld [vmem:[#allocation2 + $0x90] sm:$0xf]
    %v2597 = vld [vmem:[#allocation2 + $0x94] sm:$0xf]
    %v2598 = vld [vmem:[#allocation2 + $0x98] sm:$0xf]
    %v2599 = vld [vmem:[#allocation2 + $0x9c] sm:$0xf]
    %v2600 = vld [vmem:[#allocation2 + $0xa0] sm:$0xf]
    %v2601 = vld [vmem:[#allocation2 + $0xa4] sm:$0xf]
    %v2602 = vld [vmem:[#allocation2 + $0xa8] sm:$0xf]
    %v2603 = vld [vmem:[#allocation2 + $0xac] sm:$0xf]
    %v2604 = vld [vmem:[#allocation2 + $0xb0] sm:$0xf]
    %v2605 = vld [vmem:[#allocation2 + $0xb4] sm:$0xf]
    %v2606 = vld [vmem:[#allocation2 + $0xb8] sm:$0xf]
    %v2607 = vld [vmem:[#allocation2 + $0xbc] sm:$0xf]
    %v2608 = vld [vmem:[#allocation2 + $0xc0] sm:$0xf]
    %v2609 = vld [vmem:[#allocation2 + $0xc4] sm:$0xf]
    %v2610 = vld [vmem:[#allocation2 + $0xc8] sm:$0xf]
    %v2611 = vld [vmem:[#allocation2 + $0xcc] sm:$0xf]
    %v2612 = vld [vmem:[#allocation2 + $0xd0] sm:$0xf]
    %v2613 = vld [vmem:[#allocation2 + $0xd4] sm:$0xf]
    %v2614 = vld [vmem:[#allocation2 + $0xd8] sm:$0xf]
    %v2615 = vld [vmem:[#allocation2 + $0xdc] sm:$0xf]
    %v2616 = vld [vmem:[#allocation2 + $0xe0] sm:$0xf]
    %v2617 = vld [vmem:[#allocation2 + $0xe4] sm:$0xf]
    %v2618 = vld [vmem:[#allocation2 + $0xe8] sm:$0xf]
    %v2619 = vld [vmem:[#allocation2 + $0xec] sm:$0xf]
    %v2620 = vld [vmem:[#allocation2 + $0xf0] sm:$0xf]
    %v2621 = vld [vmem:[#allocation2 + $0xf4] sm:$0xf]
    %v2622 = vld [vmem:[#allocation2 + $0xf8] sm:$0xf]
    %v2623 = vld [vmem:[#allocation2 + $0xfc] sm:$0xf]
    %v2624 = vld [vmem:[#allocation2 + $0x100] sm:$0xf]
    %v2625 = vld [vmem:[#allocation2 + $0x104] sm:$0xf]
    %v2626 = vld [vmem:[#allocation2 + $0x108] sm:$0xf]
    %v2627 = vld [vmem:[#allocation2 + $0x10c] sm:$0xf]
    %v2628 = vld [vmem:[#allocation2 + $0x110] sm:$0xf]
    %v2629 = vld [vmem:[#allocation2 + $0x114] sm:$0xf]
    %v2630 = vld [vmem:[#allocation2 + $0x118] sm:$0xf]
    %v2631 = vld [vmem:[#allocation2 + $0x11c] sm:$0xf]
    %v2632 = vld [vmem:[#allocation2 + $0x120] sm:$0xf]
    %v2633 = vld [vmem:[#allocation2 + $0x124] sm:$0xf]
    %v2634 = vld [vmem:[#allocation2 + $0x128] sm:$0xf]
    %v2635 = vld [vmem:[#allocation2 + $0x12c] sm:$0xf]
    %v2636 = vld [vmem:[#allocation2 + $0x130] sm:$0xf]
    %v2637 = vld [vmem:[#allocation2 + $0x134] sm:$0xf]
    %v2638 = vld [vmem:[#allocation2 + $0x138] sm:$0xf]
    %v2639 = vld [vmem:[#allocation2 + $0x13c] sm:$0xf]
    %v2640 = vld [vmem:[#allocation2 + $0x140] sm:$0xf]
    %v2641 = vld [vmem:[#allocation2 + $0x144] sm:$0xf]
    %v2642 = vld [vmem:[#allocation2 + $0x148] sm:$0xf]
    %v2643 = vld [vmem:[#allocation2 + $0x14c] sm:$0xf]
    %v2644 = vld [vmem:[#allocation2 + $0x150] sm:$0xf]
    %v2645 = vld [vmem:[#allocation2 + $0x154] sm:$0xf]
    %v2646 = vld [vmem:[#allocation2 + $0x158] sm:$0xf]
    %v2647 = vld [vmem:[#allocation2 + $0x15c] sm:$0xf]
    %v2648 = vld [vmem:[#allocation2 + $0x160] sm:$0xf]
    %v2649 = vld [vmem:[#allocation2 + $0x164] sm:$0xf]
    %v2650 = vld [vmem:[#allocation2 + $0x168] sm:$0xf]
    %v2651 = vld [vmem:[#allocation2 + $0x16c] sm:$0xf]
    %v2652 = vld [vmem:[#allocation2 + $0x170] sm:$0xf]
    %v2653 = vld [vmem:[#allocation2 + $0x174] sm:$0xf]
    %v2654 = vld [vmem:[#allocation2 + $0x178] sm:$0xf]
    %v2655 = vld [vmem:[#allocation2 + $0x17c] sm:$0xf]
    %v2656 = vld [vmem:[#allocation2 + $0x180] sm:$0xf]
    %v2657 = vld [vmem:[#allocation2 + $0x184] sm:$0xf]
    %v2658 = vld [vmem:[#allocation2 + $0x188] sm:$0xf]
    %v2659 = vld [vmem:[#allocation2 + $0x18c] sm:$0xf]
    %v2660 = vld [vmem:[#allocation2 + $0x190] sm:$0xf]
    %v2661 = vld [vmem:[#allocation2 + $0x194] sm:$0xf]
    %v2662 = vld [vmem:[#allocation2 + $0x198] sm:$0xf]
    %v2663 = vld [vmem:[#allocation2 + $0x19c] sm:$0xf]
    %v2664 = vld [vmem:[#allocation2 + $0x1a0] sm:$0xf]
    %v2665 = vld [vmem:[#allocation2 + $0x1a4] sm:$0xf]
    %v2666 = vld [vmem:[#allocation2 + $0x1a8] sm:$0xf]
    %v2667 = vld [vmem:[#allocation2 + $0x1ac] sm:$0xf]
    %v2668 = vld [vmem:[#allocation2 + $0x1b0] sm:$0xf]
    %v2669 = vld [vmem:[#allocation2 + $0x1b4] sm:$0xf]
    %v2670 = vld [vmem:[#allocation2 + $0x1b8] sm:$0xf]
    %v2671 = vld [vmem:[#allocation2 + $0x1bc] sm:$0xf]
    %v2672 = vld [vmem:[#allocation2 + $0x1c0] sm:$0xf]
    %v2673 = vld [vmem:[#allocation2 + $0x1c4] sm:$0xf]
    %v2674 = vld [vmem:[#allocation2 + $0x1c8] sm:$0xf]
    %v2675 = vld [vmem:[#allocation2 + $0x1cc] sm:$0xf]
    %v2676 = vld [vmem:[#allocation2 + $0x1d0] sm:$0xf]
    %v2677 = vld [vmem:[#allocation2 + $0x1d4] sm:$0xf]
    %v2678 = vld [vmem:[#allocation2 + $0x1d8] sm:$0xf]
    %v2679 = vld [vmem:[#allocation2 + $0x1dc] sm:$0xf]
    %v2680 = vld [vmem:[#allocation2 + $0x1e0] sm:$0xf]
    %v2681 = vld [vmem:[#allocation2 + $0x1e4] sm:$0xf]
    %v2682 = vld [vmem:[#allocation2 + $0x1e8] sm:$0xf]
    %v2683 = vld [vmem:[#allocation2 + $0x1ec] sm:$0xf]
    %v2684 = vld [vmem:[#allocation2 + $0x1f0] sm:$0xf]
    %v2685 = vld [vmem:[#allocation2 + $0x1f4] sm:$0xf]
    %v2686 = vld [vmem:[#allocation2 + $0x1f8] sm:$0xf]
    %v2687 = vld [vmem:[#allocation2 + $0x1fc] sm:$0xf]
    %v2688 = vld [vmem:[#allocation2 + $0x200] sm:$0xf]
    %v2689 = vld [vmem:[#allocation2 + $0x204] sm:$0xf]
    %v2690 = vld [vmem:[#allocation2 + $0x208] sm:$0xf]
    %v2691 = vld [vmem:[#allocation2 + $0x20c] sm:$0xf]
    %v2692 = vld [vmem:[#allocation2 + $0x210] sm:$0xf]
    %v2693 = vld [vmem:[#allocation2 + $0x214] sm:$0xf]
    %v2694 = vld [vmem:[#allocation2 + $0x218] sm:$0xf]
    %v2695 = vld [vmem:[#allocation2 + $0x21c] sm:$0xf]
    %v2696 = vld [vmem:[#allocation2 + $0x220] sm:$0xf]
    %v2697 = vld [vmem:[#allocation2 + $0x224] sm:$0xf]
    %v2698 = vld [vmem:[#allocation2 + $0x228] sm:$0xf]
    %v2699 = vld [vmem:[#allocation2 + $0x22c] sm:$0xf]
    %v2700 = vld [vmem:[#allocation2 + $0x230] sm:$0xf]
    %v2701 = vld [vmem:[#allocation2 + $0x234] sm:$0xf]
    %v2702 = vld [vmem:[#allocation2 + $0x238] sm:$0xf]
    %v2703 = vld [vmem:[#allocation2 + $0x23c] sm:$0xf]
    %v2704 = vld [vmem:[#allocation2 + $0x240] sm:$0xf]
    %v2705 = vld [vmem:[#allocation2 + $0x244] sm:$0xf]
    %v2706 = vld [vmem:[#allocation2 + $0x248] sm:$0xf]
    %v2707 = vld [vmem:[#allocation2 + $0x24c] sm:$0xf]
    %v2708 = vld [vmem:[#allocation2 + $0x250] sm:$0xf]
    %v2709 = vld [vmem:[#allocation2 + $0x254] sm:$0xf]
    %v2710 = vld [vmem:[#allocation2 + $0x258] sm:$0xf]
    %v2711 = vld [vmem:[#allocation2 + $0x25c] sm:$0xf]
    %v2712 = vld [vmem:[#allocation2 + $0x260] sm:$0xf]
    %v2713 = vld [vmem:[#allocation2 + $0x264] sm:$0xf]
    %v2714 = vld [vmem:[#allocation2 + $0x268] sm:$0xf]
    %v2715 = vld [vmem:[#allocation2 + $0x26c] sm:$0xf]
    %v2716 = vld [vmem:[#allocation2 + $0x270] sm:$0xf]
    %v2717 = vld [vmem:[#allocation2 + $0x274] sm:$0xf]
    %v2718 = vld [vmem:[#allocation2 + $0x278] sm:$0xf]
    %v2719 = vld [vmem:[#allocation2 + $0x27c] sm:$0xf]
    %v2720 = vld [vmem:[#allocation2 + $0x280] sm:$0xf]
    %v2721 = vld [vmem:[#allocation2 + $0x284] sm:$0xf]
    %v2722 = vld [vmem:[#allocation2 + $0x288] sm:$0xf]
    %v2723 = vld [vmem:[#allocation2 + $0x28c] sm:$0xf]
    %v2724 = vld [vmem:[#allocation2 + $0x290] sm:$0xf]
    %v2725 = vld [vmem:[#allocation2 + $0x294] sm:$0xf]
    %v2726 = vld [vmem:[#allocation2 + $0x298] sm:$0xf]
    %v2727 = vld [vmem:[#allocation2 + $0x29c] sm:$0xf]
    %v2728 = vld [vmem:[#allocation2 + $0x2a0] sm:$0xf]
    %v2729 = vld [vmem:[#allocation2 + $0x2a4] sm:$0xf]
    %v2730 = vld [vmem:[#allocation2 + $0x2a8] sm:$0xf]
    %v2731 = vld [vmem:[#allocation2 + $0x2ac] sm:$0xf]
    %v2732 = vld [vmem:[#allocation2 + $0x2b0] sm:$0xf]
    %v2733 = vld [vmem:[#allocation2 + $0x2b4] sm:$0xf]
    %v2734 = vld [vmem:[#allocation2 + $0x2b8] sm:$0xf]
    %v2735 = vld [vmem:[#allocation2 + $0x2bc] sm:$0xf]
    %v2736 = vld [vmem:[#allocation2 + $0x2c0] sm:$0xf]
    %v2737 = vld [vmem:[#allocation2 + $0x2c4] sm:$0xf]
    %v2738 = vld [vmem:[#allocation2 + $0x2c8] sm:$0xf]
    %v2739 = vld [vmem:[#allocation2 + $0x2cc] sm:$0xf]
    %v2740 = vld [vmem:[#allocation2 + $0x2d0] sm:$0xf]
    %v2741 = vld [vmem:[#allocation2 + $0x2d4] sm:$0xf]
    %v2742 = vld [vmem:[#allocation2 + $0x2d8] sm:$0xf]
    %v2743 = vld [vmem:[#allocation2 + $0x2dc] sm:$0xf]
    %v2744 = vld [vmem:[#allocation2 + $0x2e0] sm:$0xf]
    %v2745 = vld [vmem:[#allocation2 + $0x2e4] sm:$0xf]
    %v2746 = vld [vmem:[#allocation2 + $0x2e8] sm:$0xf]
    %v2747 = vld [vmem:[#allocation2 + $0x2ec] sm:$0xf]
    %v2748 = vld [vmem:[#allocation2 + $0x2f0] sm:$0xf]
    %v2749 = vld [vmem:[#allocation2 + $0x2f4] sm:$0xf]
    %v2750 = vld [vmem:[#allocation2 + $0x2f8] sm:$0xf]
    %v2751 = vld [vmem:[#allocation2 + $0x2fc] sm:$0xf]
    %v2752 = vld [vmem:[#allocation2 + $0x300] sm:$0xf]
    %v2753 = vld [vmem:[#allocation2 + $0x304] sm:$0xf]
    %v2754 = vld [vmem:[#allocation2 + $0x308] sm:$0xf]
    %v2755 = vld [vmem:[#allocation2 + $0x30c] sm:$0xf]
    %v2756 = vld [vmem:[#allocation2 + $0x310] sm:$0xf]
    %v2757 = vld [vmem:[#allocation2 + $0x314] sm:$0xf]
    %v2758 = vld [vmem:[#allocation2 + $0x318] sm:$0xf]
    %v2759 = vld [vmem:[#allocation2 + $0x31c] sm:$0xf]
    %v2760 = vld [vmem:[#allocation2 + $0x320] sm:$0xf]
    %v2761 = vld [vmem:[#allocation2 + $0x324] sm:$0xf]
    %v2762 = vld [vmem:[#allocation2 + $0x328] sm:$0xf]
    %v2763 = vld [vmem:[#allocation2 + $0x32c] sm:$0xf]
    %v2764 = vld [vmem:[#allocation2 + $0x330] sm:$0xf]
    %v2765 = vld [vmem:[#allocation2 + $0x334] sm:$0xf]
    %v2766 = vld [vmem:[#allocation2 + $0x338] sm:$0xf]
    %v2767 = vld [vmem:[#allocation2 + $0x33c] sm:$0xf]
    %v2768 = vld [vmem:[#allocation2 + $0x340] sm:$0xf]
    %v2769 = vld [vmem:[#allocation2 + $0x344] sm:$0xf]
    %v2770 = vld [vmem:[#allocation2 + $0x348] sm:$0xf]
    %v2771 = vld [vmem:[#allocation2 + $0x34c] sm:$0xf]
    %v2772 = vld [vmem:[#allocation2 + $0x350] sm:$0xf]
    %v2773 = vld [vmem:[#allocation2 + $0x354] sm:$0xf]
    %v2774 = vld [vmem:[#allocation2 + $0x358] sm:$0xf]
    %v2775 = vld [vmem:[#allocation2 + $0x35c] sm:$0xf]
    %v2776 = vld [vmem:[#allocation2 + $0x360] sm:$0xf]
    %v2777 = vld [vmem:[#allocation2 + $0x364] sm:$0xf]
    %v2778 = vld [vmem:[#allocation2 + $0x368] sm:$0xf]
    %v2779 = vld [vmem:[#allocation2 + $0x36c] sm:$0xf]
    %v2780 = vld [vmem:[#allocation2 + $0x370] sm:$0xf]
    %v2781 = vld [vmem:[#allocation2 + $0x374] sm:$0xf]
    %v2782 = vld [vmem:[#allocation2 + $0x378] sm:$0xf]
    %v2783 = vld [vmem:[#allocation2 + $0x37c] sm:$0xf]
    %v2784 = vld [vmem:[#allocation2 + $0x380] sm:$0xf]
    %v2785 = vld [vmem:[#allocation2 + $0x384] sm:$0xf]
    %v2786 = vld [vmem:[#allocation2 + $0x388] sm:$0xf]
    %v2787 = vld [vmem:[#allocation2 + $0x38c] sm:$0xf]
    %v2788 = vld [vmem:[#allocation2 + $0x390] sm:$0xf]
    %v2789 = vld [vmem:[#allocation2 + $0x394] sm:$0xf]
    %v2790 = vld [vmem:[#allocation2 + $0x398] sm:$0xf]
    %v2791 = vld [vmem:[#allocation2 + $0x39c] sm:$0xf]
    %v2792 = vld [vmem:[#allocation2 + $0x3a0] sm:$0xf]
    %v2793 = vld [vmem:[#allocation2 + $0x3a4] sm:$0xf]
    %v2794 = vld [vmem:[#allocation2 + $0x3a8] sm:$0xf]
    %v2795 = vld [vmem:[#allocation2 + $0x3ac] sm:$0xf]
    %v2796 = vld [vmem:[#allocation2 + $0x3b0] sm:$0xf]
    %v2797 = vld [vmem:[#allocation2 + $0x3b4] sm:$0xf]
    %v2798 = vld [vmem:[#allocation2 + $0x3b8] sm:$0xf]
    %v2799 = vld [vmem:[#allocation2 + $0x3bc] sm:$0xf]
    %v2800 = vld [vmem:[#allocation2 + $0x3c0] sm:$0xf]
    %v2801 = vld [vmem:[#allocation2 + $0x3c4] sm:$0xf]
    %v2802 = vld [vmem:[#allocation2 + $0x3c8] sm:$0xf]
    %v2803 = vld [vmem:[#allocation2 + $0x3cc] sm:$0xf]
    %v2804 = vld [vmem:[#allocation2 + $0x3d0] sm:$0xf]
    %v2805 = vld [vmem:[#allocation2 + $0x3d4] sm:$0xf]
    %v2806 = vld [vmem:[#allocation2 + $0x3d8] sm:$0xf]
    %v2807 = vld [vmem:[#allocation2 + $0x3dc] sm:$0xf]
    %v2808 = vld [vmem:[#allocation2 + $0x3e0] sm:$0xf]
    %v2809 = vld [vmem:[#allocation2 + $0x3e4] sm:$0xf]
    %v2810 = vld [vmem:[#allocation2 + $0x3e8] sm:$0xf]
    %v2811 = vld [vmem:[#allocation2 + $0x3ec] sm:$0xf]
    %v2812 = vld [vmem:[#allocation2 + $0x3f0] sm:$0xf]
    %v2813 = vld [vmem:[#allocation2 + $0x3f4] sm:$0xf]
    %v2814 = vld [vmem:[#allocation2 + $0x3f8] sm:$0xf]
    %v2815 = vld [vmem:[#allocation2 + $0x3fc] sm:$0xf]
    %v2816 = vld [vmem:[%s7] sm:$0x1]
    %v3073 = vunpack.c.l.b16 %v2560
    %v3074 = vunpack.c.l.b16 %v2561
    %v3075 = vunpack.c.l.b16 %v2562
    %v3076 = vunpack.c.l.b16 %v2563
    %v3077 = vunpack.c.l.b16 %v2564
    %v3078 = vunpack.c.l.b16 %v2565
    %v3079 = vunpack.c.l.b16 %v2566
    %v3080 = vunpack.c.l.b16 %v2567
    %v3081 = vunpack.c.l.b16 %v2568
    %v3082 = vunpack.c.l.b16 %v2569
    %v3083 = vunpack.c.l.b16 %v2570
    %v3084 = vunpack.c.l.b16 %v2571
    %v3085 = vunpack.c.l.b16 %v2572
    %v3086 = vunpack.c.l.b16 %v2573
    %v3087 = vunpack.c.l.b16 %v2574
    %v3088 = vunpack.c.l.b16 %v2575
    %v3089 = vunpack.c.l.b16 %v2576
    %v3090 = vunpack.c.l.b16 %v2577
    %v3091 = vunpack.c.l.b16 %v2578
    %v3092 = vunpack.c.l.b16 %v2579
    %v3093 = vunpack.c.l.b16 %v2580
    %v3094 = vunpack.c.l.b16 %v2581
    %v3095 = vunpack.c.l.b16 %v2582
    %v3096 = vunpack.c.l.b16 %v2583
    %v3097 = vunpack.c.l.b16 %v2584
    %v3098 = vunpack.c.l.b16 %v2585
    %v3099 = vunpack.c.l.b16 %v2586
    %v3100 = vunpack.c.l.b16 %v2587
    %v3101 = vunpack.c.l.b16 %v2588
    %v3102 = vunpack.c.l.b16 %v2589
    %v3103 = vunpack.c.l.b16 %v2590
    %v3104 = vunpack.c.l.b16 %v2591
    %v3105 = vunpack.c.l.b16 %v2592
    %v3106 = vunpack.c.l.b16 %v2593
    %v3107 = vunpack.c.l.b16 %v2594
    %v3108 = vunpack.c.l.b16 %v2595
    %v3109 = vunpack.c.l.b16 %v2596
    %v3110 = vunpack.c.l.b16 %v2597
    %v3111 = vunpack.c.l.b16 %v2598
    %v3112 = vunpack.c.l.b16 %v2599
    %v3113 = vunpack.c.l.b16 %v2600
    %v3114 = vunpack.c.l.b16 %v2601
    %v3115 = vunpack.c.l.b16 %v2602
    %v3116 = vunpack.c.l.b16 %v2603
    %v3117 = vunpack.c.l.b16 %v2604
    %v3118 = vunpack.c.l.b16 %v2605
    %v3119 = vunpack.c.l.b16 %v2606
    %v3120 = vunpack.c.l.b16 %v2607
    %v3121 = vunpack.c.l.b16 %v2608
    %v3122 = vunpack.c.l.b16 %v2609
    %v3123 = vunpack.c.l.b16 %v2610
    %v3124 = vunpack.c.l.b16 %v2611
    %v3125 = vunpack.c.l.b16 %v2612
    %v3126 = vunpack.c.l.b16 %v2613
    %v3127 = vunpack.c.l.b16 %v2614
    %v3128 = vunpack.c.l.b16 %v2615
    %v3129 = vunpack.c.l.b16 %v2616
    %v3130 = vunpack.c.l.b16 %v2617
    %v3131 = vunpack.c.l.b16 %v2618
    %v3132 = vunpack.c.l.b16 %v2619
    %v3133 = vunpack.c.l.b16 %v2620
    %v3134 = vunpack.c.l.b16 %v2621
    %v3135 = vunpack.c.l.b16 %v2622
    %v3136 = vunpack.c.l.b16 %v2623
    %v3137 = vunpack.c.l.b16 %v2624
    %v3138 = vunpack.c.l.b16 %v2625
    %v3139 = vunpack.c.l.b16 %v2626
    %v3140 = vunpack.c.l.b16 %v2627
    %v3141 = vunpack.c.l.b16 %v2628
    %v3142 = vunpack.c.l.b16 %v2629
    %v3143 = vunpack.c.l.b16 %v2630
    %v3144 = vunpack.c.l.b16 %v2631
    %v3145 = vunpack.c.l.b16 %v2632
    %v3146 = vunpack.c.l.b16 %v2633
    %v3147 = vunpack.c.l.b16 %v2634
    %v3148 = vunpack.c.l.b16 %v2635
    %v3149 = vunpack.c.l.b16 %v2636
    %v3150 = vunpack.c.l.b16 %v2637
    %v3151 = vunpack.c.l.b16 %v2638
    %v3152 = vunpack.c.l.b16 %v2639
    %v3153 = vunpack.c.l.b16 %v2640
    %v3154 = vunpack.c.l.b16 %v2641
    %v3155 = vunpack.c.l.b16 %v2642
    %v3156 = vunpack.c.l.b16 %v2643
    %v3157 = vunpack.c.l.b16 %v2644
    %v3158 = vunpack.c.l.b16 %v2645
    %v3159 = vunpack.c.l.b16 %v2646
    %v3160 = vunpack.c.l.b16 %v2647
    %v3161 = vunpack.c.l.b16 %v2648
    %v3162 = vunpack.c.l.b16 %v2649
    %v3163 = vunpack.c.l.b16 %v2650
    %v3164 = vunpack.c.l.b16 %v2651
    %v3165 = vunpack.c.l.b16 %v2652
    %v3166 = vunpack.c.l.b16 %v2653
    %v3167 = vunpack.c.l.b16 %v2654
    %v3168 = vunpack.c.l.b16 %v2655
    %v3169 = vunpack.c.l.b16 %v2656
    %v3170 = vunpack.c.l.b16 %v2657
    %v3171 = vunpack.c.l.b16 %v2658
    %v3172 = vunpack.c.l.b16 %v2659
    %v3173 = vunpack.c.l.b16 %v2660
    %v3174 = vunpack.c.l.b16 %v2661
    %v3175 = vunpack.c.l.b16 %v2662
    %v3176 = vunpack.c.l.b16 %v2663
    %v3177 = vunpack.c.l.b16 %v2664
    %v3178 = vunpack.c.l.b16 %v2665
    %v3179 = vunpack.c.l.b16 %v2666
    %v3180 = vunpack.c.l.b16 %v2667
    %v3181 = vunpack.c.l.b16 %v2668
    %v3182 = vunpack.c.l.b16 %v2669
    %v3183 = vunpack.c.l.b16 %v2670
    %v3184 = vunpack.c.l.b16 %v2671
    %v3185 = vunpack.c.l.b16 %v2672
    %v3186 = vunpack.c.l.b16 %v2673
    %v3187 = vunpack.c.l.b16 %v2674
    %v3188 = vunpack.c.l.b16 %v2675
    %v3189 = vunpack.c.l.b16 %v2676
    %v3190 = vunpack.c.l.b16 %v2677
    %v3191 = vunpack.c.l.b16 %v2678
    %v3192 = vunpack.c.l.b16 %v2679
    %v3193 = vunpack.c.l.b16 %v2680
    %v3194 = vunpack.c.l.b16 %v2681
    %v3195 = vunpack.c.l.b16 %v2682
    %v3196 = vunpack.c.l.b16 %v2683
    %v3197 = vunpack.c.l.b16 %v2684
    %v3198 = vunpack.c.l.b16 %v2685
    %v3199 = vunpack.c.l.b16 %v2686
    %v3200 = vunpack.c.l.b16 %v2687
    %v3201 = vunpack.c.l.b16 %v2688
    %v3202 = vunpack.c.l.b16 %v2689
    %v3203 = vunpack.c.l.b16 %v2690
    %v3204 = vunpack.c.l.b16 %v2691
    %v3205 = vunpack.c.l.b16 %v2692
    %v3206 = vunpack.c.l.b16 %v2693
    %v3207 = vunpack.c.l.b16 %v2694
    %v3208 = vunpack.c.l.b16 %v2695
    %v3209 = vunpack.c.l.b16 %v2696
    %v3210 = vunpack.c.l.b16 %v2697
    %v3211 = vunpack.c.l.b16 %v2698
    %v3212 = vunpack.c.l.b16 %v2699
    %v3213 = vunpack.c.l.b16 %v2700
    %v3214 = vunpack.c.l.b16 %v2701
    %v3215 = vunpack.c.l.b16 %v2702
    %v3216 = vunpack.c.l.b16 %v2703
    %v3217 = vunpack.c.l.b16 %v2704
    %v3218 = vunpack.c.l.b16 %v2705
    %v3219 = vunpack.c.l.b16 %v2706
    %v3220 = vunpack.c.l.b16 %v2707
    %v3221 = vunpack.c.l.b16 %v2708
    %v3222 = vunpack.c.l.b16 %v2709
    %v3223 = vunpack.c.l.b16 %v2710
    %v3224 = vunpack.c.l.b16 %v2711
    %v3225 = vunpack.c.l.b16 %v2712
    %v3226 = vunpack.c.l.b16 %v2713
    %v3227 = vunpack.c.l.b16 %v2714
    %v3228 = vunpack.c.l.b16 %v2715
    %v3229 = vunpack.c.l.b16 %v2716
    %v3230 = vunpack.c.l.b16 %v2717
    %v3231 = vunpack.c.l.b16 %v2718
    %v3232 = vunpack.c.l.b16 %v2719
    %v3233 = vunpack.c.l.b16 %v2720
    %v3234 = vunpack.c.l.b16 %v2721
    %v3235 = vunpack.c.l.b16 %v2722
    %v3236 = vunpack.c.l.b16 %v2723
    %v3237 = vunpack.c.l.b16 %v2724
    %v3238 = vunpack.c.l.b16 %v2725
    %v3239 = vunpack.c.l.b16 %v2726
    %v3240 = vunpack.c.l.b16 %v2727
    %v3241 = vunpack.c.l.b16 %v2728
    %v3242 = vunpack.c.l.b16 %v2729
    %v3243 = vunpack.c.l.b16 %v2730
    %v3244 = vunpack.c.l.b16 %v2731
    %v3245 = vunpack.c.l.b16 %v2732
    %v3246 = vunpack.c.l.b16 %v2733
    %v3247 = vunpack.c.l.b16 %v2734
    %v3248 = vunpack.c.l.b16 %v2735
    %v3249 = vunpack.c.l.b16 %v2736
    %v3250 = vunpack.c.l.b16 %v2737
    %v3251 = vunpack.c.l.b16 %v2738
    %v3252 = vunpack.c.l.b16 %v2739
    %v3253 = vunpack.c.l.b16 %v2740
    %v3254 = vunpack.c.l.b16 %v2741
    %v3255 = vunpack.c.l.b16 %v2742
    %v3256 = vunpack.c.l.b16 %v2743
    %v3257 = vunpack.c.l.b16 %v2744
    %v3258 = vunpack.c.l.b16 %v2745
    %v3259 = vunpack.c.l.b16 %v2746
    %v3260 = vunpack.c.l.b16 %v2747
    %v3261 = vunpack.c.l.b16 %v2748
    %v3262 = vunpack.c.l.b16 %v2749
    %v3263 = vunpack.c.l.b16 %v2750
    %v3264 = vunpack.c.l.b16 %v2751
    %v3265 = vunpack.c.l.b16 %v2752
    %v3266 = vunpack.c.l.b16 %v2753
    %v3267 = vunpack.c.l.b16 %v2754
    %v3268 = vunpack.c.l.b16 %v2755
    %v3269 = vunpack.c.l.b16 %v2756
    %v3270 = vunpack.c.l.b16 %v2757
    %v3271 = vunpack.c.l.b16 %v2758
    %v3272 = vunpack.c.l.b16 %v2759
    %v3273 = vunpack.c.l.b16 %v2760
    %v3274 = vunpack.c.l.b16 %v2761
    %v3275 = vunpack.c.l.b16 %v2762
    %v3276 = vunpack.c.l.b16 %v2763
    %v3277 = vunpack.c.l.b16 %v2764
    %v3278 = vunpack.c.l.b16 %v2765
    %v3279 = vunpack.c.l.b16 %v2766
    %v3280 = vunpack.c.l.b16 %v2767
    %v3281 = vunpack.c.l.b16 %v2768
    %v3282 = vunpack.c.l.b16 %v2769
    %v3283 = vunpack.c.l.b16 %v2770
    %v3284 = vunpack.c.l.b16 %v2771
    %v3285 = vunpack.c.l.b16 %v2772
    %v3286 = vunpack.c.l.b16 %v2773
    %v3287 = vunpack.c.l.b16 %v2774
    %v3288 = vunpack.c.l.b16 %v2775
    %v3289 = vunpack.c.l.b16 %v2776
    %v3290 = vunpack.c.l.b16 %v2777
    %v3291 = vunpack.c.l.b16 %v2778
    %v3292 = vunpack.c.l.b16 %v2779
    %v3293 = vunpack.c.l.b16 %v2780
    %v3294 = vunpack.c.l.b16 %v2781
    %v3295 = vunpack.c.l.b16 %v2782
    %v3296 = vunpack.c.l.b16 %v2783
    %v3297 = vunpack.c.l.b16 %v2784
    %v3298 = vunpack.c.l.b16 %v2785
    %v3299 = vunpack.c.l.b16 %v2786
    %v3300 = vunpack.c.l.b16 %v2787
    %v3301 = vunpack.c.l.b16 %v2788
    %v3302 = vunpack.c.l.b16 %v2789
    %v3303 = vunpack.c.l.b16 %v2790
    %v3304 = vunpack.c.l.b16 %v2791
    %v3305 = vunpack.c.l.b16 %v2792
    %v3306 = vunpack.c.l.b16 %v2793
    %v3307 = vunpack.c.l.b16 %v2794
    %v3308 = vunpack.c.l.b16 %v2795
    %v3309 = vunpack.c.l.b16 %v2796
    %v3310 = vunpack.c.l.b16 %v2797
    %v3311 = vunpack.c.l.b16 %v2798
    %v3312 = vunpack.c.l.b16 %v2799
    %v3313 = vunpack.c.l.b16 %v2800
    %v3314 = vunpack.c.l.b16 %v2801
    %v3315 = vunpack.c.l.b16 %v2802
    %v3316 = vunpack.c.l.b16 %v2803
    %v3317 = vunpack.c.l.b16 %v2804
    %v3318 = vunpack.c.l.b16 %v2805
    %v3319 = vunpack.c.l.b16 %v2806
    %v3320 = vunpack.c.l.b16 %v2807
    %v3321 = vunpack.c.l.b16 %v2808
    %v3322 = vunpack.c.l.b16 %v2809
    %v3323 = vunpack.c.l.b16 %v2810
    %v3324 = vunpack.c.l.b16 %v2811
    %v3325 = vunpack.c.l.b16 %v2812
    %v3326 = vunpack.c.l.b16 %v2813
    %v3327 = vunpack.c.l.b16 %v2814
    %v3328 = vunpack.c.l.b16 %v2815
    %v3329 = vpack.c.b16 %v3074, %v3073
    %v3330 = vpack.c.b16 %v3076, %v3075
    %v3331 = vpack.c.b16 %v3078, %v3077
    %v3332 = vpack.c.b16 %v3080, %v3079
    %v3333 = vpack.c.b16 %v3082, %v3081
    %v3334 = vpack.c.b16 %v3084, %v3083
    %v3335 = vpack.c.b16 %v3086, %v3085
    %v3336 = vpack.c.b16 %v3088, %v3087
    %v3337 = vpack.c.b16 %v3090, %v3089
    %v3338 = vpack.c.b16 %v3092, %v3091
    %v3339 = vpack.c.b16 %v3094, %v3093
    %v3340 = vpack.c.b16 %v3096, %v3095
    %v3341 = vpack.c.b16 %v3098, %v3097
    %v3342 = vpack.c.b16 %v3100, %v3099
    %v3343 = vpack.c.b16 %v3102, %v3101
    %v3344 = vpack.c.b16 %v3104, %v3103
    %v3345 = vpack.c.b16 %v3106, %v3105
    %v3346 = vpack.c.b16 %v3108, %v3107
    %v3347 = vpack.c.b16 %v3110, %v3109
    %v3348 = vpack.c.b16 %v3112, %v3111
    %v3349 = vpack.c.b16 %v3114, %v3113
    %v3350 = vpack.c.b16 %v3116, %v3115
    %v3351 = vpack.c.b16 %v3118, %v3117
    %v3352 = vpack.c.b16 %v3120, %v3119
    %v3353 = vpack.c.b16 %v3122, %v3121
    %v3354 = vpack.c.b16 %v3124, %v3123
    %v3355 = vpack.c.b16 %v3126, %v3125
    %v3356 = vpack.c.b16 %v3128, %v3127
    %v3357 = vpack.c.b16 %v3130, %v3129
    %v3358 = vpack.c.b16 %v3132, %v3131
    %v3359 = vpack.c.b16 %v3134, %v3133
    %v3360 = vpack.c.b16 %v3136, %v3135
    %v3361 = vpack.c.b16 %v3138, %v3137
    %v3362 = vpack.c.b16 %v3140, %v3139
    %v3363 = vpack.c.b16 %v3142, %v3141
    %v3364 = vpack.c.b16 %v3144, %v3143
    %v3365 = vpack.c.b16 %v3146, %v3145
    %v3366 = vpack.c.b16 %v3148, %v3147
    %v3367 = vpack.c.b16 %v3150, %v3149
    %v3368 = vpack.c.b16 %v3152, %v3151
    %v3369 = vpack.c.b16 %v3154, %v3153
    %v3370 = vpack.c.b16 %v3156, %v3155
    %v3371 = vpack.c.b16 %v3158, %v3157
    %v3372 = vpack.c.b16 %v3160, %v3159
    %v3373 = vpack.c.b16 %v3162, %v3161
    %v3374 = vpack.c.b16 %v3164, %v3163
    %v3375 = vpack.c.b16 %v3166, %v3165
    %v3376 = vpack.c.b16 %v3168, %v3167
    %v3377 = vpack.c.b16 %v3170, %v3169
    %v3378 = vpack.c.b16 %v3172, %v3171
    %v3379 = vpack.c.b16 %v3174, %v3173
    %v3380 = vpack.c.b16 %v3176, %v3175
    %v3381 = vpack.c.b16 %v3178, %v3177
    %v3382 = vpack.c.b16 %v3180, %v3179
    %v3383 = vpack.c.b16 %v3182, %v3181
    %v3384 = vpack.c.b16 %v3184, %v3183
    %v3385 = vpack.c.b16 %v3186, %v3185
    %v3386 = vpack.c.b16 %v3188, %v3187
    %v3387 = vpack.c.b16 %v3190, %v3189
    %v3388 = vpack.c.b16 %v3192, %v3191
    %v3389 = vpack.c.b16 %v3194, %v3193
    %v3390 = vpack.c.b16 %v3196, %v3195
    %v3391 = vpack.c.b16 %v3198, %v3197
    %v3392 = vpack.c.b16 %v3200, %v3199
    %v3393 = vpack.c.b16 %v3202, %v3201
    %v3394 = vpack.c.b16 %v3204, %v3203
    %v3395 = vpack.c.b16 %v3206, %v3205
    %v3396 = vpack.c.b16 %v3208, %v3207
    %v3397 = vpack.c.b16 %v3210, %v3209
    %v3398 = vpack.c.b16 %v3212, %v3211
    %v3399 = vpack.c.b16 %v3214, %v3213
    %v3400 = vpack.c.b16 %v3216, %v3215
    %v3401 = vpack.c.b16 %v3218, %v3217
    %v3402 = vpack.c.b16 %v3220, %v3219
    %v3403 = vpack.c.b16 %v3222, %v3221
    %v3404 = vpack.c.b16 %v3224, %v3223
    %v3405 = vpack.c.b16 %v3226, %v3225
    %v3406 = vpack.c.b16 %v3228, %v3227
    %v3407 = vpack.c.b16 %v3230, %v3229
    %v3408 = vpack.c.b16 %v3232, %v3231
    %v3409 = vpack.c.b16 %v3234, %v3233
    %v3410 = vpack.c.b16 %v3236, %v3235
    %v3411 = vpack.c.b16 %v3238, %v3237
    %v3412 = vpack.c.b16 %v3240, %v3239
    %v3413 = vpack.c.b16 %v3242, %v3241
    %v3414 = vpack.c.b16 %v3244, %v3243
    %v3415 = vpack.c.b16 %v3246, %v3245
    %v3416 = vpack.c.b16 %v3248, %v3247
    %v3417 = vpack.c.b16 %v3250, %v3249
    %v3418 = vpack.c.b16 %v3252, %v3251
    %v3419 = vpack.c.b16 %v3254, %v3253
    %v3420 = vpack.c.b16 %v3256, %v3255
    %v3421 = vpack.c.b16 %v3258, %v3257
    %v3422 = vpack.c.b16 %v3260, %v3259
    %v3423 = vpack.c.b16 %v3262, %v3261
    %v3424 = vpack.c.b16 %v3264, %v3263
    %v3425 = vpack.c.b16 %v3266, %v3265
    %v3426 = vpack.c.b16 %v3268, %v3267
    %v3427 = vpack.c.b16 %v3270, %v3269
    %v3428 = vpack.c.b16 %v3272, %v3271
    %v3429 = vpack.c.b16 %v3274, %v3273
    %v3430 = vpack.c.b16 %v3276, %v3275
    %v3431 = vpack.c.b16 %v3278, %v3277
    %v3432 = vpack.c.b16 %v3280, %v3279
    %v3433 = vpack.c.b16 %v3282, %v3281
    %v3434 = vpack.c.b16 %v3284, %v3283
    %v3435 = vpack.c.b16 %v3286, %v3285
    %v3436 = vpack.c.b16 %v3288, %v3287
    %v3437 = vpack.c.b16 %v3290, %v3289
    %v3438 = vpack.c.b16 %v3292, %v3291
    %v3439 = vpack.c.b16 %v3294, %v3293
    %v3440 = vpack.c.b16 %v3296, %v3295
    %v3441 = vpack.c.b16 %v3298, %v3297
    %v3442 = vpack.c.b16 %v3300, %v3299
    %v3443 = vpack.c.b16 %v3302, %v3301
    %v3444 = vpack.c.b16 %v3304, %v3303
    %v3445 = vpack.c.b16 %v3306, %v3305
    %v3446 = vpack.c.b16 %v3308, %v3307
    %v3447 = vpack.c.b16 %v3310, %v3309
    %v3448 = vpack.c.b16 %v3312, %v3311
    %v3449 = vpack.c.b16 %v3314, %v3313
    %v3450 = vpack.c.b16 %v3316, %v3315
    %v3451 = vpack.c.b16 %v3318, %v3317
    %v3452 = vpack.c.b16 %v3320, %v3319
    %v3453 = vpack.c.b16 %v3322, %v3321
    %v3454 = vpack.c.b16 %v3324, %v3323
    %v3455 = vpack.c.b16 %v3326, %v3325
    %v3456 = vpack.c.b16 %v3328, %v3327
    %3585 = vmatprep.subr.bf16.mxu0 0
    %3586 = vmatpush1.bf16.msra.mxu0 %v3329
    %3587 = vmatprep.subr.bf16.mxu0 0
    %3588 = vmatpush1.bf16.msra.mxu0 %v3330
    %3589 = vmatprep.subr.bf16.mxu0 0
    %3590 = vmatpush1.bf16.msra.mxu0 %v3331
    %3591 = vmatprep.subr.bf16.mxu0 0
    %3592 = vmatpush1.bf16.msra.mxu0 %v3332
    %3593 = vmatprep.subr.bf16.mxu0 0
    %3594 = vmatpush1.bf16.msra.mxu0 %v3333
    %3595 = vmatprep.subr.bf16.mxu0 0
    %3596 = vmatpush1.bf16.msra.mxu0 %v3334
    %3597 = vmatprep.subr.bf16.mxu0 0
    %3598 = vmatpush1.bf16.msra.mxu0 %v3335
    %3599 = vmatprep.subr.bf16.mxu0 0
    %3600 = vmatpush1.bf16.msra.mxu0 %v3336
    %3601 = vmatprep.subr.bf16.mxu0 0
    %3602 = vmatpush1.bf16.msra.mxu0 %v3337
    %3603 = vmatprep.subr.bf16.mxu0 0
    %3604 = vmatpush1.bf16.msra.mxu0 %v3338
    %3605 = vmatprep.subr.bf16.mxu0 0
    %3606 = vmatpush1.bf16.msra.mxu0 %v3339
    %3607 = vmatprep.subr.bf16.mxu0 0
    %3608 = vmatpush1.bf16.msra.mxu0 %v3340
    %3609 = vmatprep.subr.bf16.mxu0 0
    %3610 = vmatpush1.bf16.msra.mxu0 %v3341
    %3611 = vmatprep.subr.bf16.mxu0 0
    %3612 = vmatpush1.bf16.msra.mxu0 %v3342
    %3613 = vmatprep.subr.bf16.mxu0 0
    %3614 = vmatpush1.bf16.msra.mxu0 %v3343
    %3615 = vmatprep.subr.bf16.mxu0 0
    %3616 = vmatpush1.bf16.msra.mxu0 %v3344
    %3617 = vmatprep.mubr.bf16.mxu0 %v2545
    %3618 = vmatmul.mubr.bf16.gmra.mrb[0].mxu0 %v2544
    %v3619 = vpop.f32.mrb[0].mxu0
    %v3620 = vadd.f32 %v2816, %v3619
    %v3621 = vpop.f32.mrb[0].mxu0
    %v3622 = vpop.f32.mrb[0].mxu0
    %v3623 = vpop.f32.mrb[0].mxu0
    %3624 = vdwg.mxu0
    %3625 = vmatprep.subr.bf16.mxu0 0
    %3626 = vmatpush1.bf16.msra.mxu0 %v3345
    %3627 = vmatprep.subr.bf16.mxu0 0
    %3628 = vmatpush1.bf16.msra.mxu0 %v3346
    %3629 = vmatprep.subr.bf16.mxu0 0
    %3630 = vmatpush1.bf16.msra.mxu0 %v3347
    %3631 = vmatprep.subr.bf16.mxu0 0
    %3632 = vmatpush1.bf16.msra.mxu0 %v3348
    %3633 = vmatprep.subr.bf16.mxu0 0
    %3634 = vmatpush1.bf16.msra.mxu0 %v3349
    %3635 = vmatprep.subr.bf16.mxu0 0
    %3636 = vmatpush1.bf16.msra.mxu0 %v3350
    %3637 = vmatprep.subr.bf16.mxu0 0
    %3638 = vmatpush1.bf16.msra.mxu0 %v3351
    %3639 = vmatprep.subr.bf16.mxu0 0
    %3640 = vmatpush1.bf16.msra.mxu0 %v3352
    %3641 = vmatprep.subr.bf16.mxu0 0
    %3642 = vmatpush1.bf16.msra.mxu0 %v3353
    %3643 = vmatprep.subr.bf16.mxu0 0
    %3644 = vmatpush1.bf16.msra.mxu0 %v3354
    %3645 = vmatprep.subr.bf16.mxu0 0
    %3646 = vmatpush1.bf16.msra.mxu0 %v3355
    %3647 = vmatprep.subr.bf16.mxu0 0
    %3648 = vmatpush1.bf16.msra.mxu0 %v3356
    %3649 = vmatprep.subr.bf16.mxu0 0
    %3650 = vmatpush1.bf16.msra.mxu0 %v3357
    %3651 = vmatprep.subr.bf16.mxu0 0
    %3652 = vmatpush1.bf16.msra.mxu0 %v3358
    %3653 = vmatprep.subr.bf16.mxu0 0
    %3654 = vmatpush1.bf16.msra.mxu0 %v3359
    %3655 = vmatprep.subr.bf16.mxu0 0
    %3656 = vmatpush1.bf16.msra.mxu0 %v3360
    %3657 = vmatprep.mubr.bf16.mxu0 %v2547
    %3658 = vmatmul.mubr.bf16.gmra.mrb[0].mxu0 %v2546
    %v3659 = vpop.f32.mrb[0].mxu0
    %v3660 = vadd.f32 %v3620, %v3659
    %v3661 = vpop.f32.mrb[0].mxu0
    %v3662 = vpop.f32.mrb[0].mxu0
    %v3663 = vpop.f32.mrb[0].mxu0
    %3664 = vdwg.mxu0
    %3665 = vmatprep.subr.bf16.mxu0 0
    %3666 = vmatpush1.bf16.msra.mxu0 %v3361
    %3667 = vmatprep.subr.bf16.mxu0 0
    %3668 = vmatpush1.bf16.msra.mxu0 %v3362
    %3669 = vmatprep.subr.bf16.mxu0 0
    %3670 = vmatpush1.bf16.msra.mxu0 %v3363
    %3671 = vmatprep.subr.bf16.mxu0 0
    %3672 = vmatpush1.bf16.msra.mxu0 %v3364
    %3673 = vmatprep.subr.bf16.mxu0 0
    %3674 = vmatpush1.bf16.msra.mxu0 %v3365
    %3675 = vmatprep.subr.bf16.mxu0 0
    %3676 = vmatpush1.bf16.msra.mxu0 %v3366
    %3677 = vmatprep.subr.bf16.mxu0 0
    %3678 = vmatpush1.bf16.msra.mxu0 %v3367
    %3679 = vmatprep.subr.bf16.mxu0 0
    %3680 = vmatpush1.bf16.msra.mxu0 %v3368
    %3681 = vmatprep.subr.bf16.mxu0 0
    %3682 = vmatpush1.bf16.msra.mxu0 %v3369
    %3683 = vmatprep.subr.bf16.mxu0 0
    %3684 = vmatpush1.bf16.msra.mxu0 %v3370
    %3685 = vmatprep.subr.bf16.mxu0 0
    %3686 = vmatpush1.bf16.msra.mxu0 %v3371
    %3687 = vmatprep.subr.bf16.mxu0 0
    %3688 = vmatpush1.bf16.msra.mxu0 %v3372
    %3689 = vmatprep.subr.bf16.mxu0 0
    %3690 = vmatpush1.bf16.msra.mxu0 %v3373
    %3691 = vmatprep.subr.bf16.mxu0 0
    %3692 = vmatpush1.bf16.msra.mxu0 %v3374
    %3693 = vmatprep.subr.bf16.mxu0 0
    %3694 = vmatpush1.bf16.msra.mxu0 %v3375
    %3695 = vmatprep.subr.bf16.mxu0 0
    %3696 = vmatpush1.bf16.msra.mxu0 %v3376
    %3697 = vmatprep.mubr.bf16.mxu0 %v2549
    %3698 = vmatmul.mubr.bf16.gmra.mrb[0].mxu0 %v2548
    %v3699 = vpop.f32.mrb[0].mxu0
    %v3700 = vadd.f32 %v3660, %v3699
    %v3701 = vpop.f32.mrb[0].mxu0
    %v3702 = vpop.f32.mrb[0].mxu0
    %v3703 = vpop.f32.mrb[0].mxu0
    %3704 = vdwg.mxu0
    %3705 = vmatprep.subr.bf16.mxu0 0
    %3706 = vmatpush1.bf16.msra.mxu0 %v3377
    %3707 = vmatprep.subr.bf16.mxu0 0
    %3708 = vmatpush1.bf16.msra.mxu0 %v3378
    %3709 = vmatprep.subr.bf16.mxu0 0
    %3710 = vmatpush1.bf16.msra.mxu0 %v3379
    %3711 = vmatprep.subr.bf16.mxu0 0
    %3712 = vmatpush1.bf16.msra.mxu0 %v3380
    %3713 = vmatprep.subr.bf16.mxu0 0
    %3714 = vmatpush1.bf16.msra.mxu0 %v3381
    %3715 = vmatprep.subr.bf16.mxu0 0
    %3716 = vmatpush1.bf16.msra.mxu0 %v3382
    %3717 = vmatprep.subr.bf16.mxu0 0
    %3718 = vmatpush1.bf16.msra.mxu0 %v3383
    %3719 = vmatprep.subr.bf16.mxu0 0
    %3720 = vmatpush1.bf16.msra.mxu0 %v3384
    %3721 = vmatprep.subr.bf16.mxu0 0
    %3722 = vmatpush1.bf16.msra.mxu0 %v3385
    %3723 = vmatprep.subr.bf16.mxu0 0
    %3724 = vmatpush1.bf16.msra.mxu0 %v3386
    %3725 = vmatprep.subr.bf16.mxu0 0
    %3726 = vmatpush1.bf16.msra.mxu0 %v3387
    %3727 = vmatprep.subr.bf16.mxu0 0
    %3728 = vmatpush1.bf16.msra.mxu0 %v3388
    %3729 = vmatprep.subr.bf16.mxu0 0
    %3730 = vmatpush1.bf16.msra.mxu0 %v3389
    %3731 = vmatprep.subr.bf16.mxu0 0
    %3732 = vmatpush1.bf16.msra.mxu0 %v3390
    %3733 = vmatprep.subr.bf16.mxu0 0
    %3734 = vmatpush1.bf16.msra.mxu0 %v3391
    %3735 = vmatprep.subr.bf16.mxu0 0
    %3736 = vmatpush1.bf16.msra.mxu0 %v3392
    %3737 = vmatprep.mubr.bf16.mxu0 %v2551
    %3738 = vmatmul.mubr.bf16.gmra.mrb[0].mxu0 %v2550
    %v3739 = vpop.f32.mrb[0].mxu0
    %v3740 = vadd.f32 %v3700, %v3739
    %v3741 = vpop.f32.mrb[0].mxu0
    %v3742 = vpop.f32.mrb[0].mxu0
    %v3743 = vpop.f32.mrb[0].mxu0
    %3744 = vdwg.mxu0
    %3745 = vmatprep.subr.bf16.mxu0 0
    %3746 = vmatpush1.bf16.msra.mxu0 %v3393
    %3747 = vmatprep.subr.bf16.mxu0 0
    %3748 = vmatpush1.bf16.msra.mxu0 %v3394
    %3749 = vmatprep.subr.bf16.mxu0 0
    %3750 = vmatpush1.bf16.msra.mxu0 %v3395
    %3751 = vmatprep.subr.bf16.mxu0 0
    %3752 = vmatpush1.bf16.msra.mxu0 %v3396
    %3753 = vmatprep.subr.bf16.mxu0 0
    %3754 = vmatpush1.bf16.msra.mxu0 %v3397
    %3755 = vmatprep.subr.bf16.mxu0 0
    %3756 = vmatpush1.bf16.msra.mxu0 %v3398
    %3757 = vmatprep.subr.bf16.mxu0 0
    %3758 = vmatpush1.bf16.msra.mxu0 %v3399
    %3759 = vmatprep.subr.bf16.mxu0 0
    %3760 = vmatpush1.bf16.msra.mxu0 %v3400
    %3761 = vmatprep.subr.bf16.mxu0 0
    %3762 = vmatpush1.bf16.msra.mxu0 %v3401
    %3763 = vmatprep.subr.bf16.mxu0 0
    %3764 = vmatpush1.bf16.msra.mxu0 %v3402
    %3765 = vmatprep.subr.bf16.mxu0 0
    %3766 = vmatpush1.bf16.msra.mxu0 %v3403
    %3767 = vmatprep.subr.bf16.mxu0 0
    %3768 = vmatpush1.bf16.msra.mxu0 %v3404
    %3769 = vmatprep.subr.bf16.mxu0 0
    %3770 = vmatpush1.bf16.msra.mxu0 %v3405
    %3771 = vmatprep.subr.bf16.mxu0 0
    %3772 = vmatpush1.bf16.msra.mxu0 %v3406
    %3773 = vmatprep.subr.bf16.mxu0 0
    %3774 = vmatpush1.bf16.msra.mxu0 %v3407
    %3775 = vmatprep.subr.bf16.mxu0 0
    %3776 = vmatpush1.bf16.msra.mxu0 %v3408
    %3777 = vmatprep.mubr.bf16.mxu0 %v2553
    %3778 = vmatmul.mubr.bf16.gmra.mrb[0].mxu0 %v2552
    %v3779 = vpop.f32.mrb[0].mxu0
    %v3780 = vadd.f32 %v3740, %v3779
    %v3781 = vpop.f32.mrb[0].mxu0
    %v3782 = vpop.f32.mrb[0].mxu0
    %v3783 = vpop.f32.mrb[0].mxu0
    %3784 = vdwg.mxu0
    %3785 = vmatprep.subr.bf16.mxu0 0
    %3786 = vmatpush1.bf16.msra.mxu0 %v3409
    %3787 = vmatprep.subr.bf16.mxu0 0
    %3788 = vmatpush1.bf16.msra.mxu0 %v3410
    %3789 = vmatprep.subr.bf16.mxu0 0
    %3790 = vmatpush1.bf16.msra.mxu0 %v3411
    %3791 = vmatprep.subr.bf16.mxu0 0
    %3792 = vmatpush1.bf16.msra.mxu0 %v3412
    %3793 = vmatprep.subr.bf16.mxu0 0
    %3794 = vmatpush1.bf16.msra.mxu0 %v3413
    %3795 = vmatprep.subr.bf16.mxu0 0
    %3796 = vmatpush1.bf16.msra.mxu0 %v3414
    %3797 = vmatprep.subr.bf16.mxu0 0
    %3798 = vmatpush1.bf16.msra.mxu0 %v3415
    %3799 = vmatprep.subr.bf16.mxu0 0
    %3800 = vmatpush1.bf16.msra.mxu0 %v3416
    %3801 = vmatprep.subr.bf16.mxu0 0
    %3802 = vmatpush1.bf16.msra.mxu0 %v3417
    %3803 = vmatprep.subr.bf16.mxu0 0
    %3804 = vmatpush1.bf16.msra.mxu0 %v3418
    %3805 = vmatprep.subr.bf16.mxu0 0
    %3806 = vmatpush1.bf16.msra.mxu0 %v3419
    %3807 = vmatprep.subr.bf16.mxu0 0
    %3808 = vmatpush1.bf16.msra.mxu0 %v3420
    %3809 = vmatprep.subr.bf16.mxu0 0
    %3810 = vmatpush1.bf16.msra.mxu0 %v3421
    %3811 = vmatprep.subr.bf16.mxu0 0
    %3812 = vmatpush1.bf16.msra.mxu0 %v3422
    %3813 = vmatprep.subr.bf16.mxu0 0
    %3814 = vmatpush1.bf16.msra.mxu0 %v3423
    %3815 = vmatprep.subr.bf16.mxu0 0
    %3816 = vmatpush1.bf16.msra.mxu0 %v3424
    %3817 = vmatprep.mubr.bf16.mxu0 %v2555
    %3818 = vmatmul.mubr.bf16.gmra.mrb[0].mxu0 %v2554
    %v3819 = vpop.f32.mrb[0].mxu0
    %v3820 = vadd.f32 %v3780, %v3819
    %v3821 = vpop.f32.mrb[0].mxu0
    %v3822 = vpop.f32.mrb[0].mxu0
    %v3823 = vpop.f32.mrb[0].mxu0
    %3824 = vdwg.mxu0
    %3825 = vmatprep.subr.bf16.mxu0 0
    %3826 = vmatpush1.bf16.msra.mxu0 %v3425
    %3827 = vmatprep.subr.bf16.mxu0 0
    %3828 = vmatpush1.bf16.msra.mxu0 %v3426
    %3829 = vmatprep.subr.bf16.mxu0 0
    %3830 = vmatpush1.bf16.msra.mxu0 %v3427
    %3831 = vmatprep.subr.bf16.mxu0 0
    %3832 = vmatpush1.bf16.msra.mxu0 %v3428
    %3833 = vmatprep.subr.bf16.mxu0 0
    %3834 = vmatpush1.bf16.msra.mxu0 %v3429
    %3835 = vmatprep.subr.bf16.mxu0 0
    %3836 = vmatpush1.bf16.msra.mxu0 %v3430
    %3837 = vmatprep.subr.bf16.mxu0 0
    %3838 = vmatpush1.bf16.msra.mxu0 %v3431
    %3839 = vmatprep.subr.bf16.mxu0 0
    %3840 = vmatpush1.bf16.msra.mxu0 %v3432
    %3841 = vmatprep.subr.bf16.mxu0 0
    %3842 = vmatpush1.bf16.msra.mxu0 %v3433
    %3843 = vmatprep.subr.bf16.mxu0 0
    %3844 = vmatpush1.bf16.msra.mxu0 %v3434
    %3845 = vmatprep.subr.bf16.mxu0 0
    %3846 = vmatpush1.bf16.msra.mxu0 %v3435
    %3847 = vmatprep.subr.bf16.mxu0 0
    %3848 = vmatpush1.bf16.msra.mxu0 %v3436
    %3849 = vmatprep.subr.bf16.mxu0 0
    %3850 = vmatpush1.bf16.msra.mxu0 %v3437
    %3851 = vmatprep.subr.bf16.mxu0 0
    %3852 = vmatpush1.bf16.msra.mxu0 %v3438
    %3853 = vmatprep.subr.bf16.mxu0 0
    %3854 = vmatpush1.bf16.msra.mxu0 %v3439
    %3855 = vmatprep.subr.bf16.mxu0 0
    %3856 = vmatpush1.bf16.msra.mxu0 %v3440
    %3857 = vmatprep.mubr.bf16.mxu0 %v2557
    %3858 = vmatmul.mubr.bf16.gmra.mrb[0].mxu0 %v2556
    %v3859 = vpop.f32.mrb[0].mxu0
    %v3860 = vadd.f32 %v3820, %v3859
    %v3861 = vpop.f32.mrb[0].mxu0
    %v3862 = vpop.f32.mrb[0].mxu0
    %v3863 = vpop.f32.mrb[0].mxu0
    %3864 = vdwg.mxu0
    %3865 = vmatprep.subr.bf16.mxu0 0
    %3866 = vmatpush1.bf16.msra.mxu0 %v3441
    %3867 = vmatprep.subr.bf16.mxu0 0
    %3868 = vmatpush1.bf16.msra.mxu0 %v3442
    %3869 = vmatprep.subr.bf16.mxu0 0
    %3870 = vmatpush1.bf16.msra.mxu0 %v3443
    %3871 = vmatprep.subr.bf16.mxu0 0
    %3872 = vmatpush1.bf16.msra.mxu0 %v3444
    %3873 = vmatprep.subr.bf16.mxu0 0
    %3874 = vmatpush1.bf16.msra.mxu0 %v3445
    %3875 = vmatprep.subr.bf16.mxu0 0
    %3876 = vmatpush1.bf16.msra.mxu0 %v3446
    %3877 = vmatprep.subr.bf16.mxu0 0
    %3878 = vmatpush1.bf16.msra.mxu0 %v3447
    %3879 = vmatprep.subr.bf16.mxu0 0
    %3880 = vmatpush1.bf16.msra.mxu0 %v3448
    %3881 = vmatprep.subr.bf16.mxu0 0
    %3882 = vmatpush1.bf16.msra.mxu0 %v3449
    %3883 = vmatprep.subr.bf16.mxu0 0
    %3884 = vmatpush1.bf16.msra.mxu0 %v3450
    %3885 = vmatprep.subr.bf16.mxu0 0
    %3886 = vmatpush1.bf16.msra.mxu0 %v3451
    %3887 = vmatprep.subr.bf16.mxu0 0
    %3888 = vmatpush1.bf16.msra.mxu0 %v3452
    %3889 = vmatprep.subr.bf16.mxu0 0
    %3890 = vmatpush1.bf16.msra.mxu0 %v3453
    %3891 = vmatprep.subr.bf16.mxu0 0
    %3892 = vmatpush1.bf16.msra.mxu0 %v3454
    %3893 = vmatprep.subr.bf16.mxu0 0
    %3894 = vmatpush1.bf16.msra.mxu0 %v3455
    %3895 = vmatprep.subr.bf16.mxu0 0
    %3896 = vmatpush1.bf16.msra.mxu0 %v3456
    %3897 = vmatprep.mubr.bf16.mxu0 %v2559
    %3898 = vmatmul.mubr.bf16.gmra.mrb[0].mxu0 %v2558
    %v3899 = vpop.f32.mrb[0].mxu0
    %v3900 = vadd.f32 %v3860, %v3899
    %v3901 = vpop.f32.mrb[0].mxu0
    %v3902 = vpop.f32.mrb[0].mxu0
    %v3903 = vpop.f32.mrb[0].mxu0
    %3904 = vdwg.mxu0
    %3905 = vst.msk [vmem:[#allocation5 + $0x1] sm:$0x1] %vm2448, %v3900
    %v3906 = vpack.c.bf16 %v3900, %v3900
    %v3907 = vld [vmem:[%s8] sm:$0xf]
    %v3908 = vld [vmem:[%s8 + $0x4] sm:$0xf]
    %v3909 = vld [vmem:[%s8 + $0x8] sm:$0xf]
    %v3910 = vld [vmem:[%s8 + $0xc] sm:$0xf]
    %v3911 = vld [vmem:[%s9] sm:$0x1]
    %v3916 = vunpack.c.l.b16 %v3907
    %v3917 = vunpack.c.l.b16 %v3908
    %v3918 = vunpack.c.l.b16 %v3909
    %v3919 = vunpack.c.l.b16 %v3910
    %v3920 = vpack.c.b16 %v3917, %v3916
    %v3921 = vpack.c.b16 %v3919, %v3918
    %v3925 = vsel %vm2468, %v3906, 0
    %3927 = vmatprep.subr.bf16.mxu0 0
    %3928 = vmatpush1.bf16.msra.mxu0 %v3920
    %3929 = vmatprep.subr.bf16.mxu0 0
    %3930 = vmatpush1.bf16.msra.mxu0 %v3921
    %3931 = vmatprep.subr.bf16.mxu0 0
    %3932 = vmatpush1.bf16.msra.mxu0 0
    %3933 = vmatprep.subr.bf16.mxu0 0
    %3934 = vmatpush1.bf16.msra.mxu0 0
    %3935 = vmatprep.subr.bf16.mxu0 0
    %3936 = vmatpush1.bf16.msra.mxu0 0
    %3937 = vmatprep.subr.bf16.mxu0 0
    %3938 = vmatpush1.bf16.msra.mxu0 0
    %3939 = vmatprep.subr.bf16.mxu0 0
    %3940 = vmatpush1.bf16.msra.mxu0 0
    %3941 = vmatprep.subr.bf16.mxu0 0
    %3942 = vmatpush1.bf16.msra.mxu0 0
    %3943 = vmatprep.subr.bf16.mxu0 0
    %3944 = vmatpush1.bf16.msra.mxu0 0
    %3945 = vmatprep.subr.bf16.mxu0 0
    %3946 = vmatpush1.bf16.msra.mxu0 0
    %3947 = vmatprep.subr.bf16.mxu0 0
    %3948 = vmatpush1.bf16.msra.mxu0 0
    %3949 = vmatprep.subr.bf16.mxu0 0
    %3950 = vmatpush1.bf16.msra.mxu0 0
    %3951 = vmatprep.subr.bf16.mxu0 0
    %3952 = vmatpush1.bf16.msra.mxu0 0
    %3953 = vmatprep.subr.bf16.mxu0 0
    %3954 = vmatpush1.bf16.msra.mxu0 0
    %3955 = vmatprep.subr.bf16.mxu0 0
    %3956 = vmatpush1.bf16.msra.mxu0 0
    %3957 = vmatprep.subr.bf16.mxu0 0
    %3958 = vmatpush1.bf16.msra.mxu0 0
    %3959 = vmatprep.mubr.bf16.mxu0 0
    %3960 = vmatmul.mubr.bf16.gmra.mrb[0].mxu0 %v3925
    %v3961 = vpop.f32.mrb[0].mxu0
    %v3962 = vadd.f32 %v3911, %v3961
    %v3963 = vpop.f32.mrb[0].mxu0
    %v3964 = vpop.f32.mrb[0].mxu0
    %v3965 = vpop.f32.mrb[0].mxu0
    %3966 = vdwg.mxu0
    %3967 = vst.msk [vmem:[#allocation6 + $0x1] sm:$0x1] %vm2512, %v3962
    // Predicated region
    $region46: #{forward.1} parent=1 // pred_check
      _
    $region47: #{forward.1} parent=1 // pred_check_branch
      %3969 = sbr.rel (0) target = $region49
    $region48: #{forward.1} parent=1 // pred_region
      _
    $region49: #{forward.1} parent=1 // pred_fallthru
      _
    // Predicated region
    $region50: #{forward.1} parent=1 // pred_check
      _
    $region51: #{forward.1} parent=1 // pred_check_branch
      %3971 = sbr.rel (0) target = $region53
    $region52: #{forward.1} parent=1 // pred_region
      _
    $region53: #{forward.1} parent=1 // pred_fallthru
      _
    // Predicated region
    $region54: #{forward.1} parent=1 // pred_check
      _
    $region55: #{forward.1} parent=1 // pred_check_branch
      %3973 = sbr.rel (0) target = $region57
    $region56: #{forward.1} parent=1 // pred_region
      %s3975 = ssub.s32 32, 32
      %3976 = vsyncadd [#allocation4], %s3975
      %s3978 = sshll.u32 [#allocation5], 4
      %s3979 = int_to_ptr.vmem [resolvable:$true] %s3978
      %3981 = dma.vmem_to_hbm [thread:$0]  %s3979, 32, %s12, [#allocation4]
    $region57: #{forward.1} parent=1 // pred_fallthru
      _
    // Predicated region
    $region58: #{forward.1} parent=1 // pred_check
      _
    $region59: #{forward.1} parent=1 // pred_check_branch
      %3983 = sbr.rel (0) target = $region61
    $region60: #{forward.1} parent=1 // pred_region
      %s3985 = ssub.s32 32, 32
      %3986 = vsyncadd [#allocation7], %s3985
      %s3988 = sshll.u32 [#allocation6], 4
      %s3989 = int_to_ptr.vmem [resolvable:$true] %s3988
      %3991 = dma.vmem_to_hbm [thread:$0]  %s3989, 32, %s13, [#allocation7]
    $region61: #{forward.1} parent=1 // pred_fallthru
      _
    // Predicated region
    $region62: #{forward.1} parent=1 // pred_check
      _
    $region63: #{forward.1} parent=1 // pred_check_branch
      %3993 = sbr.rel (0) target = $region65
    $region64: #{forward.1} parent=1 // pred_region
      _
    $region65: #{forward.1} parent=1 // pred_fallthru
      _
    // Predicated region
    $region66: #{forward.1} parent=1 // pred_check
      _
    $region67: #{forward.1} parent=1 // pred_check_branch
      %3995 = sbr.rel (0) target = $region69
    $region68: #{forward.1} parent=1 // pred_region
      _
    $region69: #{forward.1} parent=1 // pred_fallthru
      _
    // Predicated region
    $region70: #{forward.1} parent=1 // pred_check
      _
    $region71: #{forward.1} parent=1 // pred_check_branch
      %3997 = sbr.rel (0) target = $region73
    $region72: #{forward.1} parent=1 // pred_region
      %3998 = dma.done [#allocation4], 32
    $region73: #{forward.1} parent=1 // pred_fallthru
      _
    // Predicated region
    $region74: #{forward.1} parent=1 // pred_check
      _
    $region75: #{forward.1} parent=1 // pred_check_branch
      %4000 = sbr.rel (0) target = $region77
    $region76: #{forward.1} parent=1 // pred_region
      %4001 = dma.done [#allocation7], 32
    $region77: #{forward.1} parent=1 // pred_fallthru
      _
    %4002 = vsyncpa [#allocation3], 1
    %4003 = vsyncpa [#allocation4], 1
    %4004 = vsyncpa [#allocation7], 1

</llo_original>
